<compile_context>
chip_gen: v7x
topology: tpu7x:2x2x1
jax: 0.10.0
libtpu: 0.0.40
codegen_flags: <defaults>
</compile_context>

<pallas_src>
import jax
import jax.numpy as jnp
from jax import lax
from jax.experimental import pallas as pl
from jax.experimental.pallas import tpu as pltpu

_SUBLANE = 8  # f32 sublane group


# ----------------------------- Pallas kernel --------------------------------
def _seq2seq_kernel(enc_emb_ref, dec_emb_ref,
                    wih_e_ref, whh_e_ref, b_e_gi_ref, b_e_gh_ref,
                    wih_dx_ref, wih_dc_ref, whh_d_ref, b_d_gi_ref, b_d_gh_ref,
                    w_out_ref, b_out_ref,
                    logits_ref, state_ref,
                    gi_enc, gi_dec, hs_ref):
    f32 = jnp.float32
    B, H = state_ref.shape                    # B = sublane-padded batch (8)
    T_enc = enc_emb_ref.shape[0] // B
    T_dec = dec_emb_ref.shape[0] // B

    # ---------------- encoder ----------------
    # Hoisted input projection: ONE (T_enc*B, E) @ (E, 3H) matmul, gates fused
    # on the lane axis (r|z|n).  r/z biases pre-folded (b_ih+b_hh), n: b_ih.
    gi_enc[...] = (jnp.dot(enc_emb_ref[...], wih_e_ref[...],
                           preferred_element_type=f32) + b_e_gi_ref[...])

    whh_e = whh_e_ref[...]                                     # (H, 3H)
    b_e_gh = jnp.broadcast_to(b_e_gh_ref[...], (B, 3 * H))     # hoisted bcast

    def enc_body(t, h):
        rows = pl.ds(t * B, B)
        # single fused recurrent matmul per step; b_gh = [0 | 0 | b_hh_n]
        gh = jnp.dot(h, whh_e, preferred_element_type=f32) + b_e_gh
        gi = gi_enc[rows, :]
        r = jax.nn.sigmoid(gi[:, :H] + gh[:, :H])
        z = jax.nn.sigmoid(gi[:, H:2 * H] + gh[:, H:2 * H])
        n = jnp.tanh(gi[:, 2 * H:] + r * gh[:, 2 * H:])
        return (1.0 - z) * n + z * h

    h_enc = lax.fori_loop(0, T_enc, enc_body, jnp.zeros((B, H), f32),
                          unroll=True)

    # ---------------- decoder ----------------
    # Hoisted embedding projection + loop-invariant context gates (this
    # replaces the per-step [emb ; h_enc] concat of the reference decoder).
    gi_dec[...] = (jnp.dot(dec_emb_ref[...], wih_dx_ref[...],
                           preferred_element_type=f32) + b_d_gi_ref[...])
    ctx = jnp.dot(h_enc, wih_dc_ref[...], preferred_element_type=f32)  # (B,3H)

    whh_d = whh_d_ref[...]                                     # (H, 3H)
    b_d_gh = jnp.broadcast_to(b_d_gh_ref[...], (B, 3 * H))

    def dec_body(t, h):
        rows = pl.ds(t * B, B)
        gh = jnp.dot(h, whh_d, preferred_element_type=f32) + b_d_gh
        gi = gi_dec[rows, :] + ctx
        r = jax.nn.sigmoid(gi[:, :H] + gh[:, :H])
        z = jax.nn.sigmoid(gi[:, H:2 * H] + gh[:, H:2 * H])
        n = jnp.tanh(gi[:, 2 * H:] + r * gh[:, 2 * H:])
        h_new = (1.0 - z) * n + z * h
        hs_ref[rows, :] = h_new                 # full-sublane-group store
        return h_new

    h_dec = lax.fori_loop(0, T_dec, dec_body, h_enc, unroll=True)
    state_ref[...] = h_dec

    # Vocab projection hoisted out of the loop: one (T_dec*B, H) @ (H, V)
    # matmul and one bulk store (no per-step tiny matmuls / masked stores).
    logits_ref[...] = (jnp.dot(hs_ref[...], w_out_ref[...],
                               preferred_element_type=f32) + b_out_ref[...])


# ------------------------------ wrapper --------------------------------------
@jax.jit
def encoder_decoder_forward(enc_X, dec_X, params):
    """enc_X, dec_X: (B, T) int32 token ids. Returns (logits (B,T,V), state (B,H))."""
    emb_enc = params["emb_enc"]      # (V, E)
    emb_dec = params["emb_dec"]      # (V, E)
    H = params["w_hh_e"].shape[0]
    E = emb_enc.shape[1]
    V = params["w_out"].shape[1]
    B, T_enc = enc_X.shape
    T_dec = dec_X.shape[1]
    Bp = max(_SUBLANE, pl.cdiv(B, _SUBLANE) * _SUBLANE)   # sublane-padded batch

    # glue: embedding lookup + batch pad + time-major flatten (T*Bp, E) so the
    # kernel's hoisted input projections are plain 2-D matmuls.
    # TODO(synk): at production E/V move this gather in-kernel via
    # PrefetchScalarGridSpec (scalar-prefetch the token ids) to avoid the HBM
    # round-trip of the (T*B, E) activations.
    def embed(tokens, table, T):
        e = jnp.take(table, tokens, axis=0).transpose(1, 0, 2)   # (T, B, E)
        e = jnp.pad(e, ((0, 0), (0, Bp - B), (0, 0)))            # (T, Bp, E)
        return e.reshape(T * Bp, E)

    enc_emb = embed(enc_X, emb_enc, T_enc)
    dec_emb = embed(dec_X, emb_dec, T_dec)

    # bias pre-fold (weight prep, XLA side):
    #   gi bias = [b_ih_r+b_hh_r | b_ih_z+b_hh_z | b_ih_n]
    #   gh bias = [      0       |       0       | b_hh_n]   (stays inside r*(...))
    def fold_bias(b_ih, b_hh):
        b_gi = jnp.concatenate([b_ih[:, :2 * H] + b_hh[:, :2 * H],
                                b_ih[:, 2 * H:]], axis=1)        # (1, 3H)
        b_gh = jnp.concatenate([jnp.zeros((1, 2 * H), jnp.float32),
                                b_hh[:, 2 * H:]], axis=1)        # (1, 3H)
        return b_gi, b_gh

    b_e_gi, b_e_gh = fold_bias(params["b_ih_e"], params["b_hh_e"])
    b_d_gi, b_d_gh = fold_bias(params["b_ih_d"], params["b_hh_d"])

    # decoder input weight split into embedding part and context part
    wih_dx = params["w_ih_d"][:E]    # (E, 3H)
    wih_dc = params["w_ih_d"][E:]    # (H, 3H)

    vmem = lambda: pl.BlockSpec(memory_space=pltpu.MemorySpace.VMEM)

    # TODO(synk): for production sizes (large V / T / B) tile the vocab
    # projection + logits output over a grid (tile_v multiple of 128,
    # dimension_semantics=("parallel", ...) so the two v7x TensorCores split
    # the work) and use bf16 MXU operands on v6e/v7x; at this toy size the
    # whole problem fits comfortably in VMEM of a single core.
    logits_flat, state_pad = pl.pallas_call(
        _seq2seq_kernel,
        out_shape=(jax.ShapeDtypeStruct((T_dec * Bp, V), jnp.float32),
                   jax.ShapeDtypeStruct((Bp, H), jnp.float32)),
        in_specs=[vmem() for _ in range(13)],
        out_specs=(vmem(), vmem()),
        scratch_shapes=[
            pltpu.VMEM((T_enc * Bp, 3 * H), jnp.float32),   # gi_enc (fused gates)
            pltpu.VMEM((T_dec * Bp, 3 * H), jnp.float32),   # gi_dec (fused gates)
            pltpu.VMEM((T_dec * Bp, H), jnp.float32),       # hs (decoder hiddens)
        ],
    )(enc_emb, dec_emb,
      params["w_ih_e"], params["w_hh_e"], b_e_gi, b_e_gh,
      wih_dx, wih_dc, params["w_hh_d"], b_d_gi, b_d_gh,
      params["w_out"], params["b_out"])

    # decoder convention: (batch, time, vocab) logits + final hidden; drop pad.
    logits = logits_flat.reshape(T_dec, Bp, V)[:, :B, :].transpose(1, 0, 2)
    return logits, state_pad[:B]


# --------------------------- pure-JAX reference ------------------------------
def _reference(enc_X, dec_X, params):
    H = params["w_hh_e"].shape[0]

    def gru_step(x, h, wih, whh, bih, bhh):
        gi = x @ wih + bih
        gh = h @ whh + bhh
        r = jax.nn.sigmoid(gi[:, :H] + gh[:, :H])
        z = jax.nn.sigmoid(gi[:, H:2 * H] + gh[:, H:2 * H])
        n = jnp.tanh(gi[:, 2 * H:] + r * gh[:, 2 * H:])
        return (1 - z) * n + z * h

    enc_emb = jnp.take(params["emb_enc"], enc_X, axis=0).transpose(1, 0, 2)
    dec_emb = jnp.take(params["emb_dec"], dec_X, axis=0).transpose(1, 0, 2)
    B = enc_emb.shape[1]
    h = jnp.zeros((B, H), jnp.float32)
    for t in range(enc_emb.shape[0]):
        h = gru_step(enc_emb[t], h, params["w_ih_e"], params["w_hh_e"],
                     params["b_ih_e"], params["b_hh_e"])
    h_enc = h
    outs = []
    for t in range(dec_emb.shape[0]):
        x = jnp.concatenate([dec_emb[t], h_enc], axis=-1)
        h = gru_step(x, h, params["w_ih_d"], params["w_hh_d"],
                     params["b_ih_d"], params["b_hh_d"])
        outs.append(h @ params["w_out"] + params["b_out"])
    return jnp.stack(outs, 0).transpose(1, 0, 2), h


# ------------------------------- main -----------------------------------------
if __name__ == "__main__":
    B, T_enc, T_dec = 2, 8, 8
    V, E, H = 32, 32, 32

    key = jax.random.PRNGKey(0)
    ks = jax.random.split(key, 14)
    sc = 0.1
    params = {
        "emb_enc": jax.random.normal(ks[0], (V, E), jnp.float32) * sc,
        "emb_dec": jax.random.normal(ks[1], (V, E), jnp.float32) * sc,
        "w_ih_e": jax.random.normal(ks[2], (E, 3 * H), jnp.float32) * sc,
        "w_hh_e": jax.random.normal(ks[3], (H, 3 * H), jnp.float32) * sc,
        "b_ih_e": jax.random.normal(ks[4], (1, 3 * H), jnp.float32) * sc,
        "b_hh_e": jax.random.normal(ks[5], (1, 3 * H), jnp.float32) * sc,
        "w_ih_d": jax.random.normal(ks[6], (E + H, 3 * H), jnp.float32) * sc,
        "w_hh_d": jax.random.normal(ks[7], (H, 3 * H), jnp.float32) * sc,
        "b_ih_d": jax.random.normal(ks[8], (1, 3 * H), jnp.float32) * sc,
        "b_hh_d": jax.random.normal(ks[9], (1, 3 * H), jnp.float32) * sc,
        "w_out": jax.random.normal(ks[10], (H, V), jnp.float32) * sc,
        "b_out": jax.random.normal(ks[11], (1, V), jnp.float32) * sc,
    }

    enc_X = jax.random.randint(ks[12], (B, T_enc), 0, V, dtype=jnp.int32)
    dec_X = jax.random.randint(ks[13], (B, T_dec), 0, V, dtype=jnp.int32)

    logits, state = encoder_decoder_forward(enc_X, dec_X, params)
    jax.block_until_ready((logits, state))

    ref_logits, ref_state = _reference(enc_X, dec_X, params)
    assert logits.shape == (B, T_dec, V) and state.shape == (B, H)
    assert jnp.allclose(logits, ref_logits, atol=1e-4, rtol=1e-4)
    assert jnp.allclose(state, ref_state, atol=1e-4, rtol=1e-4)

    print("KERNEL_OK")
</pallas_src>

<mosaic_0001>
module attributes {stable_mosaic.version = 11 : i64} {
  func.func @_seq2seq_kernel(%arg0: memref<64x32xf32, #tpu.memory_space<vmem>>, %arg1: memref<64x32xf32, #tpu.memory_space<vmem>>, %arg2: memref<32x96xf32, #tpu.memory_space<vmem>>, %arg3: memref<32x96xf32, #tpu.memory_space<vmem>>, %arg4: memref<1x96xf32, #tpu.memory_space<vmem>>, %arg5: memref<1x96xf32, #tpu.memory_space<vmem>>, %arg6: memref<32x96xf32, #tpu.memory_space<vmem>>, %arg7: memref<32x96xf32, #tpu.memory_space<vmem>>, %arg8: memref<32x96xf32, #tpu.memory_space<vmem>>, %arg9: memref<1x96xf32, #tpu.memory_space<vmem>>, %arg10: memref<1x96xf32, #tpu.memory_space<vmem>>, %arg11: memref<32x32xf32, #tpu.memory_space<vmem>>, %arg12: memref<1x32xf32, #tpu.memory_space<vmem>>, %arg13: memref<64x32xf32, #tpu.memory_space<vmem>>, %arg14: memref<8x32xf32, #tpu.memory_space<vmem>>, %arg15: memref<64x96xf32, #tpu.memory_space<vmem>>, %arg16: memref<64x96xf32, #tpu.memory_space<vmem>>, %arg17: memref<64x32xf32, #tpu.memory_space<vmem>>) attributes {dimension_semantics = [], scalar_prefetch = 0 : i64, scratch_operands = 3 : i64, tpu.core_type = #tpu.core_type<tc>} {
    %c0 = arith.constant 0 : index
    %c0_0 = arith.constant 0 : index
    %0 = vector.load %arg0[%c0, %c0_0] : memref<64x32xf32, #tpu.memory_space<vmem>>, vector<64x32xf32>
    %c0_1 = arith.constant 0 : index
    %c0_2 = arith.constant 0 : index
    %1 = vector.load %arg2[%c0_1, %c0_2] : memref<32x96xf32, #tpu.memory_space<vmem>>, vector<32x96xf32>
    %cst = arith.constant dense<0.000000e+00> : vector<64x96xf32>
    %2 = tpu.matmul %0, %1, %cst {dimension_numbers = #tpu.dot_dimension_numbers<[1], [0], [0], [1], [0, 0, 1, 1], [], []>} : vector<64x32xf32>, vector<32x96xf32>, vector<64x96xf32> -> vector<64x96xf32>
    %c0_3 = arith.constant 0 : index
    %c0_4 = arith.constant 0 : index
    %3 = vector.load %arg4[%c0_3, %c0_4] : memref<1x96xf32, #tpu.memory_space<vmem>>, vector<1x96xf32>
    %4 = vector.broadcast %3 : vector<1x96xf32> to vector<64x96xf32>
    %5 = arith.addf %2, %4 : vector<64x96xf32>
    %c0_5 = arith.constant 0 : index
    %c0_6 = arith.constant 0 : index
    %6 = vector.load %arg15[%c0_5, %c0_6] : memref<64x96xf32, #tpu.memory_space<vmem>>, vector<64x96xf32>
    tpu.vector_store %arg15[%c0_5, %c0_6], %5 {strides = array<i32>} : memref<64x96xf32, #tpu.memory_space<vmem>>, vector<64x96xf32>,
    %c0_7 = arith.constant 0 : index
    %c0_8 = arith.constant 0 : index
    %7 = vector.load %arg3[%c0_7, %c0_8] : memref<32x96xf32, #tpu.memory_space<vmem>>, vector<32x96xf32>
    %c0_9 = arith.constant 0 : index
    %c0_10 = arith.constant 0 : index
    %8 = vector.load %arg5[%c0_9, %c0_10] : memref<1x96xf32, #tpu.memory_space<vmem>>, vector<1x96xf32>
    %9 = vector.shape_cast %8 : vector<1x96xf32> to vector<1x96xf32>
    %10 = vector.broadcast %9 : vector<1x96xf32> to vector<8x96xf32>
    %cst_11 = arith.constant 0.000000e+00 : f32
    %11 = vector.broadcast %cst_11 : f32 to vector<8x32xf32>
    %c0_i32 = arith.constant 0 : i32
    %c8_i32 = arith.constant 8 : i32
    %12 = arith.muli %c0_i32, %c8_i32 : i32
    %cst_12 = arith.constant dense<0.000000e+00> : vector<8x96xf32>
    %13 = tpu.matmul %11, %7, %cst_12 {dimension_numbers = #tpu.dot_dimension_numbers<[1], [0], [0], [1], [0, 0, 1, 1], [], []>} : vector<8x32xf32>, vector<32x96xf32>, vector<8x96xf32> -> vector<8x96xf32>
    %14 = arith.addf %13, %10 : vector<8x96xf32>
    %15 = arith.index_cast %12 : i32 to index
    %c0_13 = arith.constant 0 : index
    %16 = vector.load %arg15[%15, %c0_13] : memref<64x96xf32, #tpu.memory_space<vmem>>, vector<8x96xf32>
    %17 = vector.extract_strided_slice %16 {offsets = [0, 0], sizes = [8, 32], strides = [1, 1]} : vector<8x96xf32> to vector<8x32xf32>
    %18 = vector.extract_strided_slice %14 {offsets = [0, 0], sizes = [8, 32], strides = [1, 1]} : vector<8x96xf32> to vector<8x32xf32>
    %19 = arith.addf %17, %18 : vector<8x32xf32>
    %20 = arith.negf %19 : vector<8x32xf32>
    %21 = math.exp %20 : vector<8x32xf32>
    %cst_14 = arith.constant 1.000000e+00 : f32
    %22 = vector.broadcast %cst_14 : f32 to vector<8x32xf32>
    %23 = arith.addf %22, %21 : vector<8x32xf32>
    %24 = arith.divf %22, %23 : vector<8x32xf32>
    %25 = vector.extract_strided_slice %16 {offsets = [0, 32], sizes = [8, 32], strides = [1, 1]} : vector<8x96xf32> to vector<8x32xf32>
    %26 = vector.extract_strided_slice %14 {offsets = [0, 32], sizes = [8, 32], strides = [1, 1]} : vector<8x96xf32> to vector<8x32xf32>
    %27 = arith.addf %25, %26 : vector<8x32xf32>
    %28 = arith.negf %27 : vector<8x32xf32>
    %29 = math.exp %28 : vector<8x32xf32>
    %cst_15 = arith.constant 1.000000e+00 : f32
    %30 = vector.broadcast %cst_15 : f32 to vector<8x32xf32>
    %31 = arith.addf %30, %29 : vector<8x32xf32>
    %32 = arith.divf %30, %31 : vector<8x32xf32>
    %33 = vector.extract_strided_slice %16 {offsets = [0, 64], sizes = [8, 32], strides = [1, 1]} : vector<8x96xf32> to vector<8x32xf32>
    %34 = vector.extract_strided_slice %14 {offsets = [0, 64], sizes = [8, 32], strides = [1, 1]} : vector<8x96xf32> to vector<8x32xf32>
    %35 = arith.mulf %24, %34 : vector<8x32xf32>
    %36 = arith.addf %33, %35 : vector<8x32xf32>
    %37 = math.tanh %36 : vector<8x32xf32>
    %cst_16 = arith.constant 1.000000e+00 : f32
    %38 = vector.broadcast %cst_16 : f32 to vector<8x32xf32>
    %39 = arith.subf %38, %32 : vector<8x32xf32>
    %40 = arith.mulf %39, %37 : vector<8x32xf32>
    %41 = arith.mulf %32, %11 : vector<8x32xf32>
    %42 = arith.addf %40, %41 : vector<8x32xf32>
    %c1_i32 = arith.constant 1 : i32
    %c8_i32_17 = arith.constant 8 : i32
    %43 = arith.muli %c1_i32, %c8_i32_17 : i32
    %cst_18 = arith.constant dense<0.000000e+00> : vector<8x96xf32>
    %44 = tpu.matmul %42, %7, %cst_18 {dimension_numbers = #tpu.dot_dimension_numbers<[1], [0], [0], [1], [0, 0, 1, 1], [], []>} : vector<8x32xf32>, vector<32x96xf32>, vector<8x96xf32> -> vector<8x96xf32>
    %45 = arith.addf %44, %10 : vector<8x96xf32>
    %46 = arith.index_cast %43 : i32 to index
    %c0_19 = arith.constant 0 : index
    %47 = vector.load %arg15[%46, %c0_19] : memref<64x96xf32, #tpu.memory_space<vmem>>, vector<8x96xf32>
    %48 = vector.extract_strided_slice %47 {offsets = [0, 0], sizes = [8, 32], strides = [1, 1]} : vector<8x96xf32> to vector<8x32xf32>
    %49 = vector.extract_strided_slice %45 {offsets = [0, 0], sizes = [8, 32], strides = [1, 1]} : vector<8x96xf32> to vector<8x32xf32>
    %50 = arith.addf %48, %49 : vector<8x32xf32>
    %51 = arith.negf %50 : vector<8x32xf32>
    %52 = math.exp %51 : vector<8x32xf32>
    %cst_20 = arith.constant 1.000000e+00 : f32
    %53 = vector.broadcast %cst_20 : f32 to vector<8x32xf32>
    %54 = arith.addf %53, %52 : vector<8x32xf32>
    %55 = arith.divf %53, %54 : vector<8x32xf32>
    %56 = vector.extract_strided_slice %47 {offsets = [0, 32], sizes = [8, 32], strides = [1, 1]} : vector<8x96xf32> to vector<8x32xf32>
    %57 = vector.extract_strided_slice %45 {offsets = [0, 32], sizes = [8, 32], strides = [1, 1]} : vector<8x96xf32> to vector<8x32xf32>
    %58 = arith.addf %56, %57 : vector<8x32xf32>
    %59 = arith.negf %58 : vector<8x32xf32>
    %60 = math.exp %59 : vector<8x32xf32>
    %cst_21 = arith.constant 1.000000e+00 : f32
    %61 = vector.broadcast %cst_21 : f32 to vector<8x32xf32>
    %62 = arith.addf %61, %60 : vector<8x32xf32>
    %63 = arith.divf %61, %62 : vector<8x32xf32>
    %64 = vector.extract_strided_slice %47 {offsets = [0, 64], sizes = [8, 32], strides = [1, 1]} : vector<8x96xf32> to vector<8x32xf32>
    %65 = vector.extract_strided_slice %45 {offsets = [0, 64], sizes = [8, 32], strides = [1, 1]} : vector<8x96xf32> to vector<8x32xf32>
    %66 = arith.mulf %55, %65 : vector<8x32xf32>
    %67 = arith.addf %64, %66 : vector<8x32xf32>
    %68 = math.tanh %67 : vector<8x32xf32>
    %cst_22 = arith.constant 1.000000e+00 : f32
    %69 = vector.broadcast %cst_22 : f32 to vector<8x32xf32>
    %70 = arith.subf %69, %63 : vector<8x32xf32>
    %71 = arith.mulf %70, %68 : vector<8x32xf32>
    %72 = arith.mulf %63, %42 : vector<8x32xf32>
    %73 = arith.addf %71, %72 : vector<8x32xf32>
    %c2_i32 = arith.constant 2 : i32
    %c8_i32_23 = arith.constant 8 : i32
    %74 = arith.muli %c2_i32, %c8_i32_23 : i32
    %cst_24 = arith.constant dense<0.000000e+00> : vector<8x96xf32>
    %75 = tpu.matmul %73, %7, %cst_24 {dimension_numbers = #tpu.dot_dimension_numbers<[1], [0], [0], [1], [0, 0, 1, 1], [], []>} : vector<8x32xf32>, vector<32x96xf32>, vector<8x96xf32> -> vector<8x96xf32>
    %76 = arith.addf %75, %10 : vector<8x96xf32>
    %77 = arith.index_cast %74 : i32 to index
    %c0_25 = arith.constant 0 : index
    %78 = vector.load %arg15[%77, %c0_25] : memref<64x96xf32, #tpu.memory_space<vmem>>, vector<8x96xf32>
    %79 = vector.extract_strided_slice %78 {offsets = [0, 0], sizes = [8, 32], strides = [1, 1]} : vector<8x96xf32> to vector<8x32xf32>
    %80 = vector.extract_strided_slice %76 {offsets = [0, 0], sizes = [8, 32], strides = [1, 1]} : vector<8x96xf32> to vector<8x32xf32>
    %81 = arith.addf %79, %80 : vector<8x32xf32>
    %82 = arith.negf %81 : vector<8x32xf32>
    %83 = math.exp %82 : vector<8x32xf32>
    %cst_26 = arith.constant 1.000000e+00 : f32
    %84 = vector.broadcast %cst_26 : f32 to vector<8x32xf32>
    %85 = arith.addf %84, %83 : vector<8x32xf32>
    %86 = arith.divf %84, %85 : vector<8x32xf32>
    %87 = vector.extract_strided_slice %78 {offsets = [0, 32], sizes = [8, 32], strides = [1, 1]} : vector<8x96xf32> to vector<8x32xf32>
    %88 = vector.extract_strided_slice %76 {offsets = [0, 32], sizes = [8, 32], strides = [1, 1]} : vector<8x96xf32> to vector<8x32xf32>
    %89 = arith.addf %87, %88 : vector<8x32xf32>
    %90 = arith.negf %89 : vector<8x32xf32>
    %91 = math.exp %90 : vector<8x32xf32>
    %cst_27 = arith.constant 1.000000e+00 : f32
    %92 = vector.broadcast %cst_27 : f32 to vector<8x32xf32>
    %93 = arith.addf %92, %91 : vector<8x32xf32>
    %94 = arith.divf %92, %93 : vector<8x32xf32>
    %95 = vector.extract_strided_slice %78 {offsets = [0, 64], sizes = [8, 32], strides = [1, 1]} : vector<8x96xf32> to vector<8x32xf32>
    %96 = vector.extract_strided_slice %76 {offsets = [0, 64], sizes = [8, 32], strides = [1, 1]} : vector<8x96xf32> to vector<8x32xf32>
    %97 = arith.mulf %86, %96 : vector<8x32xf32>
    %98 = arith.addf %95, %97 : vector<8x32xf32>
    %99 = math.tanh %98 : vector<8x32xf32>
    %cst_28 = arith.constant 1.000000e+00 : f32
    %100 = vector.broadcast %cst_28 : f32 to vector<8x32xf32>
    %101 = arith.subf %100, %94 : vector<8x32xf32>
    %102 = arith.mulf %101, %99 : vector<8x32xf32>
    %103 = arith.mulf %94, %73 : vector<8x32xf32>
    %104 = arith.addf %102, %103 : vector<8x32xf32>
    %c3_i32 = arith.constant 3 : i32
    %c8_i32_29 = arith.constant 8 : i32
    %105 = arith.muli %c3_i32, %c8_i32_29 : i32
    %cst_30 = arith.constant dense<0.000000e+00> : vector<8x96xf32>
    %106 = tpu.matmul %104, %7, %cst_30 {dimension_numbers = #tpu.dot_dimension_numbers<[1], [0], [0], [1], [0, 0, 1, 1], [], []>} : vector<8x32xf32>, vector<32x96xf32>, vector<8x96xf32> -> vector<8x96xf32>
    %107 = arith.addf %106, %10 : vector<8x96xf32>
    %108 = arith.index_cast %105 : i32 to index
    %c0_31 = arith.constant 0 : index
    %109 = vector.load %arg15[%108, %c0_31] : memref<64x96xf32, #tpu.memory_space<vmem>>, vector<8x96xf32>
    %110 = vector.extract_strided_slice %109 {offsets = [0, 0], sizes = [8, 32], strides = [1, 1]} : vector<8x96xf32> to vector<8x32xf32>
    %111 = vector.extract_strided_slice %107 {offsets = [0, 0], sizes = [8, 32], strides = [1, 1]} : vector<8x96xf32> to vector<8x32xf32>
    %112 = arith.addf %110, %111 : vector<8x32xf32>
    %113 = arith.negf %112 : vector<8x32xf32>
    %114 = math.exp %113 : vector<8x32xf32>
    %cst_32 = arith.constant 1.000000e+00 : f32
    %115 = vector.broadcast %cst_32 : f32 to vector<8x32xf32>
    %116 = arith.addf %115, %114 : vector<8x32xf32>
    %117 = arith.divf %115, %116 : vector<8x32xf32>
    %118 = vector.extract_strided_slice %109 {offsets = [0, 32], sizes = [8, 32], strides = [1, 1]} : vector<8x96xf32> to vector<8x32xf32>
    %119 = vector.extract_strided_slice %107 {offsets = [0, 32], sizes = [8, 32], strides = [1, 1]} : vector<8x96xf32> to vector<8x32xf32>
    %120 = arith.addf %118, %119 : vector<8x32xf32>
    %121 = arith.negf %120 : vector<8x32xf32>
    %122 = math.exp %121 : vector<8x32xf32>
    %cst_33 = arith.constant 1.000000e+00 : f32
    %123 = vector.broadcast %cst_33 : f32 to vector<8x32xf32>
    %124 = arith.addf %123, %122 : vector<8x32xf32>
    %125 = arith.divf %123, %124 : vector<8x32xf32>
    %126 = vector.extract_strided_slice %109 {offsets = [0, 64], sizes = [8, 32], strides = [1, 1]} : vector<8x96xf32> to vector<8x32xf32>
    %127 = vector.extract_strided_slice %107 {offsets = [0, 64], sizes = [8, 32], strides = [1, 1]} : vector<8x96xf32> to vector<8x32xf32>
    %128 = arith.mulf %117, %127 : vector<8x32xf32>
    %129 = arith.addf %126, %128 : vector<8x32xf32>
    %130 = math.tanh %129 : vector<8x32xf32>
    %cst_34 = arith.constant 1.000000e+00 : f32
    %131 = vector.broadcast %cst_34 : f32 to vector<8x32xf32>
    %132 = arith.subf %131, %125 : vector<8x32xf32>
    %133 = arith.mulf %132, %130 : vector<8x32xf32>
    %134 = arith.mulf %125, %104 : vector<8x32xf32>
    %135 = arith.addf %133, %134 : vector<8x32xf32>
    %c4_i32 = arith.constant 4 : i32
    %c8_i32_35 = arith.constant 8 : i32
    %136 = arith.muli %c4_i32, %c8_i32_35 : i32
    %cst_36 = arith.constant dense<0.000000e+00> : vector<8x96xf32>
    %137 = tpu.matmul %135, %7, %cst_36 {dimension_numbers = #tpu.dot_dimension_numbers<[1], [0], [0], [1], [0, 0, 1, 1], [], []>} : vector<8x32xf32>, vector<32x96xf32>, vector<8x96xf32> -> vector<8x96xf32>
    %138 = arith.addf %137, %10 : vector<8x96xf32>
    %139 = arith.index_cast %136 : i32 to index
    %c0_37 = arith.constant 0 : index
    %140 = vector.load %arg15[%139, %c0_37] : memref<64x96xf32, #tpu.memory_space<vmem>>, vector<8x96xf32>
    %141 = vector.extract_strided_slice %140 {offsets = [0, 0], sizes = [8, 32], strides = [1, 1]} : vector<8x96xf32> to vector<8x32xf32>
    %142 = vector.extract_strided_slice %138 {offsets = [0, 0], sizes = [8, 32], strides = [1, 1]} : vector<8x96xf32> to vector<8x32xf32>
    %143 = arith.addf %141, %142 : vector<8x32xf32>
    %144 = arith.negf %143 : vector<8x32xf32>
    %145 = math.exp %144 : vector<8x32xf32>
    %cst_38 = arith.constant 1.000000e+00 : f32
    %146 = vector.broadcast %cst_38 : f32 to vector<8x32xf32>
    %147 = arith.addf %146, %145 : vector<8x32xf32>
    %148 = arith.divf %146, %147 : vector<8x32xf32>
    %149 = vector.extract_strided_slice %140 {offsets = [0, 32], sizes = [8, 32], strides = [1, 1]} : vector<8x96xf32> to vector<8x32xf32>
    %150 = vector.extract_strided_slice %138 {offsets = [0, 32], sizes = [8, 32], strides = [1, 1]} : vector<8x96xf32> to vector<8x32xf32>
    %151 = arith.addf %149, %150 : vector<8x32xf32>
    %152 = arith.negf %151 : vector<8x32xf32>
    %153 = math.exp %152 : vector<8x32xf32>
    %cst_39 = arith.constant 1.000000e+00 : f32
    %154 = vector.broadcast %cst_39 : f32 to vector<8x32xf32>
    %155 = arith.addf %154, %153 : vector<8x32xf32>
    %156 = arith.divf %154, %155 : vector<8x32xf32>
    %157 = vector.extract_strided_slice %140 {offsets = [0, 64], sizes = [8, 32], strides = [1, 1]} : vector<8x96xf32> to vector<8x32xf32>
    %158 = vector.extract_strided_slice %138 {offsets = [0, 64], sizes = [8, 32], strides = [1, 1]} : vector<8x96xf32> to vector<8x32xf32>
    %159 = arith.mulf %148, %158 : vector<8x32xf32>
    %160 = arith.addf %157, %159 : vector<8x32xf32>
    %161 = math.tanh %160 : vector<8x32xf32>
    %cst_40 = arith.constant 1.000000e+00 : f32
    %162 = vector.broadcast %cst_40 : f32 to vector<8x32xf32>
    %163 = arith.subf %162, %156 : vector<8x32xf32>
    %164 = arith.mulf %163, %161 : vector<8x32xf32>
    %165 = arith.mulf %156, %135 : vector<8x32xf32>
    %166 = arith.addf %164, %165 : vector<8x32xf32>
    %c5_i32 = arith.constant 5 : i32
    %c8_i32_41 = arith.constant 8 : i32
    %167 = arith.muli %c5_i32, %c8_i32_41 : i32
    %cst_42 = arith.constant dense<0.000000e+00> : vector<8x96xf32>
    %168 = tpu.matmul %166, %7, %cst_42 {dimension_numbers = #tpu.dot_dimension_numbers<[1], [0], [0], [1], [0, 0, 1, 1], [], []>} : vector<8x32xf32>, vector<32x96xf32>, vector<8x96xf32> -> vector<8x96xf32>
    %169 = arith.addf %168, %10 : vector<8x96xf32>
    %170 = arith.index_cast %167 : i32 to index
    %c0_43 = arith.constant 0 : index
    %171 = vector.load %arg15[%170, %c0_43] : memref<64x96xf32, #tpu.memory_space<vmem>>, vector<8x96xf32>
    %172 = vector.extract_strided_slice %171 {offsets = [0, 0], sizes = [8, 32], strides = [1, 1]} : vector<8x96xf32> to vector<8x32xf32>
    %173 = vector.extract_strided_slice %169 {offsets = [0, 0], sizes = [8, 32], strides = [1, 1]} : vector<8x96xf32> to vector<8x32xf32>
    %174 = arith.addf %172, %173 : vector<8x32xf32>
    %175 = arith.negf %174 : vector<8x32xf32>
    %176 = math.exp %175 : vector<8x32xf32>
    %cst_44 = arith.constant 1.000000e+00 : f32
    %177 = vector.broadcast %cst_44 : f32 to vector<8x32xf32>
    %178 = arith.addf %177, %176 : vector<8x32xf32>
    %179 = arith.divf %177, %178 : vector<8x32xf32>
    %180 = vector.extract_strided_slice %171 {offsets = [0, 32], sizes = [8, 32], strides = [1, 1]} : vector<8x96xf32> to vector<8x32xf32>
    %181 = vector.extract_strided_slice %169 {offsets = [0, 32], sizes = [8, 32], strides = [1, 1]} : vector<8x96xf32> to vector<8x32xf32>
    %182 = arith.addf %180, %181 : vector<8x32xf32>
    %183 = arith.negf %182 : vector<8x32xf32>
    %184 = math.exp %183 : vector<8x32xf32>
    %cst_45 = arith.constant 1.000000e+00 : f32
    %185 = vector.broadcast %cst_45 : f32 to vector<8x32xf32>
    %186 = arith.addf %185, %184 : vector<8x32xf32>
    %187 = arith.divf %185, %186 : vector<8x32xf32>
    %188 = vector.extract_strided_slice %171 {offsets = [0, 64], sizes = [8, 32], strides = [1, 1]} : vector<8x96xf32> to vector<8x32xf32>
    %189 = vector.extract_strided_slice %169 {offsets = [0, 64], sizes = [8, 32], strides = [1, 1]} : vector<8x96xf32> to vector<8x32xf32>
    %190 = arith.mulf %179, %189 : vector<8x32xf32>
    %191 = arith.addf %188, %190 : vector<8x32xf32>
    %192 = math.tanh %191 : vector<8x32xf32>
    %cst_46 = arith.constant 1.000000e+00 : f32
    %193 = vector.broadcast %cst_46 : f32 to vector<8x32xf32>
    %194 = arith.subf %193, %187 : vector<8x32xf32>
    %195 = arith.mulf %194, %192 : vector<8x32xf32>
    %196 = arith.mulf %187, %166 : vector<8x32xf32>
    %197 = arith.addf %195, %196 : vector<8x32xf32>
    %c6_i32 = arith.constant 6 : i32
    %c8_i32_47 = arith.constant 8 : i32
    %198 = arith.muli %c6_i32, %c8_i32_47 : i32
    %cst_48 = arith.constant dense<0.000000e+00> : vector<8x96xf32>
    %199 = tpu.matmul %197, %7, %cst_48 {dimension_numbers = #tpu.dot_dimension_numbers<[1], [0], [0], [1], [0, 0, 1, 1], [], []>} : vector<8x32xf32>, vector<32x96xf32>, vector<8x96xf32> -> vector<8x96xf32>
    %200 = arith.addf %199, %10 : vector<8x96xf32>
    %201 = arith.index_cast %198 : i32 to index
    %c0_49 = arith.constant 0 : index
    %202 = vector.load %arg15[%201, %c0_49] : memref<64x96xf32, #tpu.memory_space<vmem>>, vector<8x96xf32>
    %203 = vector.extract_strided_slice %202 {offsets = [0, 0], sizes = [8, 32], strides = [1, 1]} : vector<8x96xf32> to vector<8x32xf32>
    %204 = vector.extract_strided_slice %200 {offsets = [0, 0], sizes = [8, 32], strides = [1, 1]} : vector<8x96xf32> to vector<8x32xf32>
    %205 = arith.addf %203, %204 : vector<8x32xf32>
    %206 = arith.negf %205 : vector<8x32xf32>
    %207 = math.exp %206 : vector<8x32xf32>
    %cst_50 = arith.constant 1.000000e+00 : f32
    %208 = vector.broadcast %cst_50 : f32 to vector<8x32xf32>
    %209 = arith.addf %208, %207 : vector<8x32xf32>
    %210 = arith.divf %208, %209 : vector<8x32xf32>
    %211 = vector.extract_strided_slice %202 {offsets = [0, 32], sizes = [8, 32], strides = [1, 1]} : vector<8x96xf32> to vector<8x32xf32>
    %212 = vector.extract_strided_slice %200 {offsets = [0, 32], sizes = [8, 32], strides = [1, 1]} : vector<8x96xf32> to vector<8x32xf32>
    %213 = arith.addf %211, %212 : vector<8x32xf32>
    %214 = arith.negf %213 : vector<8x32xf32>
    %215 = math.exp %214 : vector<8x32xf32>
    %cst_51 = arith.constant 1.000000e+00 : f32
    %216 = vector.broadcast %cst_51 : f32 to vector<8x32xf32>
    %217 = arith.addf %216, %215 : vector<8x32xf32>
    %218 = arith.divf %216, %217 : vector<8x32xf32>
    %219 = vector.extract_strided_slice %202 {offsets = [0, 64], sizes = [8, 32], strides = [1, 1]} : vector<8x96xf32> to vector<8x32xf32>
    %220 = vector.extract_strided_slice %200 {offsets = [0, 64], sizes = [8, 32], strides = [1, 1]} : vector<8x96xf32> to vector<8x32xf32>
    %221 = arith.mulf %210, %220 : vector<8x32xf32>
    %222 = arith.addf %219, %221 : vector<8x32xf32>
    %223 = math.tanh %222 : vector<8x32xf32>
    %cst_52 = arith.constant 1.000000e+00 : f32
    %224 = vector.broadcast %cst_52 : f32 to vector<8x32xf32>
    %225 = arith.subf %224, %218 : vector<8x32xf32>
    %226 = arith.mulf %225, %223 : vector<8x32xf32>
    %227 = arith.mulf %218, %197 : vector<8x32xf32>
    %228 = arith.addf %226, %227 : vector<8x32xf32>
    %c7_i32 = arith.constant 7 : i32
    %c8_i32_53 = arith.constant 8 : i32
    %229 = arith.muli %c7_i32, %c8_i32_53 : i32
    %cst_54 = arith.constant dense<0.000000e+00> : vector<8x96xf32>
    %230 = tpu.matmul %228, %7, %cst_54 {dimension_numbers = #tpu.dot_dimension_numbers<[1], [0], [0], [1], [0, 0, 1, 1], [], []>} : vector<8x32xf32>, vector<32x96xf32>, vector<8x96xf32> -> vector<8x96xf32>
    %231 = arith.addf %230, %10 : vector<8x96xf32>
    %232 = arith.index_cast %229 : i32 to index
    %c0_55 = arith.constant 0 : index
    %233 = vector.load %arg15[%232, %c0_55] : memref<64x96xf32, #tpu.memory_space<vmem>>, vector<8x96xf32>
    %234 = vector.extract_strided_slice %233 {offsets = [0, 0], sizes = [8, 32], strides = [1, 1]} : vector<8x96xf32> to vector<8x32xf32>
    %235 = vector.extract_strided_slice %231 {offsets = [0, 0], sizes = [8, 32], strides = [1, 1]} : vector<8x96xf32> to vector<8x32xf32>
    %236 = arith.addf %234, %235 : vector<8x32xf32>
    %237 = arith.negf %236 : vector<8x32xf32>
    %238 = math.exp %237 : vector<8x32xf32>
    %cst_56 = arith.constant 1.000000e+00 : f32
    %239 = vector.broadcast %cst_56 : f32 to vector<8x32xf32>
    %240 = arith.addf %239, %238 : vector<8x32xf32>
    %241 = arith.divf %239, %240 : vector<8x32xf32>
    %242 = vector.extract_strided_slice %233 {offsets = [0, 32], sizes = [8, 32], strides = [1, 1]} : vector<8x96xf32> to vector<8x32xf32>
    %243 = vector.extract_strided_slice %231 {offsets = [0, 32], sizes = [8, 32], strides = [1, 1]} : vector<8x96xf32> to vector<8x32xf32>
    %244 = arith.addf %242, %243 : vector<8x32xf32>
    %245 = arith.negf %244 : vector<8x32xf32>
    %246 = math.exp %245 : vector<8x32xf32>
    %cst_57 = arith.constant 1.000000e+00 : f32
    %247 = vector.broadcast %cst_57 : f32 to vector<8x32xf32>
    %248 = arith.addf %247, %246 : vector<8x32xf32>
    %249 = arith.divf %247, %248 : vector<8x32xf32>
    %250 = vector.extract_strided_slice %233 {offsets = [0, 64], sizes = [8, 32], strides = [1, 1]} : vector<8x96xf32> to vector<8x32xf32>
    %251 = vector.extract_strided_slice %231 {offsets = [0, 64], sizes = [8, 32], strides = [1, 1]} : vector<8x96xf32> to vector<8x32xf32>
    %252 = arith.mulf %241, %251 : vector<8x32xf32>
    %253 = arith.addf %250, %252 : vector<8x32xf32>
    %254 = math.tanh %253 : vector<8x32xf32>
    %cst_58 = arith.constant 1.000000e+00 : f32
    %255 = vector.broadcast %cst_58 : f32 to vector<8x32xf32>
    %256 = arith.subf %255, %249 : vector<8x32xf32>
    %257 = arith.mulf %256, %254 : vector<8x32xf32>
    %258 = arith.mulf %249, %228 : vector<8x32xf32>
    %259 = arith.addf %257, %258 : vector<8x32xf32>
    %c8_i32_59 = arith.constant 8 : i32
    %c0_60 = arith.constant 0 : index
    %c0_61 = arith.constant 0 : index
    %260 = vector.load %arg1[%c0_60, %c0_61] : memref<64x32xf32, #tpu.memory_space<vmem>>, vector<64x32xf32>
    %c0_62 = arith.constant 0 : index
    %c0_63 = arith.constant 0 : index
    %261 = vector.load %arg6[%c0_62, %c0_63] : memref<32x96xf32, #tpu.memory_space<vmem>>, vector<32x96xf32>
    %cst_64 = arith.constant dense<0.000000e+00> : vector<64x96xf32>
    %262 = tpu.matmul %260, %261, %cst_64 {dimension_numbers = #tpu.dot_dimension_numbers<[1], [0], [0], [1], [0, 0, 1, 1], [], []>} : vector<64x32xf32>, vector<32x96xf32>, vector<64x96xf32> -> vector<64x96xf32>
    %c0_65 = arith.constant 0 : index
    %c0_66 = arith.constant 0 : index
    %263 = vector.load %arg9[%c0_65, %c0_66] : memref<1x96xf32, #tpu.memory_space<vmem>>, vector<1x96xf32>
    %264 = vector.broadcast %263 : vector<1x96xf32> to vector<64x96xf32>
    %265 = arith.addf %262, %264 : vector<64x96xf32>
    %c0_67 = arith.constant 0 : index
    %c0_68 = arith.constant 0 : index
    %266 = vector.load %arg16[%c0_67, %c0_68] : memref<64x96xf32, #tpu.memory_space<vmem>>, vector<64x96xf32>
    tpu.vector_store %arg16[%c0_67, %c0_68], %265 {strides = array<i32>} : memref<64x96xf32, #tpu.memory_space<vmem>>, vector<64x96xf32>,
    %c0_69 = arith.constant 0 : index
    %c0_70 = arith.constant 0 : index
    %267 = vector.load %arg7[%c0_69, %c0_70] : memref<32x96xf32, #tpu.memory_space<vmem>>, vector<32x96xf32>
    %cst_71 = arith.constant dense<0.000000e+00> : vector<8x96xf32>
    %268 = tpu.matmul %259, %267, %cst_71 {dimension_numbers = #tpu.dot_dimension_numbers<[1], [0], [0], [1], [0, 0, 1, 1], [], []>} : vector<8x32xf32>, vector<32x96xf32>, vector<8x96xf32> -> vector<8x96xf32>
    %c0_72 = arith.constant 0 : index
    %c0_73 = arith.constant 0 : index
    %269 = vector.load %arg8[%c0_72, %c0_73] : memref<32x96xf32, #tpu.memory_space<vmem>>, vector<32x96xf32>
    %c0_74 = arith.constant 0 : index
    %c0_75 = arith.constant 0 : index
    %270 = vector.load %arg10[%c0_74, %c0_75] : memref<1x96xf32, #tpu.memory_space<vmem>>, vector<1x96xf32>
    %271 = vector.shape_cast %270 : vector<1x96xf32> to vector<1x96xf32>
    %272 = vector.broadcast %271 : vector<1x96xf32> to vector<8x96xf32>
    %c0_i32_76 = arith.constant 0 : i32
    %c8_i32_77 = arith.constant 8 : i32
    %273 = arith.muli %c0_i32_76, %c8_i32_77 : i32
    %cst_78 = arith.constant dense<0.000000e+00> : vector<8x96xf32>
    %274 = tpu.matmul %259, %269, %cst_78 {dimension_numbers = #tpu.dot_dimension_numbers<[1], [0], [0], [1], [0, 0, 1, 1], [], []>} : vector<8x32xf32>, vector<32x96xf32>, vector<8x96xf32> -> vector<8x96xf32>
    %275 = arith.addf %274, %272 : vector<8x96xf32>
    %276 = arith.index_cast %273 : i32 to index
    %c0_79 = arith.constant 0 : index
    %277 = vector.load %arg16[%276, %c0_79] : memref<64x96xf32, #tpu.memory_space<vmem>>, vector<8x96xf32>
    %278 = arith.addf %277, %268 : vector<8x96xf32>
    %279 = vector.extract_strided_slice %278 {offsets = [0, 0], sizes = [8, 32], strides = [1, 1]} : vector<8x96xf32> to vector<8x32xf32>
    %280 = vector.extract_strided_slice %275 {offsets = [0, 0], sizes = [8, 32], strides = [1, 1]} : vector<8x96xf32> to vector<8x32xf32>
    %281 = arith.addf %279, %280 : vector<8x32xf32>
    %282 = arith.negf %281 : vector<8x32xf32>
    %283 = math.exp %282 : vector<8x32xf32>
    %cst_80 = arith.constant 1.000000e+00 : f32
    %284 = vector.broadcast %cst_80 : f32 to vector<8x32xf32>
    %285 = arith.addf %284, %283 : vector<8x32xf32>
    %286 = arith.divf %284, %285 : vector<8x32xf32>
    %287 = vector.extract_strided_slice %278 {offsets = [0, 32], sizes = [8, 32], strides = [1, 1]} : vector<8x96xf32> to vector<8x32xf32>
    %288 = vector.extract_strided_slice %275 {offsets = [0, 32], sizes = [8, 32], strides = [1, 1]} : vector<8x96xf32> to vector<8x32xf32>
    %289 = arith.addf %287, %288 : vector<8x32xf32>
    %290 = arith.negf %289 : vector<8x32xf32>
    %291 = math.exp %290 : vector<8x32xf32>
    %cst_81 = arith.constant 1.000000e+00 : f32
    %292 = vector.broadcast %cst_81 : f32 to vector<8x32xf32>
    %293 = arith.addf %292, %291 : vector<8x32xf32>
    %294 = arith.divf %292, %293 : vector<8x32xf32>
    %295 = vector.extract_strided_slice %278 {offsets = [0, 64], sizes = [8, 32], strides = [1, 1]} : vector<8x96xf32> to vector<8x32xf32>
    %296 = vector.extract_strided_slice %275 {offsets = [0, 64], sizes = [8, 32], strides = [1, 1]} : vector<8x96xf32> to vector<8x32xf32>
    %297 = arith.mulf %286, %296 : vector<8x32xf32>
    %298 = arith.addf %295, %297 : vector<8x32xf32>
    %299 = math.tanh %298 : vector<8x32xf32>
    %cst_82 = arith.constant 1.000000e+00 : f32
    %300 = vector.broadcast %cst_82 : f32 to vector<8x32xf32>
    %301 = arith.subf %300, %294 : vector<8x32xf32>
    %302 = arith.mulf %301, %299 : vector<8x32xf32>
    %303 = arith.mulf %294, %259 : vector<8x32xf32>
    %304 = arith.addf %302, %303 : vector<8x32xf32>
    %305 = arith.index_cast %273 : i32 to index
    %c0_83 = arith.constant 0 : index
    %306 = vector.load %arg17[%305, %c0_83] : memref<64x32xf32, #tpu.memory_space<vmem>>, vector<8x32xf32>
    tpu.vector_store %arg17[%305, %c0_83], %304 {strides = array<i32>} : memref<64x32xf32, #tpu.memory_space<vmem>>, vector<8x32xf32>,
    %c1_i32_84 = arith.constant 1 : i32
    %c8_i32_85 = arith.constant 8 : i32
    %307 = arith.muli %c1_i32_84, %c8_i32_85 : i32
    %cst_86 = arith.constant dense<0.000000e+00> : vector<8x96xf32>
    %308 = tpu.matmul %304, %269, %cst_86 {dimension_numbers = #tpu.dot_dimension_numbers<[1], [0], [0], [1], [0, 0, 1, 1], [], []>} : vector<8x32xf32>, vector<32x96xf32>, vector<8x96xf32> -> vector<8x96xf32>
    %309 = arith.addf %308, %272 : vector<8x96xf32>
    %310 = arith.index_cast %307 : i32 to index
    %c0_87 = arith.constant 0 : index
    %311 = vector.load %arg16[%310, %c0_87] : memref<64x96xf32, #tpu.memory_space<vmem>>, vector<8x96xf32>
    %312 = arith.addf %311, %268 : vector<8x96xf32>
    %313 = vector.extract_strided_slice %312 {offsets = [0, 0], sizes = [8, 32], strides = [1, 1]} : vector<8x96xf32> to vector<8x32xf32>
    %314 = vector.extract_strided_slice %309 {offsets = [0, 0], sizes = [8, 32], strides = [1, 1]} : vector<8x96xf32> to vector<8x32xf32>
    %315 = arith.addf %313, %314 : vector<8x32xf32>
    %316 = arith.negf %315 : vector<8x32xf32>
    %317 = math.exp %316 : vector<8x32xf32>
    %cst_88 = arith.constant 1.000000e+00 : f32
    %318 = vector.broadcast %cst_88 : f32 to vector<8x32xf32>
    %319 = arith.addf %318, %317 : vector<8x32xf32>
    %320 = arith.divf %318, %319 : vector<8x32xf32>
    %321 = vector.extract_strided_slice %312 {offsets = [0, 32], sizes = [8, 32], strides = [1, 1]} : vector<8x96xf32> to vector<8x32xf32>
    %322 = vector.extract_strided_slice %309 {offsets = [0, 32], sizes = [8, 32], strides = [1, 1]} : vector<8x96xf32> to vector<8x32xf32>
    %323 = arith.addf %321, %322 : vector<8x32xf32>
    %324 = arith.negf %323 : vector<8x32xf32>
    %325 = math.exp %324 : vector<8x32xf32>
    %cst_89 = arith.constant 1.000000e+00 : f32
    %326 = vector.broadcast %cst_89 : f32 to vector<8x32xf32>
    %327 = arith.addf %326, %325 : vector<8x32xf32>
    %328 = arith.divf %326, %327 : vector<8x32xf32>
    %329 = vector.extract_strided_slice %312 {offsets = [0, 64], sizes = [8, 32], strides = [1, 1]} : vector<8x96xf32> to vector<8x32xf32>
    %330 = vector.extract_strided_slice %309 {offsets = [0, 64], sizes = [8, 32], strides = [1, 1]} : vector<8x96xf32> to vector<8x32xf32>
    %331 = arith.mulf %320, %330 : vector<8x32xf32>
    %332 = arith.addf %329, %331 : vector<8x32xf32>
    %333 = math.tanh %332 : vector<8x32xf32>
    %cst_90 = arith.constant 1.000000e+00 : f32
    %334 = vector.broadcast %cst_90 : f32 to vector<8x32xf32>
    %335 = arith.subf %334, %328 : vector<8x32xf32>
    %336 = arith.mulf %335, %333 : vector<8x32xf32>
    %337 = arith.mulf %328, %304 : vector<8x32xf32>
    %338 = arith.addf %336, %337 : vector<8x32xf32>
    %339 = arith.index_cast %307 : i32 to index
    %c0_91 = arith.constant 0 : index
    %340 = vector.load %arg17[%339, %c0_91] : memref<64x32xf32, #tpu.memory_space<vmem>>, vector<8x32xf32>
    tpu.vector_store %arg17[%339, %c0_91], %338 {strides = array<i32>} : memref<64x32xf32, #tpu.memory_space<vmem>>, vector<8x32xf32>,
    %c2_i32_92 = arith.constant 2 : i32
    %c8_i32_93 = arith.constant 8 : i32
    %341 = arith.muli %c2_i32_92, %c8_i32_93 : i32
    %cst_94 = arith.constant dense<0.000000e+00> : vector<8x96xf32>
    %342 = tpu.matmul %338, %269, %cst_94 {dimension_numbers = #tpu.dot_dimension_numbers<[1], [0], [0], [1], [0, 0, 1, 1], [], []>} : vector<8x32xf32>, vector<32x96xf32>, vector<8x96xf32> -> vector<8x96xf32>
    %343 = arith.addf %342, %272 : vector<8x96xf32>
    %344 = arith.index_cast %341 : i32 to index
    %c0_95 = arith.constant 0 : index
    %345 = vector.load %arg16[%344, %c0_95] : memref<64x96xf32, #tpu.memory_space<vmem>>, vector<8x96xf32>
    %346 = arith.addf %345, %268 : vector<8x96xf32>
    %347 = vector.extract_strided_slice %346 {offsets = [0, 0], sizes = [8, 32], strides = [1, 1]} : vector<8x96xf32> to vector<8x32xf32>
    %348 = vector.extract_strided_slice %343 {offsets = [0, 0], sizes = [8, 32], strides = [1, 1]} : vector<8x96xf32> to vector<8x32xf32>
    %349 = arith.addf %347, %348 : vector<8x32xf32>
    %350 = arith.negf %349 : vector<8x32xf32>
    %351 = math.exp %350 : vector<8x32xf32>
    %cst_96 = arith.constant 1.000000e+00 : f32
    %352 = vector.broadcast %cst_96 : f32 to vector<8x32xf32>
    %353 = arith.addf %352, %351 : vector<8x32xf32>
    %354 = arith.divf %352, %353 : vector<8x32xf32>
    %355 = vector.extract_strided_slice %346 {offsets = [0, 32], sizes = [8, 32], strides = [1, 1]} : vector<8x96xf32> to vector<8x32xf32>
    %356 = vector.extract_strided_slice %343 {offsets = [0, 32], sizes = [8, 32], strides = [1, 1]} : vector<8x96xf32> to vector<8x32xf32>
    %357 = arith.addf %355, %356 : vector<8x32xf32>
    %358 = arith.negf %357 : vector<8x32xf32>
    %359 = math.exp %358 : vector<8x32xf32>
    %cst_97 = arith.constant 1.000000e+00 : f32
    %360 = vector.broadcast %cst_97 : f32 to vector<8x32xf32>
    %361 = arith.addf %360, %359 : vector<8x32xf32>
    %362 = arith.divf %360, %361 : vector<8x32xf32>
    %363 = vector.extract_strided_slice %346 {offsets = [0, 64], sizes = [8, 32], strides = [1, 1]} : vector<8x96xf32> to vector<8x32xf32>
    %364 = vector.extract_strided_slice %343 {offsets = [0, 64], sizes = [8, 32], strides = [1, 1]} : vector<8x96xf32> to vector<8x32xf32>
    %365 = arith.mulf %354, %364 : vector<8x32xf32>
    %366 = arith.addf %363, %365 : vector<8x32xf32>
    %367 = math.tanh %366 : vector<8x32xf32>
    %cst_98 = arith.constant 1.000000e+00 : f32
    %368 = vector.broadcast %cst_98 : f32 to vector<8x32xf32>
    %369 = arith.subf %368, %362 : vector<8x32xf32>
    %370 = arith.mulf %369, %367 : vector<8x32xf32>
    %371 = arith.mulf %362, %338 : vector<8x32xf32>
    %372 = arith.addf %370, %371 : vector<8x32xf32>
    %373 = arith.index_cast %341 : i32 to index
    %c0_99 = arith.constant 0 : index
    %374 = vector.load %arg17[%373, %c0_99] : memref<64x32xf32, #tpu.memory_space<vmem>>, vector<8x32xf32>
    tpu.vector_store %arg17[%373, %c0_99], %372 {strides = array<i32>} : memref<64x32xf32, #tpu.memory_space<vmem>>, vector<8x32xf32>,
    %c3_i32_100 = arith.constant 3 : i32
    %c8_i32_101 = arith.constant 8 : i32
    %375 = arith.muli %c3_i32_100, %c8_i32_101 : i32
    %cst_102 = arith.constant dense<0.000000e+00> : vector<8x96xf32>
    %376 = tpu.matmul %372, %269, %cst_102 {dimension_numbers = #tpu.dot_dimension_numbers<[1], [0], [0], [1], [0, 0, 1, 1], [], []>} : vector<8x32xf32>, vector<32x96xf32>, vector<8x96xf32> -> vector<8x96xf32>
    %377 = arith.addf %376, %272 : vector<8x96xf32>
    %378 = arith.index_cast %375 : i32 to index
    %c0_103 = arith.constant 0 : index
    %379 = vector.load %arg16[%378, %c0_103] : memref<64x96xf32, #tpu.memory_space<vmem>>, vector<8x96xf32>
    %380 = arith.addf %379, %268 : vector<8x96xf32>
    %381 = vector.extract_strided_slice %380 {offsets = [0, 0], sizes = [8, 32], strides = [1, 1]} : vector<8x96xf32> to vector<8x32xf32>
    %382 = vector.extract_strided_slice %377 {offsets = [0, 0], sizes = [8, 32], strides = [1, 1]} : vector<8x96xf32> to vector<8x32xf32>
    %383 = arith.addf %381, %382 : vector<8x32xf32>
    %384 = arith.negf %383 : vector<8x32xf32>
    %385 = math.exp %384 : vector<8x32xf32>
    %cst_104 = arith.constant 1.000000e+00 : f32
    %386 = vector.broadcast %cst_104 : f32 to vector<8x32xf32>
    %387 = arith.addf %386, %385 : vector<8x32xf32>
    %388 = arith.divf %386, %387 : vector<8x32xf32>
    %389 = vector.extract_strided_slice %380 {offsets = [0, 32], sizes = [8, 32], strides = [1, 1]} : vector<8x96xf32> to vector<8x32xf32>
    %390 = vector.extract_strided_slice %377 {offsets = [0, 32], sizes = [8, 32], strides = [1, 1]} : vector<8x96xf32> to vector<8x32xf32>
    %391 = arith.addf %389, %390 : vector<8x32xf32>
    %392 = arith.negf %391 : vector<8x32xf32>
    %393 = math.exp %392 : vector<8x32xf32>
    %cst_105 = arith.constant 1.000000e+00 : f32
    %394 = vector.broadcast %cst_105 : f32 to vector<8x32xf32>
    %395 = arith.addf %394, %393 : vector<8x32xf32>
    %396 = arith.divf %394, %395 : vector<8x32xf32>
    %397 = vector.extract_strided_slice %380 {offsets = [0, 64], sizes = [8, 32], strides = [1, 1]} : vector<8x96xf32> to vector<8x32xf32>
    %398 = vector.extract_strided_slice %377 {offsets = [0, 64], sizes = [8, 32], strides = [1, 1]} : vector<8x96xf32> to vector<8x32xf32>
    %399 = arith.mulf %388, %398 : vector<8x32xf32>
    %400 = arith.addf %397, %399 : vector<8x32xf32>
    %401 = math.tanh %400 : vector<8x32xf32>
    %cst_106 = arith.constant 1.000000e+00 : f32
    %402 = vector.broadcast %cst_106 : f32 to vector<8x32xf32>
    %403 = arith.subf %402, %396 : vector<8x32xf32>
    %404 = arith.mulf %403, %401 : vector<8x32xf32>
    %405 = arith.mulf %396, %372 : vector<8x32xf32>
    %406 = arith.addf %404, %405 : vector<8x32xf32>
    %407 = arith.index_cast %375 : i32 to index
    %c0_107 = arith.constant 0 : index
    %408 = vector.load %arg17[%407, %c0_107] : memref<64x32xf32, #tpu.memory_space<vmem>>, vector<8x32xf32>
    tpu.vector_store %arg17[%407, %c0_107], %406 {strides = array<i32>} : memref<64x32xf32, #tpu.memory_space<vmem>>, vector<8x32xf32>,
    %c4_i32_108 = arith.constant 4 : i32
    %c8_i32_109 = arith.constant 8 : i32
    %409 = arith.muli %c4_i32_108, %c8_i32_109 : i32
    %cst_110 = arith.constant dense<0.000000e+00> : vector<8x96xf32>
    %410 = tpu.matmul %406, %269, %cst_110 {dimension_numbers = #tpu.dot_dimension_numbers<[1], [0], [0], [1], [0, 0, 1, 1], [], []>} : vector<8x32xf32>, vector<32x96xf32>, vector<8x96xf32> -> vector<8x96xf32>
    %411 = arith.addf %410, %272 : vector<8x96xf32>
    %412 = arith.index_cast %409 : i32 to index
    %c0_111 = arith.constant 0 : index
    %413 = vector.load %arg16[%412, %c0_111] : memref<64x96xf32, #tpu.memory_space<vmem>>, vector<8x96xf32>
    %414 = arith.addf %413, %268 : vector<8x96xf32>
    %415 = vector.extract_strided_slice %414 {offsets = [0, 0], sizes = [8, 32], strides = [1, 1]} : vector<8x96xf32> to vector<8x32xf32>
    %416 = vector.extract_strided_slice %411 {offsets = [0, 0], sizes = [8, 32], strides = [1, 1]} : vector<8x96xf32> to vector<8x32xf32>
    %417 = arith.addf %415, %416 : vector<8x32xf32>
    %418 = arith.negf %417 : vector<8x32xf32>
    %419 = math.exp %418 : vector<8x32xf32>
    %cst_112 = arith.constant 1.000000e+00 : f32
    %420 = vector.broadcast %cst_112 : f32 to vector<8x32xf32>
    %421 = arith.addf %420, %419 : vector<8x32xf32>
    %422 = arith.divf %420, %421 : vector<8x32xf32>
    %423 = vector.extract_strided_slice %414 {offsets = [0, 32], sizes = [8, 32], strides = [1, 1]} : vector<8x96xf32> to vector<8x32xf32>
    %424 = vector.extract_strided_slice %411 {offsets = [0, 32], sizes = [8, 32], strides = [1, 1]} : vector<8x96xf32> to vector<8x32xf32>
    %425 = arith.addf %423, %424 : vector<8x32xf32>
    %426 = arith.negf %425 : vector<8x32xf32>
    %427 = math.exp %426 : vector<8x32xf32>
    %cst_113 = arith.constant 1.000000e+00 : f32
    %428 = vector.broadcast %cst_113 : f32 to vector<8x32xf32>
    %429 = arith.addf %428, %427 : vector<8x32xf32>
    %430 = arith.divf %428, %429 : vector<8x32xf32>
    %431 = vector.extract_strided_slice %414 {offsets = [0, 64], sizes = [8, 32], strides = [1, 1]} : vector<8x96xf32> to vector<8x32xf32>
    %432 = vector.extract_strided_slice %411 {offsets = [0, 64], sizes = [8, 32], strides = [1, 1]} : vector<8x96xf32> to vector<8x32xf32>
    %433 = arith.mulf %422, %432 : vector<8x32xf32>
    %434 = arith.addf %431, %433 : vector<8x32xf32>
    %435 = math.tanh %434 : vector<8x32xf32>
    %cst_114 = arith.constant 1.000000e+00 : f32
    %436 = vector.broadcast %cst_114 : f32 to vector<8x32xf32>
    %437 = arith.subf %436, %430 : vector<8x32xf32>
    %438 = arith.mulf %437, %435 : vector<8x32xf32>
    %439 = arith.mulf %430, %406 : vector<8x32xf32>
    %440 = arith.addf %438, %439 : vector<8x32xf32>
    %441 = arith.index_cast %409 : i32 to index
    %c0_115 = arith.constant 0 : index
    %442 = vector.load %arg17[%441, %c0_115] : memref<64x32xf32, #tpu.memory_space<vmem>>, vector<8x32xf32>
    tpu.vector_store %arg17[%441, %c0_115], %440 {strides = array<i32>} : memref<64x32xf32, #tpu.memory_space<vmem>>, vector<8x32xf32>,
    %c5_i32_116 = arith.constant 5 : i32
    %c8_i32_117 = arith.constant 8 : i32
    %443 = arith.muli %c5_i32_116, %c8_i32_117 : i32
    %cst_118 = arith.constant dense<0.000000e+00> : vector<8x96xf32>
    %444 = tpu.matmul %440, %269, %cst_118 {dimension_numbers = #tpu.dot_dimension_numbers<[1], [0], [0], [1], [0, 0, 1, 1], [], []>} : vector<8x32xf32>, vector<32x96xf32>, vector<8x96xf32> -> vector<8x96xf32>
    %445 = arith.addf %444, %272 : vector<8x96xf32>
    %446 = arith.index_cast %443 : i32 to index
    %c0_119 = arith.constant 0 : index
    %447 = vector.load %arg16[%446, %c0_119] : memref<64x96xf32, #tpu.memory_space<vmem>>, vector<8x96xf32>
    %448 = arith.addf %447, %268 : vector<8x96xf32>
    %449 = vector.extract_strided_slice %448 {offsets = [0, 0], sizes = [8, 32], strides = [1, 1]} : vector<8x96xf32> to vector<8x32xf32>
    %450 = vector.extract_strided_slice %445 {offsets = [0, 0], sizes = [8, 32], strides = [1, 1]} : vector<8x96xf32> to vector<8x32xf32>
    %451 = arith.addf %449, %450 : vector<8x32xf32>
    %452 = arith.negf %451 : vector<8x32xf32>
    %453 = math.exp %452 : vector<8x32xf32>
    %cst_120 = arith.constant 1.000000e+00 : f32
    %454 = vector.broadcast %cst_120 : f32 to vector<8x32xf32>
    %455 = arith.addf %454, %453 : vector<8x32xf32>
    %456 = arith.divf %454, %455 : vector<8x32xf32>
    %457 = vector.extract_strided_slice %448 {offsets = [0, 32], sizes = [8, 32], strides = [1, 1]} : vector<8x96xf32> to vector<8x32xf32>
    %458 = vector.extract_strided_slice %445 {offsets = [0, 32], sizes = [8, 32], strides = [1, 1]} : vector<8x96xf32> to vector<8x32xf32>
    %459 = arith.addf %457, %458 : vector<8x32xf32>
    %460 = arith.negf %459 : vector<8x32xf32>
    %461 = math.exp %460 : vector<8x32xf32>
    %cst_121 = arith.constant 1.000000e+00 : f32
    %462 = vector.broadcast %cst_121 : f32 to vector<8x32xf32>
    %463 = arith.addf %462, %461 : vector<8x32xf32>
    %464 = arith.divf %462, %463 : vector<8x32xf32>
    %465 = vector.extract_strided_slice %448 {offsets = [0, 64], sizes = [8, 32], strides = [1, 1]} : vector<8x96xf32> to vector<8x32xf32>
    %466 = vector.extract_strided_slice %445 {offsets = [0, 64], sizes = [8, 32], strides = [1, 1]} : vector<8x96xf32> to vector<8x32xf32>
    %467 = arith.mulf %456, %466 : vector<8x32xf32>
    %468 = arith.addf %465, %467 : vector<8x32xf32>
    %469 = math.tanh %468 : vector<8x32xf32>
    %cst_122 = arith.constant 1.000000e+00 : f32
    %470 = vector.broadcast %cst_122 : f32 to vector<8x32xf32>
    %471 = arith.subf %470, %464 : vector<8x32xf32>
    %472 = arith.mulf %471, %469 : vector<8x32xf32>
    %473 = arith.mulf %464, %440 : vector<8x32xf32>
    %474 = arith.addf %472, %473 : vector<8x32xf32>
    %475 = arith.index_cast %443 : i32 to index
    %c0_123 = arith.constant 0 : index
    %476 = vector.load %arg17[%475, %c0_123] : memref<64x32xf32, #tpu.memory_space<vmem>>, vector<8x32xf32>
    tpu.vector_store %arg17[%475, %c0_123], %474 {strides = array<i32>} : memref<64x32xf32, #tpu.memory_space<vmem>>, vector<8x32xf32>,
    %c6_i32_124 = arith.constant 6 : i32
    %c8_i32_125 = arith.constant 8 : i32
    %477 = arith.muli %c6_i32_124, %c8_i32_125 : i32
    %cst_126 = arith.constant dense<0.000000e+00> : vector<8x96xf32>
    %478 = tpu.matmul %474, %269, %cst_126 {dimension_numbers = #tpu.dot_dimension_numbers<[1], [0], [0], [1], [0, 0, 1, 1], [], []>} : vector<8x32xf32>, vector<32x96xf32>, vector<8x96xf32> -> vector<8x96xf32>
    %479 = arith.addf %478, %272 : vector<8x96xf32>
    %480 = arith.index_cast %477 : i32 to index
    %c0_127 = arith.constant 0 : index
    %481 = vector.load %arg16[%480, %c0_127] : memref<64x96xf32, #tpu.memory_space<vmem>>, vector<8x96xf32>
    %482 = arith.addf %481, %268 : vector<8x96xf32>
    %483 = vector.extract_strided_slice %482 {offsets = [0, 0], sizes = [8, 32], strides = [1, 1]} : vector<8x96xf32> to vector<8x32xf32>
    %484 = vector.extract_strided_slice %479 {offsets = [0, 0], sizes = [8, 32], strides = [1, 1]} : vector<8x96xf32> to vector<8x32xf32>
    %485 = arith.addf %483, %484 : vector<8x32xf32>
    %486 = arith.negf %485 : vector<8x32xf32>
    %487 = math.exp %486 : vector<8x32xf32>
    %cst_128 = arith.constant 1.000000e+00 : f32
    %488 = vector.broadcast %cst_128 : f32 to vector<8x32xf32>
    %489 = arith.addf %488, %487 : vector<8x32xf32>
    %490 = arith.divf %488, %489 : vector<8x32xf32>
    %491 = vector.extract_strided_slice %482 {offsets = [0, 32], sizes = [8, 32], strides = [1, 1]} : vector<8x96xf32> to vector<8x32xf32>
    %492 = vector.extract_strided_slice %479 {offsets = [0, 32], sizes = [8, 32], strides = [1, 1]} : vector<8x96xf32> to vector<8x32xf32>
    %493 = arith.addf %491, %492 : vector<8x32xf32>
    %494 = arith.negf %493 : vector<8x32xf32>
    %495 = math.exp %494 : vector<8x32xf32>
    %cst_129 = arith.constant 1.000000e+00 : f32
    %496 = vector.broadcast %cst_129 : f32 to vector<8x32xf32>
    %497 = arith.addf %496, %495 : vector<8x32xf32>
    %498 = arith.divf %496, %497 : vector<8x32xf32>
    %499 = vector.extract_strided_slice %482 {offsets = [0, 64], sizes = [8, 32], strides = [1, 1]} : vector<8x96xf32> to vector<8x32xf32>
    %500 = vector.extract_strided_slice %479 {offsets = [0, 64], sizes = [8, 32], strides = [1, 1]} : vector<8x96xf32> to vector<8x32xf32>
    %501 = arith.mulf %490, %500 : vector<8x32xf32>
    %502 = arith.addf %499, %501 : vector<8x32xf32>
    %503 = math.tanh %502 : vector<8x32xf32>
    %cst_130 = arith.constant 1.000000e+00 : f32
    %504 = vector.broadcast %cst_130 : f32 to vector<8x32xf32>
    %505 = arith.subf %504, %498 : vector<8x32xf32>
    %506 = arith.mulf %505, %503 : vector<8x32xf32>
    %507 = arith.mulf %498, %474 : vector<8x32xf32>
    %508 = arith.addf %506, %507 : vector<8x32xf32>
    %509 = arith.index_cast %477 : i32 to index
    %c0_131 = arith.constant 0 : index
    %510 = vector.load %arg17[%509, %c0_131] : memref<64x32xf32, #tpu.memory_space<vmem>>, vector<8x32xf32>
    tpu.vector_store %arg17[%509, %c0_131], %508 {strides = array<i32>} : memref<64x32xf32, #tpu.memory_space<vmem>>, vector<8x32xf32>,
    %c7_i32_132 = arith.constant 7 : i32
    %c8_i32_133 = arith.constant 8 : i32
    %511 = arith.muli %c7_i32_132, %c8_i32_133 : i32
    %cst_134 = arith.constant dense<0.000000e+00> : vector<8x96xf32>
    %512 = tpu.matmul %508, %269, %cst_134 {dimension_numbers = #tpu.dot_dimension_numbers<[1], [0], [0], [1], [0, 0, 1, 1], [], []>} : vector<8x32xf32>, vector<32x96xf32>, vector<8x96xf32> -> vector<8x96xf32>
    %513 = arith.addf %512, %272 : vector<8x96xf32>
    %514 = arith.index_cast %511 : i32 to index
    %c0_135 = arith.constant 0 : index
    %515 = vector.load %arg16[%514, %c0_135] : memref<64x96xf32, #tpu.memory_space<vmem>>, vector<8x96xf32>
    %516 = arith.addf %515, %268 : vector<8x96xf32>
    %517 = vector.extract_strided_slice %516 {offsets = [0, 0], sizes = [8, 32], strides = [1, 1]} : vector<8x96xf32> to vector<8x32xf32>
    %518 = vector.extract_strided_slice %513 {offsets = [0, 0], sizes = [8, 32], strides = [1, 1]} : vector<8x96xf32> to vector<8x32xf32>
    %519 = arith.addf %517, %518 : vector<8x32xf32>
    %520 = arith.negf %519 : vector<8x32xf32>
    %521 = math.exp %520 : vector<8x32xf32>
    %cst_136 = arith.constant 1.000000e+00 : f32
    %522 = vector.broadcast %cst_136 : f32 to vector<8x32xf32>
    %523 = arith.addf %522, %521 : vector<8x32xf32>
    %524 = arith.divf %522, %523 : vector<8x32xf32>
    %525 = vector.extract_strided_slice %516 {offsets = [0, 32], sizes = [8, 32], strides = [1, 1]} : vector<8x96xf32> to vector<8x32xf32>
    %526 = vector.extract_strided_slice %513 {offsets = [0, 32], sizes = [8, 32], strides = [1, 1]} : vector<8x96xf32> to vector<8x32xf32>
    %527 = arith.addf %525, %526 : vector<8x32xf32>
    %528 = arith.negf %527 : vector<8x32xf32>
    %529 = math.exp %528 : vector<8x32xf32>
    %cst_137 = arith.constant 1.000000e+00 : f32
    %530 = vector.broadcast %cst_137 : f32 to vector<8x32xf32>
    %531 = arith.addf %530, %529 : vector<8x32xf32>
    %532 = arith.divf %530, %531 : vector<8x32xf32>
    %533 = vector.extract_strided_slice %516 {offsets = [0, 64], sizes = [8, 32], strides = [1, 1]} : vector<8x96xf32> to vector<8x32xf32>
    %534 = vector.extract_strided_slice %513 {offsets = [0, 64], sizes = [8, 32], strides = [1, 1]} : vector<8x96xf32> to vector<8x32xf32>
    %535 = arith.mulf %524, %534 : vector<8x32xf32>
    %536 = arith.addf %533, %535 : vector<8x32xf32>
    %537 = math.tanh %536 : vector<8x32xf32>
    %cst_138 = arith.constant 1.000000e+00 : f32
    %538 = vector.broadcast %cst_138 : f32 to vector<8x32xf32>
    %539 = arith.subf %538, %532 : vector<8x32xf32>
    %540 = arith.mulf %539, %537 : vector<8x32xf32>
    %541 = arith.mulf %532, %508 : vector<8x32xf32>
    %542 = arith.addf %540, %541 : vector<8x32xf32>
    %543 = arith.index_cast %511 : i32 to index
    %c0_139 = arith.constant 0 : index
    %544 = vector.load %arg17[%543, %c0_139] : memref<64x32xf32, #tpu.memory_space<vmem>>, vector<8x32xf32>
    tpu.vector_store %arg17[%543, %c0_139], %542 {strides = array<i32>} : memref<64x32xf32, #tpu.memory_space<vmem>>, vector<8x32xf32>,
    %c8_i32_140 = arith.constant 8 : i32
    %c0_141 = arith.constant 0 : index
    %c0_142 = arith.constant 0 : index
    %545 = vector.load %arg14[%c0_141, %c0_142] : memref<8x32xf32, #tpu.memory_space<vmem>>, vector<8x32xf32>
    tpu.vector_store %arg14[%c0_141, %c0_142], %542 {strides = array<i32>} : memref<8x32xf32, #tpu.memory_space<vmem>>, vector<8x32xf32>,
    %c0_143 = arith.constant 0 : index
    %c0_144 = arith.constant 0 : index
    %546 = vector.load %arg17[%c0_143, %c0_144] : memref<64x32xf32, #tpu.memory_space<vmem>>, vector<64x32xf32>
    %c0_145 = arith.constant 0 : index
    %c0_146 = arith.constant 0 : index
    %547 = vector.load %arg11[%c0_145, %c0_146] : memref<32x32xf32, #tpu.memory_space<vmem>>, vector<32x32xf32>
    %cst_147 = arith.constant dense<0.000000e+00> : vector<64x32xf32>
    %548 = tpu.matmul %546, %547, %cst_147 {dimension_numbers = #tpu.dot_dimension_numbers<[1], [0], [0], [1], [0, 0, 1, 1], [], []>} : vector<64x32xf32>, vector<32x32xf32>, vector<64x32xf32> -> vector<64x32xf32>
    %c0_148 = arith.constant 0 : index
    %c0_149 = arith.constant 0 : index
    %549 = vector.load %arg12[%c0_148, %c0_149] : memref<1x32xf32, #tpu.memory_space<vmem>>, vector<1x32xf32>
    %550 = vector.broadcast %549 : vector<1x32xf32> to vector<64x32xf32>
    %551 = arith.addf %548, %550 : vector<64x32xf32>
    %c0_150 = arith.constant 0 : index
    %c0_151 = arith.constant 0 : index
    %552 = vector.load %arg13[%c0_150, %c0_151] : memref<64x32xf32, #tpu.memory_space<vmem>>, vector<64x32xf32>
    tpu.vector_store %arg13[%c0_150, %c0_151], %551 {strides = array<i32>} : memref<64x32xf32, #tpu.memory_space<vmem>>, vector<64x32xf32>,
    return
  }
}

</mosaic_0001>

<llo_original>
// kernel: encoder_decoder_forward.1
$region0: #{encoder_decoder_forward.1}
  #allocation0 [shape = 'u32[]', space=smem, size = 0x4, offset = 0x4, fixed_abs, tag = 'smem constant byte address 0x4 - core index']
  #allocation1 [shape = 'u32[144,128]{1,0:T(1,128)}', space=vmem, size = 0x12000, scoped, tag = 'internal scratch']
  #allocation2 [shape = 'f32[64,96]{1,0:T(8,128)}', space=vmem, size = 0x8000, scoped, tag = 'scratch operand']
  #allocation3 [shape = 'f32[64,96]{1,0:T(8,128)}', space=vmem, size = 0x8000, scoped, tag = 'scratch operand']
  #allocation4 [shape = 'f32[64,32]{1,0:T(8,128)}', space=vmem, size = 0x8000, scoped, tag = 'scratch operand']
  %s0 = inlined_call_operand.vmem [shape: f32[64,32], index: 0, kind: input, shape index: {}]
  %s1 = inlined_call_operand.vmem [shape: f32[64,32], index: 1, kind: input, shape index: {}]
  %s2 = inlined_call_operand.vmem [shape: f32[32,96], index: 2, kind: input, shape index: {}]
  %s3 = inlined_call_operand.vmem [shape: f32[32,96], index: 3, kind: input, shape index: {}]
  %s4 = inlined_call_operand.vmem [shape: f32[1,96], index: 4, kind: input, shape index: {}]
  %s5 = inlined_call_operand.vmem [shape: f32[1,96], index: 5, kind: input, shape index: {}]
  %s6 = inlined_call_operand.vmem [shape: f32[32,96], index: 6, kind: input, shape index: {}]
  %s7 = inlined_call_operand.vmem [shape: f32[32,96], index: 7, kind: input, shape index: {}]
  %s8 = inlined_call_operand.vmem [shape: f32[32,96], index: 8, kind: input, shape index: {}]
  %s9 = inlined_call_operand.vmem [shape: f32[1,96], index: 9, kind: input, shape index: {}]
  %s10 = inlined_call_operand.vmem [shape: f32[1,96], index: 10, kind: input, shape index: {}]
  %s11 = inlined_call_operand.vmem [shape: f32[32,32], index: 11, kind: input, shape index: {}]
  %s12 = inlined_call_operand.vmem [shape: f32[1,32], index: 12, kind: input, shape index: {}]
  %s13 = inlined_call_operand.vmem [shape: f32[64,32], index: 13, kind: output, shape index: {0}]
  %s14 = inlined_call_operand.vmem [shape: f32[8,32], index: 14, kind: output, shape index: {1}]
  %15 = xla_tuple %s13, %s14
  %s16 = sld [smem:[#allocation0]]
  $region70: #{encoder_decoder_forward.1} parent=0
    _
  %s18 = ssub.s32 1, %s16
  %s19 = scalar_select 0, %s18, %s16
  // Predicated region
  $region2: #{encoder_decoder_forward.1} parent=0 // pred_check
    _
  $region3: #{encoder_decoder_forward.1} parent=0 // pred_check_branch
    %21 = sbr.rel (0) target = $region5
  $region4: #{encoder_decoder_forward.1} parent=0 // pred_region
    _
  $region5: #{encoder_decoder_forward.1} parent=0 // pred_fallthru
    _
  // Predicated region
  $region6: #{encoder_decoder_forward.1} parent=0 // pred_check
    _
  $region7: #{encoder_decoder_forward.1} parent=0 // pred_check_branch
    %23 = sbr.rel (0) target = $region9
  $region8: #{encoder_decoder_forward.1} parent=0 // pred_region
    _
  $region9: #{encoder_decoder_forward.1} parent=0 // pred_fallthru
    _
  // Predicated region
  $region10: #{encoder_decoder_forward.1} parent=0 // pred_check
    _
  $region11: #{encoder_decoder_forward.1} parent=0 // pred_check_branch
    %25 = sbr.rel (0) target = $region13
  $region12: #{encoder_decoder_forward.1} parent=0 // pred_region
    _
  $region13: #{encoder_decoder_forward.1} parent=0 // pred_fallthru
    _
  // Predicated region
  $region14: #{encoder_decoder_forward.1} parent=0 // pred_check
    _
  $region15: #{encoder_decoder_forward.1} parent=0 // pred_check_branch
    %27 = sbr.rel (0) target = $region17
  $region16: #{encoder_decoder_forward.1} parent=0 // pred_region
    _
  $region17: #{encoder_decoder_forward.1} parent=0 // pred_fallthru
    _
  // Predicated region
  $region18: #{encoder_decoder_forward.1} parent=0 // pred_check
    _
  $region19: #{encoder_decoder_forward.1} parent=0 // pred_check_branch
    %29 = sbr.rel (0) target = $region21
  $region20: #{encoder_decoder_forward.1} parent=0 // pred_region
    _
  $region21: #{encoder_decoder_forward.1} parent=0 // pred_fallthru
    _
  // Predicated region
  $region22: #{encoder_decoder_forward.1} parent=0 // pred_check
    _
  $region23: #{encoder_decoder_forward.1} parent=0 // pred_check_branch
    %31 = sbr.rel (0) target = $region25
  $region24: #{encoder_decoder_forward.1} parent=0 // pred_region
    _
  $region25: #{encoder_decoder_forward.1} parent=0 // pred_fallthru
    _
  // Predicated region
  $region26: #{encoder_decoder_forward.1} parent=0 // pred_check
    _
  $region27: #{encoder_decoder_forward.1} parent=0 // pred_check_branch
    %33 = sbr.rel (0) target = $region29
  $region28: #{encoder_decoder_forward.1} parent=0 // pred_region
    _
  $region29: #{encoder_decoder_forward.1} parent=0 // pred_fallthru
    _
  // Predicated region
  $region30: #{encoder_decoder_forward.1} parent=0 // pred_check
    _
  $region31: #{encoder_decoder_forward.1} parent=0 // pred_check_branch
    %35 = sbr.rel (0) target = $region33
  $region32: #{encoder_decoder_forward.1} parent=0 // pred_region
    _
  $region33: #{encoder_decoder_forward.1} parent=0 // pred_fallthru
    _
  // Predicated region
  $region34: #{encoder_decoder_forward.1} parent=0 // pred_check
    _
  $region35: #{encoder_decoder_forward.1} parent=0 // pred_check_branch
    %37 = sbr.rel (0) target = $region37
  $region36: #{encoder_decoder_forward.1} parent=0 // pred_region
    _
  $region37: #{encoder_decoder_forward.1} parent=0 // pred_fallthru
    _
  // Predicated region
  $region38: #{encoder_decoder_forward.1} parent=0 // pred_check
    _
  $region39: #{encoder_decoder_forward.1} parent=0 // pred_check_branch
    %39 = sbr.rel (0) target = $region41
  $region40: #{encoder_decoder_forward.1} parent=0 // pred_region
    _
  $region41: #{encoder_decoder_forward.1} parent=0 // pred_fallthru
    _
  // Predicated region
  $region42: #{encoder_decoder_forward.1} parent=0 // pred_check
    _
  $region43: #{encoder_decoder_forward.1} parent=0 // pred_check_branch
    %41 = sbr.rel (0) target = $region45
  $region44: #{encoder_decoder_forward.1} parent=0 // pred_region
    _
  $region45: #{encoder_decoder_forward.1} parent=0 // pred_fallthru
    _
  // Predicated region
  $region46: #{encoder_decoder_forward.1} parent=0 // pred_check
    _
  $region47: #{encoder_decoder_forward.1} parent=0 // pred_check_branch
    %43 = sbr.rel (0) target = $region49
  $region48: #{encoder_decoder_forward.1} parent=0 // pred_region
    _
  $region49: #{encoder_decoder_forward.1} parent=0 // pred_fallthru
    _
  // Predicated region
  $region50: #{encoder_decoder_forward.1} parent=0 // pred_check
    _
  $region51: #{encoder_decoder_forward.1} parent=0 // pred_check_branch
    %45 = sbr.rel (0) target = $region53
  $region52: #{encoder_decoder_forward.1} parent=0 // pred_region
    _
  $region53: #{encoder_decoder_forward.1} parent=0 // pred_fallthru
    _
  %v46 = vld [vmem:[%s0] sm:$0xff]
  %v47 = vld [vmem:[%s0 + $0x8] sm:$0xff]
  %v48 = vld [vmem:[%s0 + $0x10] sm:$0xff]
  %v49 = vld [vmem:[%s0 + $0x18] sm:$0xff]
  %v50 = vld [vmem:[%s0 + $0x20] sm:$0xff]
  %v51 = vld [vmem:[%s0 + $0x28] sm:$0xff]
  %v52 = vld [vmem:[%s0 + $0x30] sm:$0xff]
  %v53 = vld [vmem:[%s0 + $0x38] sm:$0xff]
  %v54 = vld [vmem:[%s2] sm:$0xff]
  %v55 = vld [vmem:[%s2 + $0x8] sm:$0xff]
  %v56 = vld [vmem:[%s2 + $0x10] sm:$0xff]
  %v57 = vld [vmem:[%s2 + $0x18] sm:$0xff]
  %v58 = vld [vmem:[%s4] sm:$0x1]
  %v60 = vlaneseq
  %v61 = vshrl.u32 %v60, 7
  %v62 = vsub.s32 0, %v61
  %v63 = vrot.slane %v58, %v62
  %vm65 = vcmask 261120
  %v67 = vsel %vm65, %v46, 0
  %v70 = vsel %vm65, %v47, 0
  %v73 = vsel %vm65, %v48, 0
  %v76 = vsel %vm65, %v49, 0
  %v79 = vsel %vm65, %v50, 0
  %v82 = vsel %vm65, %v51, 0
  %v85 = vsel %vm65, %v52, 0
  %v88 = vsel %vm65, %v53, 0
  %90 = vmatprep.subr.mxu0 0.0
  %91 = vmatpush1.msra.mxu0 %v54
  %92 = vmatprep.subr.mxu0 0.0
  %93 = vmatpush1.msra.mxu0 %v55
  %94 = vmatprep.subr.mxu0 0.0
  %95 = vmatpush1.msra.mxu0 %v56
  %96 = vmatprep.subr.mxu0 0.0
  %97 = vmatpush1.msra.mxu0 %v57
  %98 = vmatprep.subr.mxu0 0.0
  %99 = vmatpush1.msra.mxu0 0.0
  %100 = vmatprep.subr.mxu0 0.0
  %101 = vmatpush1.msra.mxu0 0.0
  %102 = vmatprep.subr.mxu0 0.0
  %103 = vmatpush1.msra.mxu0 0.0
  %104 = vmatprep.subr.mxu0 0.0
  %105 = vmatpush1.msra.mxu0 0.0
  %106 = vmatprep.subr.mxu0 0.0
  %107 = vmatpush1.msra.mxu0 0.0
  %108 = vmatprep.subr.mxu0 0.0
  %109 = vmatpush1.msra.mxu0 0.0
  %110 = vmatprep.subr.mxu0 0.0
  %111 = vmatpush1.msra.mxu0 0.0
  %112 = vmatprep.subr.mxu0 0.0
  %113 = vmatpush1.msra.mxu0 0.0
  %114 = vmatprep.subr.mxu0 0.0
  %115 = vmatpush1.msra.mxu0 0.0
  %116 = vmatprep.subr.mxu0 0.0
  %117 = vmatpush1.msra.mxu0 0.0
  %118 = vmatprep.subr.mxu0 0.0
  %119 = vmatpush1.msra.mxu0 0.0
  %120 = vmatprep.subr.mxu0 0.0
  %121 = vmatpush1.msra.mxu0 0.0
  %122 = vmatprep.subr.mxu0 0.0
  %123 = vmatpush1.msra.mxu0 0.0
  %124 = vmatprep.subr.mxu0 0.0
  %125 = vmatpush1.msra.mxu0 0.0
  %126 = vmatprep.subr.mxu0 0.0
  %127 = vmatpush1.msra.mxu0 0.0
  %128 = vmatprep.subr.mxu0 0.0
  %129 = vmatpush1.msra.mxu0 0.0
  %130 = vmatprep.subr.mxu0 0.0
  %131 = vmatpush1.msra.mxu0 0.0
  %132 = vmatprep.subr.mxu0 0.0
  %133 = vmatpush1.msra.mxu0 0.0
  %134 = vmatprep.subr.mxu0 0.0
  %135 = vmatpush1.msra.mxu0 0.0
  %136 = vmatprep.subr.mxu0 0.0
  %137 = vmatpush1.msra.mxu0 0.0
  %138 = vmatprep.subr.mxu0 0.0
  %139 = vmatpush1.msra.mxu0 0.0
  %140 = vmatprep.subr.mxu0 0.0
  %141 = vmatpush1.msra.mxu0 0.0
  %142 = vmatprep.subr.mxu0 0.0
  %143 = vmatpush1.msra.mxu0 0.0
  %144 = vmatprep.subr.mxu0 0.0
  %145 = vmatpush1.msra.mxu0 0.0
  %146 = vmatprep.subr.mxu0 0.0
  %147 = vmatpush1.msra.mxu0 0.0
  %148 = vmatprep.subr.mxu0 0.0
  %149 = vmatpush1.msra.mxu0 0.0
  %150 = vmatprep.subr.mxu0 0.0
  %151 = vmatpush1.msra.mxu0 0.0
  %152 = vmatprep.subr.mxu0 0.0
  %153 = vmatpush1.msra.mxu0 0.0
  %154 = vmatprep.mubr.f32.mxu0 0.0
  %155 = vmatmul.mubr.f32.gmra.mrb[0].mxu0 %v67
  %v156 = vpop.f32.mrb[0].mxu0
  %v157 = vadd.f32 %v63, %v156
  %v158 = vpop.f32.mrb[0].mxu0
  %159 = vmatprep.mubr.f32.mxu0 0.0
  %160 = vmatmul.mubr.f32.gmra.mrb[0].mxu0 %v70
  %v161 = vpop.f32.mrb[0].mxu0
  %v162 = vadd.f32 %v63, %v161
  %v163 = vpop.f32.mrb[0].mxu0
  %164 = vmatprep.mubr.f32.mxu0 0.0
  %165 = vmatmul.mubr.f32.gmra.mrb[0].mxu0 %v73
  %v166 = vpop.f32.mrb[0].mxu0
  %v167 = vadd.f32 %v63, %v166
  %v168 = vpop.f32.mrb[0].mxu0
  %169 = vmatprep.mubr.f32.mxu0 0.0
  %170 = vmatmul.mubr.f32.gmra.mrb[0].mxu0 %v76
  %v171 = vpop.f32.mrb[0].mxu0
  %v172 = vadd.f32 %v63, %v171
  %v173 = vpop.f32.mrb[0].mxu0
  %174 = vmatprep.mubr.f32.mxu0 0.0
  %175 = vmatmul.mubr.f32.gmra.mrb[0].mxu0 %v79
  %v176 = vpop.f32.mrb[0].mxu0
  %v177 = vadd.f32 %v63, %v176
  %v178 = vpop.f32.mrb[0].mxu0
  %179 = vmatprep.mubr.f32.mxu0 0.0
  %180 = vmatmul.mubr.f32.gmra.mrb[0].mxu0 %v82
  %v181 = vpop.f32.mrb[0].mxu0
  %v182 = vadd.f32 %v63, %v181
  %v183 = vpop.f32.mrb[0].mxu0
  %184 = vmatprep.mubr.f32.mxu0 0.0
  %185 = vmatmul.mubr.f32.gmra.mrb[0].mxu0 %v85
  %v186 = vpop.f32.mrb[0].mxu0
  %v187 = vadd.f32 %v63, %v186
  %v188 = vpop.f32.mrb[0].mxu0
  %189 = vmatprep.mubr.f32.mxu0 0.0
  %190 = vmatmul.mubr.f32.gmra.mrb[0].mxu0 %v88
  %v191 = vpop.f32.mrb[0].mxu0
  %v192 = vadd.f32 %v63, %v191
  %v193 = vpop.f32.mrb[0].mxu0
  %194 = vdwg.mxu0
  %vm195 = vcmask 785408
  %196 = vst.msk [vmem:[#allocation2] sm:$0xff] %vm195, %v157
  %197 = vst.msk [vmem:[#allocation2 + $0x8] sm:$0xff] %vm195, %v162
  %198 = vst.msk [vmem:[#allocation2 + $0x10] sm:$0xff] %vm195, %v167
  %199 = vst.msk [vmem:[#allocation2 + $0x18] sm:$0xff] %vm195, %v172
  %200 = vst.msk [vmem:[#allocation2 + $0x20] sm:$0xff] %vm195, %v177
  %201 = vst.msk [vmem:[#allocation2 + $0x28] sm:$0xff] %vm195, %v182
  %202 = vst.msk [vmem:[#allocation2 + $0x30] sm:$0xff] %vm195, %v187
  %203 = vst.msk [vmem:[#allocation2 + $0x38] sm:$0xff] %vm195, %v192
  %v204 = vld [vmem:[%s3] sm:$0xff]
  %v205 = vld [vmem:[%s3 + $0x8] sm:$0xff]
  %v206 = vld [vmem:[%s3 + $0x10] sm:$0xff]
  %v207 = vld [vmem:[%s3 + $0x18] sm:$0xff]
  %v208 = vld [vmem:[%s5] sm:$0x1]
  %v210 = vlaneseq
  %v211 = vshrl.u32 %v210, 7
  %v212 = vsub.s32 0, %v211
  %v213 = vrot.slane %v208, %v212
  %v216 = vsel %vm65, 0.0, 0
  %218 = vmatprep.subr.mxu0 0.0
  %219 = vmatpush1.msra.mxu0 %v204
  %220 = vmatprep.subr.mxu0 0.0
  %221 = vmatpush1.msra.mxu0 %v205
  %222 = vmatprep.subr.mxu0 0.0
  %223 = vmatpush1.msra.mxu0 %v206
  %224 = vmatprep.subr.mxu0 0.0
  %225 = vmatpush1.msra.mxu0 %v207
  %226 = vmatprep.subr.mxu0 0.0
  %227 = vmatpush1.msra.mxu0 0.0
  %228 = vmatprep.subr.mxu0 0.0
  %229 = vmatpush1.msra.mxu0 0.0
  %230 = vmatprep.subr.mxu0 0.0
  %231 = vmatpush1.msra.mxu0 0.0
  %232 = vmatprep.subr.mxu0 0.0
  %233 = vmatpush1.msra.mxu0 0.0
  %234 = vmatprep.subr.mxu0 0.0
  %235 = vmatpush1.msra.mxu0 0.0
  %236 = vmatprep.subr.mxu0 0.0
  %237 = vmatpush1.msra.mxu0 0.0
  %238 = vmatprep.subr.mxu0 0.0
  %239 = vmatpush1.msra.mxu0 0.0
  %240 = vmatprep.subr.mxu0 0.0
  %241 = vmatpush1.msra.mxu0 0.0
  %242 = vmatprep.subr.mxu0 0.0
  %243 = vmatpush1.msra.mxu0 0.0
  %244 = vmatprep.subr.mxu0 0.0
  %245 = vmatpush1.msra.mxu0 0.0
  %246 = vmatprep.subr.mxu0 0.0
  %247 = vmatpush1.msra.mxu0 0.0
  %248 = vmatprep.subr.mxu0 0.0
  %249 = vmatpush1.msra.mxu0 0.0
  %250 = vmatprep.subr.mxu0 0.0
  %251 = vmatpush1.msra.mxu0 0.0
  %252 = vmatprep.subr.mxu0 0.0
  %253 = vmatpush1.msra.mxu0 0.0
  %254 = vmatprep.subr.mxu0 0.0
  %255 = vmatpush1.msra.mxu0 0.0
  %256 = vmatprep.subr.mxu0 0.0
  %257 = vmatpush1.msra.mxu0 0.0
  %258 = vmatprep.subr.mxu0 0.0
  %259 = vmatpush1.msra.mxu0 0.0
  %260 = vmatprep.subr.mxu0 0.0
  %261 = vmatpush1.msra.mxu0 0.0
  %262 = vmatprep.subr.mxu0 0.0
  %263 = vmatpush1.msra.mxu0 0.0
  %264 = vmatprep.subr.mxu0 0.0
  %265 = vmatpush1.msra.mxu0 0.0
  %266 = vmatprep.subr.mxu0 0.0
  %267 = vmatpush1.msra.mxu0 0.0
  %268 = vmatprep.subr.mxu0 0.0
  %269 = vmatpush1.msra.mxu0 0.0
  %270 = vmatprep.subr.mxu0 0.0
  %271 = vmatpush1.msra.mxu0 0.0
  %272 = vmatprep.subr.mxu0 0.0
  %273 = vmatpush1.msra.mxu0 0.0
  %274 = vmatprep.subr.mxu0 0.0
  %275 = vmatpush1.msra.mxu0 0.0
  %276 = vmatprep.subr.mxu0 0.0
  %277 = vmatpush1.msra.mxu0 0.0
  %278 = vmatprep.subr.mxu0 0.0
  %279 = vmatpush1.msra.mxu0 0.0
  %280 = vmatprep.subr.mxu0 0.0
  %281 = vmatpush1.msra.mxu0 0.0
  %282 = vmatprep.mubr.f32.mxu0 0.0
  %283 = vmatmul.mubr.f32.gmra.mrb[0].mxu0 %v216
  %v284 = vpop.f32.mrb[0].mxu0
  %v285 = vadd.f32 %v213, %v284
  %v286 = vpop.f32.mrb[0].mxu0
  %287 = vdwg.mxu0
  %v288 = vld [vmem:[#allocation2] sm:$0xff]
  %v289 = vadd.f32 %v288, %v285
  %v290 = vxor.u32 %v289, 2147483648
  %v291 = vmul.f32 %v290, 1.442695
  %v292 = vpow.pop %v291
  %v293 = vadd.f32 %v292, 1.0
  %v294 = vrcp.pop %v293
  %v295 = vmul.f32 1.0, %v294
  %297 = vrot.lane.b32.xlu0 %v285, 64
  %v298 = vpop.permute.xlu0 %297
  %v300 = vmul.f32 %v295, %v298
  %302 = vrot.lane.b32.xlu0 %v300, 64
  %v303 = vpop.permute.xlu0 %302
  %v305 = vadd.f32 %v288, %v303
  %v306 = vtanh.pop %v305
  %v307 = vsub.f32 1.0, %v295
  %309 = vrot.lane.b32.xlu0 %v306, 96
  %v310 = vpop.permute.xlu0 %309
  %v312 = vmul.f32 %v307, %v310
  %v313 = vmul.f32 %v295, 0.0
  %v314 = vadd.f32 %v312, %v313
  %316 = vrot.lane.b32.xlu0 %v314, 96
  %v317 = vpop.permute.xlu0 %316
  %v318 = vsel %vm65, %v317, 0
  %320 = vmatprep.subr.mxu0 0.0
  %321 = vmatpush1.msra.mxu0 %v204
  %322 = vmatprep.subr.mxu0 0.0
  %323 = vmatpush1.msra.mxu0 %v205
  %324 = vmatprep.subr.mxu0 0.0
  %325 = vmatpush1.msra.mxu0 %v206
  %326 = vmatprep.subr.mxu0 0.0
  %327 = vmatpush1.msra.mxu0 %v207
  %328 = vmatprep.subr.mxu0 0.0
  %329 = vmatpush1.msra.mxu0 0.0
  %330 = vmatprep.subr.mxu0 0.0
  %331 = vmatpush1.msra.mxu0 0.0
  %332 = vmatprep.subr.mxu0 0.0
  %333 = vmatpush1.msra.mxu0 0.0
  %334 = vmatprep.subr.mxu0 0.0
  %335 = vmatpush1.msra.mxu0 0.0
  %336 = vmatprep.subr.mxu0 0.0
  %337 = vmatpush1.msra.mxu0 0.0
  %338 = vmatprep.subr.mxu0 0.0
  %339 = vmatpush1.msra.mxu0 0.0
  %340 = vmatprep.subr.mxu0 0.0
  %341 = vmatpush1.msra.mxu0 0.0
  %342 = vmatprep.subr.mxu0 0.0
  %343 = vmatpush1.msra.mxu0 0.0
  %344 = vmatprep.subr.mxu0 0.0
  %345 = vmatpush1.msra.mxu0 0.0
  %346 = vmatprep.subr.mxu0 0.0
  %347 = vmatpush1.msra.mxu0 0.0
  %348 = vmatprep.subr.mxu0 0.0
  %349 = vmatpush1.msra.mxu0 0.0
  %350 = vmatprep.subr.mxu0 0.0
  %351 = vmatpush1.msra.mxu0 0.0
  %352 = vmatprep.subr.mxu0 0.0
  %353 = vmatpush1.msra.mxu0 0.0
  %354 = vmatprep.subr.mxu0 0.0
  %355 = vmatpush1.msra.mxu0 0.0
  %356 = vmatprep.subr.mxu0 0.0
  %357 = vmatpush1.msra.mxu0 0.0
  %358 = vmatprep.subr.mxu0 0.0
  %359 = vmatpush1.msra.mxu0 0.0
  %360 = vmatprep.subr.mxu0 0.0
  %361 = vmatpush1.msra.mxu0 0.0
  %362 = vmatprep.subr.mxu0 0.0
  %363 = vmatpush1.msra.mxu0 0.0
  %364 = vmatprep.subr.mxu0 0.0
  %365 = vmatpush1.msra.mxu0 0.0
  %366 = vmatprep.subr.mxu0 0.0
  %367 = vmatpush1.msra.mxu0 0.0
  %368 = vmatprep.subr.mxu0 0.0
  %369 = vmatpush1.msra.mxu0 0.0
  %370 = vmatprep.subr.mxu0 0.0
  %371 = vmatpush1.msra.mxu0 0.0
  %372 = vmatprep.subr.mxu0 0.0
  %373 = vmatpush1.msra.mxu0 0.0
  %374 = vmatprep.subr.mxu0 0.0
  %375 = vmatpush1.msra.mxu0 0.0
  %376 = vmatprep.subr.mxu0 0.0
  %377 = vmatpush1.msra.mxu0 0.0
  %378 = vmatprep.subr.mxu0 0.0
  %379 = vmatpush1.msra.mxu0 0.0
  %380 = vmatprep.subr.mxu0 0.0
  %381 = vmatpush1.msra.mxu0 0.0
  %382 = vmatprep.subr.mxu0 0.0
  %383 = vmatpush1.msra.mxu0 0.0
  %384 = vmatprep.mubr.f32.mxu0 0.0
  %385 = vmatmul.mubr.f32.gmra.mrb[0].mxu0 %v318
  %v386 = vpop.f32.mrb[0].mxu0
  %v387 = vadd.f32 %v213, %v386
  %v388 = vpop.f32.mrb[0].mxu0
  %389 = vdwg.mxu0
  %v390 = vld [vmem:[#allocation2 + $0x8] sm:$0xff]
  %v391 = vadd.f32 %v390, %v387
  %v392 = vxor.u32 %v391, 2147483648
  %v393 = vmul.f32 %v392, 1.442695
  %v394 = vpow.pop %v393
  %v395 = vadd.f32 %v394, 1.0
  %v396 = vrcp.pop %v395
  %v397 = vmul.f32 1.0, %v396
  %399 = vrot.lane.b32.xlu0 %v387, 64
  %v400 = vpop.permute.xlu0 %399
  %v402 = vmul.f32 %v397, %v400
  %404 = vrot.lane.b32.xlu0 %v402, 64
  %v405 = vpop.permute.xlu0 %404
  %v407 = vadd.f32 %v390, %v405
  %v408 = vtanh.pop %v407
  %v409 = vsub.f32 1.0, %v397
  %411 = vrot.lane.b32.xlu0 %v408, 96
  %v412 = vpop.permute.xlu0 %411
  %v414 = vmul.f32 %v409, %v412
  %v415 = vmul.f32 %v397, %v314
  %v416 = vadd.f32 %v414, %v415
  %418 = vrot.lane.b32.xlu0 %v416, 96
  %v419 = vpop.permute.xlu0 %418
  %v420 = vsel %vm65, %v419, 0
  %422 = vmatprep.subr.mxu0 0.0
  %423 = vmatpush1.msra.mxu0 %v204
  %424 = vmatprep.subr.mxu0 0.0
  %425 = vmatpush1.msra.mxu0 %v205
  %426 = vmatprep.subr.mxu0 0.0
  %427 = vmatpush1.msra.mxu0 %v206
  %428 = vmatprep.subr.mxu0 0.0
  %429 = vmatpush1.msra.mxu0 %v207
  %430 = vmatprep.subr.mxu0 0.0
  %431 = vmatpush1.msra.mxu0 0.0
  %432 = vmatprep.subr.mxu0 0.0
  %433 = vmatpush1.msra.mxu0 0.0
  %434 = vmatprep.subr.mxu0 0.0
  %435 = vmatpush1.msra.mxu0 0.0
  %436 = vmatprep.subr.mxu0 0.0
  %437 = vmatpush1.msra.mxu0 0.0
  %438 = vmatprep.subr.mxu0 0.0
  %439 = vmatpush1.msra.mxu0 0.0
  %440 = vmatprep.subr.mxu0 0.0
  %441 = vmatpush1.msra.mxu0 0.0
  %442 = vmatprep.subr.mxu0 0.0
  %443 = vmatpush1.msra.mxu0 0.0
  %444 = vmatprep.subr.mxu0 0.0
  %445 = vmatpush1.msra.mxu0 0.0
  %446 = vmatprep.subr.mxu0 0.0
  %447 = vmatpush1.msra.mxu0 0.0
  %448 = vmatprep.subr.mxu0 0.0
  %449 = vmatpush1.msra.mxu0 0.0
  %450 = vmatprep.subr.mxu0 0.0
  %451 = vmatpush1.msra.mxu0 0.0
  %452 = vmatprep.subr.mxu0 0.0
  %453 = vmatpush1.msra.mxu0 0.0
  %454 = vmatprep.subr.mxu0 0.0
  %455 = vmatpush1.msra.mxu0 0.0
  %456 = vmatprep.subr.mxu0 0.0
  %457 = vmatpush1.msra.mxu0 0.0
  %458 = vmatprep.subr.mxu0 0.0
  %459 = vmatpush1.msra.mxu0 0.0
  %460 = vmatprep.subr.mxu0 0.0
  %461 = vmatpush1.msra.mxu0 0.0
  %462 = vmatprep.subr.mxu0 0.0
  %463 = vmatpush1.msra.mxu0 0.0
  %464 = vmatprep.subr.mxu0 0.0
  %465 = vmatpush1.msra.mxu0 0.0
  %466 = vmatprep.subr.mxu0 0.0
  %467 = vmatpush1.msra.mxu0 0.0
  %468 = vmatprep.subr.mxu0 0.0
  %469 = vmatpush1.msra.mxu0 0.0
  %470 = vmatprep.subr.mxu0 0.0
  %471 = vmatpush1.msra.mxu0 0.0
  %472 = vmatprep.subr.mxu0 0.0
  %473 = vmatpush1.msra.mxu0 0.0
  %474 = vmatprep.subr.mxu0 0.0
  %475 = vmatpush1.msra.mxu0 0.0
  %476 = vmatprep.subr.mxu0 0.0
  %477 = vmatpush1.msra.mxu0 0.0
  %478 = vmatprep.subr.mxu0 0.0
  %479 = vmatpush1.msra.mxu0 0.0
  %480 = vmatprep.subr.mxu0 0.0
  %481 = vmatpush1.msra.mxu0 0.0
  %482 = vmatprep.subr.mxu0 0.0
  %483 = vmatpush1.msra.mxu0 0.0
  %484 = vmatprep.subr.mxu0 0.0
  %485 = vmatpush1.msra.mxu0 0.0
  %486 = vmatprep.mubr.f32.mxu0 0.0
  %487 = vmatmul.mubr.f32.gmra.mrb[0].mxu0 %v420
  %v488 = vpop.f32.mrb[0].mxu0
  %v489 = vadd.f32 %v213, %v488
  %v490 = vpop.f32.mrb[0].mxu0
  %491 = vdwg.mxu0
  %v492 = vld [vmem:[#allocation2 + $0x10] sm:$0xff]
  %v493 = vadd.f32 %v492, %v489
  %v494 = vxor.u32 %v493, 2147483648
  %v495 = vmul.f32 %v494, 1.442695
  %v496 = vpow.pop %v495
  %v497 = vadd.f32 %v496, 1.0
  %v498 = vrcp.pop %v497
  %v499 = vmul.f32 1.0, %v498
  %501 = vrot.lane.b32.xlu0 %v489, 64
  %v502 = vpop.permute.xlu0 %501
  %v504 = vmul.f32 %v499, %v502
  %506 = vrot.lane.b32.xlu0 %v504, 64
  %v507 = vpop.permute.xlu0 %506
  %v509 = vadd.f32 %v492, %v507
  %v510 = vtanh.pop %v509
  %v511 = vsub.f32 1.0, %v499
  %513 = vrot.lane.b32.xlu0 %v510, 96
  %v514 = vpop.permute.xlu0 %513
  %v516 = vmul.f32 %v511, %v514
  %v517 = vmul.f32 %v499, %v416
  %v518 = vadd.f32 %v516, %v517
  %520 = vrot.lane.b32.xlu0 %v518, 96
  %v521 = vpop.permute.xlu0 %520
  %v522 = vsel %vm65, %v521, 0
  %524 = vmatprep.subr.mxu0 0.0
  %525 = vmatpush1.msra.mxu0 %v204
  %526 = vmatprep.subr.mxu0 0.0
  %527 = vmatpush1.msra.mxu0 %v205
  %528 = vmatprep.subr.mxu0 0.0
  %529 = vmatpush1.msra.mxu0 %v206
  %530 = vmatprep.subr.mxu0 0.0
  %531 = vmatpush1.msra.mxu0 %v207
  %532 = vmatprep.subr.mxu0 0.0
  %533 = vmatpush1.msra.mxu0 0.0
  %534 = vmatprep.subr.mxu0 0.0
  %535 = vmatpush1.msra.mxu0 0.0
  %536 = vmatprep.subr.mxu0 0.0
  %537 = vmatpush1.msra.mxu0 0.0
  %538 = vmatprep.subr.mxu0 0.0
  %539 = vmatpush1.msra.mxu0 0.0
  %540 = vmatprep.subr.mxu0 0.0
  %541 = vmatpush1.msra.mxu0 0.0
  %542 = vmatprep.subr.mxu0 0.0
  %543 = vmatpush1.msra.mxu0 0.0
  %544 = vmatprep.subr.mxu0 0.0
  %545 = vmatpush1.msra.mxu0 0.0
  %546 = vmatprep.subr.mxu0 0.0
  %547 = vmatpush1.msra.mxu0 0.0
  %548 = vmatprep.subr.mxu0 0.0
  %549 = vmatpush1.msra.mxu0 0.0
  %550 = vmatprep.subr.mxu0 0.0
  %551 = vmatpush1.msra.mxu0 0.0
  %552 = vmatprep.subr.mxu0 0.0
  %553 = vmatpush1.msra.mxu0 0.0
  %554 = vmatprep.subr.mxu0 0.0
  %555 = vmatpush1.msra.mxu0 0.0
  %556 = vmatprep.subr.mxu0 0.0
  %557 = vmatpush1.msra.mxu0 0.0
  %558 = vmatprep.subr.mxu0 0.0
  %559 = vmatpush1.msra.mxu0 0.0
  %560 = vmatprep.subr.mxu0 0.0
  %561 = vmatpush1.msra.mxu0 0.0
  %562 = vmatprep.subr.mxu0 0.0
  %563 = vmatpush1.msra.mxu0 0.0
  %564 = vmatprep.subr.mxu0 0.0
  %565 = vmatpush1.msra.mxu0 0.0
  %566 = vmatprep.subr.mxu0 0.0
  %567 = vmatpush1.msra.mxu0 0.0
  %568 = vmatprep.subr.mxu0 0.0
  %569 = vmatpush1.msra.mxu0 0.0
  %570 = vmatprep.subr.mxu0 0.0
  %571 = vmatpush1.msra.mxu0 0.0
  %572 = vmatprep.subr.mxu0 0.0
  %573 = vmatpush1.msra.mxu0 0.0
  %574 = vmatprep.subr.mxu0 0.0
  %575 = vmatpush1.msra.mxu0 0.0
  %576 = vmatprep.subr.mxu0 0.0
  %577 = vmatpush1.msra.mxu0 0.0
  %578 = vmatprep.subr.mxu0 0.0
  %579 = vmatpush1.msra.mxu0 0.0
  %580 = vmatprep.subr.mxu0 0.0
  %581 = vmatpush1.msra.mxu0 0.0
  %582 = vmatprep.subr.mxu0 0.0
  %583 = vmatpush1.msra.mxu0 0.0
  %584 = vmatprep.subr.mxu0 0.0
  %585 = vmatpush1.msra.mxu0 0.0
  %586 = vmatprep.subr.mxu0 0.0
  %587 = vmatpush1.msra.mxu0 0.0
  %588 = vmatprep.mubr.f32.mxu0 0.0
  %589 = vmatmul.mubr.f32.gmra.mrb[0].mxu0 %v522
  %v590 = vpop.f32.mrb[0].mxu0
  %v591 = vadd.f32 %v213, %v590
  %v592 = vpop.f32.mrb[0].mxu0
  %593 = vdwg.mxu0
  %v594 = vld [vmem:[#allocation2 + $0x18] sm:$0xff]
  %v595 = vadd.f32 %v594, %v591
  %v596 = vxor.u32 %v595, 2147483648
  %v597 = vmul.f32 %v596, 1.442695
  %v598 = vpow.pop %v597
  %v599 = vadd.f32 %v598, 1.0
  %v600 = vrcp.pop %v599
  %v601 = vmul.f32 1.0, %v600
  %603 = vrot.lane.b32.xlu0 %v591, 64
  %v604 = vpop.permute.xlu0 %603
  %v606 = vmul.f32 %v601, %v604
  %608 = vrot.lane.b32.xlu0 %v606, 64
  %v609 = vpop.permute.xlu0 %608
  %v611 = vadd.f32 %v594, %v609
  %v612 = vtanh.pop %v611
  %v613 = vsub.f32 1.0, %v601
  %615 = vrot.lane.b32.xlu0 %v612, 96
  %v616 = vpop.permute.xlu0 %615
  %v618 = vmul.f32 %v613, %v616
  %v619 = vmul.f32 %v601, %v518
  %v620 = vadd.f32 %v618, %v619
  %622 = vrot.lane.b32.xlu0 %v620, 96
  %v623 = vpop.permute.xlu0 %622
  %v624 = vsel %vm65, %v623, 0
  %626 = vmatprep.subr.mxu0 0.0
  %627 = vmatpush1.msra.mxu0 %v204
  %628 = vmatprep.subr.mxu0 0.0
  %629 = vmatpush1.msra.mxu0 %v205
  %630 = vmatprep.subr.mxu0 0.0
  %631 = vmatpush1.msra.mxu0 %v206
  %632 = vmatprep.subr.mxu0 0.0
  %633 = vmatpush1.msra.mxu0 %v207
  %634 = vmatprep.subr.mxu0 0.0
  %635 = vmatpush1.msra.mxu0 0.0
  %636 = vmatprep.subr.mxu0 0.0
  %637 = vmatpush1.msra.mxu0 0.0
  %638 = vmatprep.subr.mxu0 0.0
  %639 = vmatpush1.msra.mxu0 0.0
  %640 = vmatprep.subr.mxu0 0.0
  %641 = vmatpush1.msra.mxu0 0.0
  %642 = vmatprep.subr.mxu0 0.0
  %643 = vmatpush1.msra.mxu0 0.0
  %644 = vmatprep.subr.mxu0 0.0
  %645 = vmatpush1.msra.mxu0 0.0
  %646 = vmatprep.subr.mxu0 0.0
  %647 = vmatpush1.msra.mxu0 0.0
  %648 = vmatprep.subr.mxu0 0.0
  %649 = vmatpush1.msra.mxu0 0.0
  %650 = vmatprep.subr.mxu0 0.0
  %651 = vmatpush1.msra.mxu0 0.0
  %652 = vmatprep.subr.mxu0 0.0
  %653 = vmatpush1.msra.mxu0 0.0
  %654 = vmatprep.subr.mxu0 0.0
  %655 = vmatpush1.msra.mxu0 0.0
  %656 = vmatprep.subr.mxu0 0.0
  %657 = vmatpush1.msra.mxu0 0.0
  %658 = vmatprep.subr.mxu0 0.0
  %659 = vmatpush1.msra.mxu0 0.0
  %660 = vmatprep.subr.mxu0 0.0
  %661 = vmatpush1.msra.mxu0 0.0
  %662 = vmatprep.subr.mxu0 0.0
  %663 = vmatpush1.msra.mxu0 0.0
  %664 = vmatprep.subr.mxu0 0.0
  %665 = vmatpush1.msra.mxu0 0.0
  %666 = vmatprep.subr.mxu0 0.0
  %667 = vmatpush1.msra.mxu0 0.0
  %668 = vmatprep.subr.mxu0 0.0
  %669 = vmatpush1.msra.mxu0 0.0
  %670 = vmatprep.subr.mxu0 0.0
  %671 = vmatpush1.msra.mxu0 0.0
  %672 = vmatprep.subr.mxu0 0.0
  %673 = vmatpush1.msra.mxu0 0.0
  %674 = vmatprep.subr.mxu0 0.0
  %675 = vmatpush1.msra.mxu0 0.0
  %676 = vmatprep.subr.mxu0 0.0
  %677 = vmatpush1.msra.mxu0 0.0
  %678 = vmatprep.subr.mxu0 0.0
  %679 = vmatpush1.msra.mxu0 0.0
  %680 = vmatprep.subr.mxu0 0.0
  %681 = vmatpush1.msra.mxu0 0.0
  %682 = vmatprep.subr.mxu0 0.0
  %683 = vmatpush1.msra.mxu0 0.0
  %684 = vmatprep.subr.mxu0 0.0
  %685 = vmatpush1.msra.mxu0 0.0
  %686 = vmatprep.subr.mxu0 0.0
  %687 = vmatpush1.msra.mxu0 0.0
  %688 = vmatprep.subr.mxu0 0.0
  %689 = vmatpush1.msra.mxu0 0.0
  %690 = vmatprep.mubr.f32.mxu0 0.0
  %691 = vmatmul.mubr.f32.gmra.mrb[0].mxu0 %v624
  %v692 = vpop.f32.mrb[0].mxu0
  %v693 = vadd.f32 %v213, %v692
  %v694 = vpop.f32.mrb[0].mxu0
  %695 = vdwg.mxu0
  %v696 = vld [vmem:[#allocation2 + $0x20] sm:$0xff]
  %v697 = vadd.f32 %v696, %v693
  %v698 = vxor.u32 %v697, 2147483648
  %v699 = vmul.f32 %v698, 1.442695
  %v700 = vpow.pop %v699
  %v701 = vadd.f32 %v700, 1.0
  %v702 = vrcp.pop %v701
  %v703 = vmul.f32 1.0, %v702
  %705 = vrot.lane.b32.xlu0 %v693, 64
  %v706 = vpop.permute.xlu0 %705
  %v708 = vmul.f32 %v703, %v706
  %710 = vrot.lane.b32.xlu0 %v708, 64
  %v711 = vpop.permute.xlu0 %710
  %v713 = vadd.f32 %v696, %v711
  %v714 = vtanh.pop %v713
  %v715 = vsub.f32 1.0, %v703
  %717 = vrot.lane.b32.xlu0 %v714, 96
  %v718 = vpop.permute.xlu0 %717
  %v720 = vmul.f32 %v715, %v718
  %v721 = vmul.f32 %v703, %v620
  %v722 = vadd.f32 %v720, %v721
  %724 = vrot.lane.b32.xlu0 %v722, 96
  %v725 = vpop.permute.xlu0 %724
  %v726 = vsel %vm65, %v725, 0
  %728 = vmatprep.subr.mxu0 0.0
  %729 = vmatpush1.msra.mxu0 %v204
  %730 = vmatprep.subr.mxu0 0.0
  %731 = vmatpush1.msra.mxu0 %v205
  %732 = vmatprep.subr.mxu0 0.0
  %733 = vmatpush1.msra.mxu0 %v206
  %734 = vmatprep.subr.mxu0 0.0
  %735 = vmatpush1.msra.mxu0 %v207
  %736 = vmatprep.subr.mxu0 0.0
  %737 = vmatpush1.msra.mxu0 0.0
  %738 = vmatprep.subr.mxu0 0.0
  %739 = vmatpush1.msra.mxu0 0.0
  %740 = vmatprep.subr.mxu0 0.0
  %741 = vmatpush1.msra.mxu0 0.0
  %742 = vmatprep.subr.mxu0 0.0
  %743 = vmatpush1.msra.mxu0 0.0
  %744 = vmatprep.subr.mxu0 0.0
  %745 = vmatpush1.msra.mxu0 0.0
  %746 = vmatprep.subr.mxu0 0.0
  %747 = vmatpush1.msra.mxu0 0.0
  %748 = vmatprep.subr.mxu0 0.0
  %749 = vmatpush1.msra.mxu0 0.0
  %750 = vmatprep.subr.mxu0 0.0
  %751 = vmatpush1.msra.mxu0 0.0
  %752 = vmatprep.subr.mxu0 0.0
  %753 = vmatpush1.msra.mxu0 0.0
  %754 = vmatprep.subr.mxu0 0.0
  %755 = vmatpush1.msra.mxu0 0.0
  %756 = vmatprep.subr.mxu0 0.0
  %757 = vmatpush1.msra.mxu0 0.0
  %758 = vmatprep.subr.mxu0 0.0
  %759 = vmatpush1.msra.mxu0 0.0
  %760 = vmatprep.subr.mxu0 0.0
  %761 = vmatpush1.msra.mxu0 0.0
  %762 = vmatprep.subr.mxu0 0.0
  %763 = vmatpush1.msra.mxu0 0.0
  %764 = vmatprep.subr.mxu0 0.0
  %765 = vmatpush1.msra.mxu0 0.0
  %766 = vmatprep.subr.mxu0 0.0
  %767 = vmatpush1.msra.mxu0 0.0
  %768 = vmatprep.subr.mxu0 0.0
  %769 = vmatpush1.msra.mxu0 0.0
  %770 = vmatprep.subr.mxu0 0.0
  %771 = vmatpush1.msra.mxu0 0.0
  %772 = vmatprep.subr.mxu0 0.0
  %773 = vmatpush1.msra.mxu0 0.0
  %774 = vmatprep.subr.mxu0 0.0
  %775 = vmatpush1.msra.mxu0 0.0
  %776 = vmatprep.subr.mxu0 0.0
  %777 = vmatpush1.msra.mxu0 0.0
  %778 = vmatprep.subr.mxu0 0.0
  %779 = vmatpush1.msra.mxu0 0.0
  %780 = vmatprep.subr.mxu0 0.0
  %781 = vmatpush1.msra.mxu0 0.0
  %782 = vmatprep.subr.mxu0 0.0
  %783 = vmatpush1.msra.mxu0 0.0
  %784 = vmatprep.subr.mxu0 0.0
  %785 = vmatpush1.msra.mxu0 0.0
  %786 = vmatprep.subr.mxu0 0.0
  %787 = vmatpush1.msra.mxu0 0.0
  %788 = vmatprep.subr.mxu0 0.0
  %789 = vmatpush1.msra.mxu0 0.0
  %790 = vmatprep.subr.mxu0 0.0
  %791 = vmatpush1.msra.mxu0 0.0
  %792 = vmatprep.mubr.f32.mxu0 0.0
  %793 = vmatmul.mubr.f32.gmra.mrb[0].mxu0 %v726
  %v794 = vpop.f32.mrb[0].mxu0
  %v795 = vadd.f32 %v213, %v794
  %v796 = vpop.f32.mrb[0].mxu0
  %797 = vdwg.mxu0
  %v798 = vld [vmem:[#allocation2 + $0x28] sm:$0xff]
  %v799 = vadd.f32 %v798, %v795
  %v800 = vxor.u32 %v799, 2147483648
  %v801 = vmul.f32 %v800, 1.442695
  %v802 = vpow.pop %v801
  %v803 = vadd.f32 %v802, 1.0
  %v804 = vrcp.pop %v803
  %v805 = vmul.f32 1.0, %v804
  %807 = vrot.lane.b32.xlu0 %v795, 64
  %v808 = vpop.permute.xlu0 %807
  %v810 = vmul.f32 %v805, %v808
  %812 = vrot.lane.b32.xlu0 %v810, 64
  %v813 = vpop.permute.xlu0 %812
  %v815 = vadd.f32 %v798, %v813
  %v816 = vtanh.pop %v815
  %v817 = vsub.f32 1.0, %v805
  %819 = vrot.lane.b32.xlu0 %v816, 96
  %v820 = vpop.permute.xlu0 %819
  %v822 = vmul.f32 %v817, %v820
  %v823 = vmul.f32 %v805, %v722
  %v824 = vadd.f32 %v822, %v823
  %826 = vrot.lane.b32.xlu0 %v824, 96
  %v827 = vpop.permute.xlu0 %826
  %v828 = vsel %vm65, %v827, 0
  %830 = vmatprep.subr.mxu0 0.0
  %831 = vmatpush1.msra.mxu0 %v204
  %832 = vmatprep.subr.mxu0 0.0
  %833 = vmatpush1.msra.mxu0 %v205
  %834 = vmatprep.subr.mxu0 0.0
  %835 = vmatpush1.msra.mxu0 %v206
  %836 = vmatprep.subr.mxu0 0.0
  %837 = vmatpush1.msra.mxu0 %v207
  %838 = vmatprep.subr.mxu0 0.0
  %839 = vmatpush1.msra.mxu0 0.0
  %840 = vmatprep.subr.mxu0 0.0
  %841 = vmatpush1.msra.mxu0 0.0
  %842 = vmatprep.subr.mxu0 0.0
  %843 = vmatpush1.msra.mxu0 0.0
  %844 = vmatprep.subr.mxu0 0.0
  %845 = vmatpush1.msra.mxu0 0.0
  %846 = vmatprep.subr.mxu0 0.0
  %847 = vmatpush1.msra.mxu0 0.0
  %848 = vmatprep.subr.mxu0 0.0
  %849 = vmatpush1.msra.mxu0 0.0
  %850 = vmatprep.subr.mxu0 0.0
  %851 = vmatpush1.msra.mxu0 0.0
  %852 = vmatprep.subr.mxu0 0.0
  %853 = vmatpush1.msra.mxu0 0.0
  %854 = vmatprep.subr.mxu0 0.0
  %855 = vmatpush1.msra.mxu0 0.0
  %856 = vmatprep.subr.mxu0 0.0
  %857 = vmatpush1.msra.mxu0 0.0
  %858 = vmatprep.subr.mxu0 0.0
  %859 = vmatpush1.msra.mxu0 0.0
  %860 = vmatprep.subr.mxu0 0.0
  %861 = vmatpush1.msra.mxu0 0.0
  %862 = vmatprep.subr.mxu0 0.0
  %863 = vmatpush1.msra.mxu0 0.0
  %864 = vmatprep.subr.mxu0 0.0
  %865 = vmatpush1.msra.mxu0 0.0
  %866 = vmatprep.subr.mxu0 0.0
  %867 = vmatpush1.msra.mxu0 0.0
  %868 = vmatprep.subr.mxu0 0.0
  %869 = vmatpush1.msra.mxu0 0.0
  %870 = vmatprep.subr.mxu0 0.0
  %871 = vmatpush1.msra.mxu0 0.0
  %872 = vmatprep.subr.mxu0 0.0
  %873 = vmatpush1.msra.mxu0 0.0
  %874 = vmatprep.subr.mxu0 0.0
  %875 = vmatpush1.msra.mxu0 0.0
  %876 = vmatprep.subr.mxu0 0.0
  %877 = vmatpush1.msra.mxu0 0.0
  %878 = vmatprep.subr.mxu0 0.0
  %879 = vmatpush1.msra.mxu0 0.0
  %880 = vmatprep.subr.mxu0 0.0
  %881 = vmatpush1.msra.mxu0 0.0
  %882 = vmatprep.subr.mxu0 0.0
  %883 = vmatpush1.msra.mxu0 0.0
  %884 = vmatprep.subr.mxu0 0.0
  %885 = vmatpush1.msra.mxu0 0.0
  %886 = vmatprep.subr.mxu0 0.0
  %887 = vmatpush1.msra.mxu0 0.0
  %888 = vmatprep.subr.mxu0 0.0
  %889 = vmatpush1.msra.mxu0 0.0
  %890 = vmatprep.subr.mxu0 0.0
  %891 = vmatpush1.msra.mxu0 0.0
  %892 = vmatprep.subr.mxu0 0.0
  %893 = vmatpush1.msra.mxu0 0.0
  %894 = vmatprep.mubr.f32.mxu0 0.0
  %895 = vmatmul.mubr.f32.gmra.mrb[0].mxu0 %v828
  %v896 = vpop.f32.mrb[0].mxu0
  %v897 = vadd.f32 %v213, %v896
  %v898 = vpop.f32.mrb[0].mxu0
  %899 = vdwg.mxu0
  %v900 = vld [vmem:[#allocation2 + $0x30] sm:$0xff]
  %v901 = vadd.f32 %v900, %v897
  %v902 = vxor.u32 %v901, 2147483648
  %v903 = vmul.f32 %v902, 1.442695
  %v904 = vpow.pop %v903
  %v905 = vadd.f32 %v904, 1.0
  %v906 = vrcp.pop %v905
  %v907 = vmul.f32 1.0, %v906
  %909 = vrot.lane.b32.xlu0 %v897, 64
  %v910 = vpop.permute.xlu0 %909
  %v912 = vmul.f32 %v907, %v910
  %914 = vrot.lane.b32.xlu0 %v912, 64
  %v915 = vpop.permute.xlu0 %914
  %v917 = vadd.f32 %v900, %v915
  %v918 = vtanh.pop %v917
  %v919 = vsub.f32 1.0, %v907
  %921 = vrot.lane.b32.xlu0 %v918, 96
  %v922 = vpop.permute.xlu0 %921
  %v924 = vmul.f32 %v919, %v922
  %v925 = vmul.f32 %v907, %v824
  %v926 = vadd.f32 %v924, %v925
  %928 = vrot.lane.b32.xlu0 %v926, 96
  %v929 = vpop.permute.xlu0 %928
  %v930 = vsel %vm65, %v929, 0
  %932 = vmatprep.subr.mxu0 0.0
  %933 = vmatpush1.msra.mxu0 %v204
  %934 = vmatprep.subr.mxu0 0.0
  %935 = vmatpush1.msra.mxu0 %v205
  %936 = vmatprep.subr.mxu0 0.0
  %937 = vmatpush1.msra.mxu0 %v206
  %938 = vmatprep.subr.mxu0 0.0
  %939 = vmatpush1.msra.mxu0 %v207
  %940 = vmatprep.subr.mxu0 0.0
  %941 = vmatpush1.msra.mxu0 0.0
  %942 = vmatprep.subr.mxu0 0.0
  %943 = vmatpush1.msra.mxu0 0.0
  %944 = vmatprep.subr.mxu0 0.0
  %945 = vmatpush1.msra.mxu0 0.0
  %946 = vmatprep.subr.mxu0 0.0
  %947 = vmatpush1.msra.mxu0 0.0
  %948 = vmatprep.subr.mxu0 0.0
  %949 = vmatpush1.msra.mxu0 0.0
  %950 = vmatprep.subr.mxu0 0.0
  %951 = vmatpush1.msra.mxu0 0.0
  %952 = vmatprep.subr.mxu0 0.0
  %953 = vmatpush1.msra.mxu0 0.0
  %954 = vmatprep.subr.mxu0 0.0
  %955 = vmatpush1.msra.mxu0 0.0
  %956 = vmatprep.subr.mxu0 0.0
  %957 = vmatpush1.msra.mxu0 0.0
  %958 = vmatprep.subr.mxu0 0.0
  %959 = vmatpush1.msra.mxu0 0.0
  %960 = vmatprep.subr.mxu0 0.0
  %961 = vmatpush1.msra.mxu0 0.0
  %962 = vmatprep.subr.mxu0 0.0
  %963 = vmatpush1.msra.mxu0 0.0
  %964 = vmatprep.subr.mxu0 0.0
  %965 = vmatpush1.msra.mxu0 0.0
  %966 = vmatprep.subr.mxu0 0.0
  %967 = vmatpush1.msra.mxu0 0.0
  %968 = vmatprep.subr.mxu0 0.0
  %969 = vmatpush1.msra.mxu0 0.0
  %970 = vmatprep.subr.mxu0 0.0
  %971 = vmatpush1.msra.mxu0 0.0
  %972 = vmatprep.subr.mxu0 0.0
  %973 = vmatpush1.msra.mxu0 0.0
  %974 = vmatprep.subr.mxu0 0.0
  %975 = vmatpush1.msra.mxu0 0.0
  %976 = vmatprep.subr.mxu0 0.0
  %977 = vmatpush1.msra.mxu0 0.0
  %978 = vmatprep.subr.mxu0 0.0
  %979 = vmatpush1.msra.mxu0 0.0
  %980 = vmatprep.subr.mxu0 0.0
  %981 = vmatpush1.msra.mxu0 0.0
  %982 = vmatprep.subr.mxu0 0.0
  %983 = vmatpush1.msra.mxu0 0.0
  %984 = vmatprep.subr.mxu0 0.0
  %985 = vmatpush1.msra.mxu0 0.0
  %986 = vmatprep.subr.mxu0 0.0
  %987 = vmatpush1.msra.mxu0 0.0
  %988 = vmatprep.subr.mxu0 0.0
  %989 = vmatpush1.msra.mxu0 0.0
  %990 = vmatprep.subr.mxu0 0.0
  %991 = vmatpush1.msra.mxu0 0.0
  %992 = vmatprep.subr.mxu0 0.0
  %993 = vmatpush1.msra.mxu0 0.0
  %994 = vmatprep.subr.mxu0 0.0
  %995 = vmatpush1.msra.mxu0 0.0
  %996 = vmatprep.mubr.f32.mxu0 0.0
  %997 = vmatmul.mubr.f32.gmra.mrb[0].mxu0 %v930
  %v998 = vpop.f32.mrb[0].mxu0
  %v999 = vadd.f32 %v213, %v998
  %v1000 = vpop.f32.mrb[0].mxu0
  %1001 = vdwg.mxu0
  %v1002 = vld [vmem:[#allocation2 + $0x38] sm:$0xff]
  %v1003 = vadd.f32 %v1002, %v999
  %v1004 = vxor.u32 %v1003, 2147483648
  %v1005 = vmul.f32 %v1004, 1.442695
  %v1006 = vpow.pop %v1005
  %v1007 = vadd.f32 %v1006, 1.0
  %v1008 = vrcp.pop %v1007
  %v1009 = vmul.f32 1.0, %v1008
  %1011 = vrot.lane.b32.xlu0 %v999, 64
  %v1012 = vpop.permute.xlu0 %1011
  %v1014 = vmul.f32 %v1009, %v1012
  %1016 = vrot.lane.b32.xlu0 %v1014, 64
  %v1017 = vpop.permute.xlu0 %1016
  %v1019 = vadd.f32 %v1002, %v1017
  %v1020 = vtanh.pop %v1019
  %v1021 = vsub.f32 1.0, %v1009
  %1023 = vrot.lane.b32.xlu0 %v1020, 96
  %v1024 = vpop.permute.xlu0 %1023
  %v1026 = vmul.f32 %v1021, %v1024
  %v1027 = vmul.f32 %v1009, %v926
  %v1028 = vadd.f32 %v1026, %v1027
  %v1029 = vld [vmem:[%s1] sm:$0xff]
  %v1030 = vld [vmem:[%s1 + $0x8] sm:$0xff]
  %v1031 = vld [vmem:[%s1 + $0x10] sm:$0xff]
  %v1032 = vld [vmem:[%s1 + $0x18] sm:$0xff]
  %v1033 = vld [vmem:[%s1 + $0x20] sm:$0xff]
  %v1034 = vld [vmem:[%s1 + $0x28] sm:$0xff]
  %v1035 = vld [vmem:[%s1 + $0x30] sm:$0xff]
  %v1036 = vld [vmem:[%s1 + $0x38] sm:$0xff]
  %v1037 = vld [vmem:[%s6] sm:$0xff]
  %v1038 = vld [vmem:[%s6 + $0x8] sm:$0xff]
  %v1039 = vld [vmem:[%s6 + $0x10] sm:$0xff]
  %v1040 = vld [vmem:[%s6 + $0x18] sm:$0xff]
  %v1041 = vld [vmem:[%s9] sm:$0x1]
  %v1043 = vlaneseq
  %v1044 = vshrl.u32 %v1043, 7
  %v1045 = vsub.s32 0, %v1044
  %v1046 = vrot.slane %v1041, %v1045
  %v1049 = vsel %vm65, %v1029, 0
  %v1052 = vsel %vm65, %v1030, 0
  %v1055 = vsel %vm65, %v1031, 0
  %v1058 = vsel %vm65, %v1032, 0
  %v1061 = vsel %vm65, %v1033, 0
  %v1064 = vsel %vm65, %v1034, 0
  %v1067 = vsel %vm65, %v1035, 0
  %v1070 = vsel %vm65, %v1036, 0
  %1072 = vmatprep.subr.mxu0 0.0
  %1073 = vmatpush1.msra.mxu0 %v1037
  %1074 = vmatprep.subr.mxu0 0.0
  %1075 = vmatpush1.msra.mxu0 %v1038
  %1076 = vmatprep.subr.mxu0 0.0
  %1077 = vmatpush1.msra.mxu0 %v1039
  %1078 = vmatprep.subr.mxu0 0.0
  %1079 = vmatpush1.msra.mxu0 %v1040
  %1080 = vmatprep.subr.mxu0 0.0
  %1081 = vmatpush1.msra.mxu0 0.0
  %1082 = vmatprep.subr.mxu0 0.0
  %1083 = vmatpush1.msra.mxu0 0.0
  %1084 = vmatprep.subr.mxu0 0.0
  %1085 = vmatpush1.msra.mxu0 0.0
  %1086 = vmatprep.subr.mxu0 0.0
  %1087 = vmatpush1.msra.mxu0 0.0
  %1088 = vmatprep.subr.mxu0 0.0
  %1089 = vmatpush1.msra.mxu0 0.0
  %1090 = vmatprep.subr.mxu0 0.0
  %1091 = vmatpush1.msra.mxu0 0.0
  %1092 = vmatprep.subr.mxu0 0.0
  %1093 = vmatpush1.msra.mxu0 0.0
  %1094 = vmatprep.subr.mxu0 0.0
  %1095 = vmatpush1.msra.mxu0 0.0
  %1096 = vmatprep.subr.mxu0 0.0
  %1097 = vmatpush1.msra.mxu0 0.0
  %1098 = vmatprep.subr.mxu0 0.0
  %1099 = vmatpush1.msra.mxu0 0.0
  %1100 = vmatprep.subr.mxu0 0.0
  %1101 = vmatpush1.msra.mxu0 0.0
  %1102 = vmatprep.subr.mxu0 0.0
  %1103 = vmatpush1.msra.mxu0 0.0
  %1104 = vmatprep.subr.mxu0 0.0
  %1105 = vmatpush1.msra.mxu0 0.0
  %1106 = vmatprep.subr.mxu0 0.0
  %1107 = vmatpush1.msra.mxu0 0.0
  %1108 = vmatprep.subr.mxu0 0.0
  %1109 = vmatpush1.msra.mxu0 0.0
  %1110 = vmatprep.subr.mxu0 0.0
  %1111 = vmatpush1.msra.mxu0 0.0
  %1112 = vmatprep.subr.mxu0 0.0
  %1113 = vmatpush1.msra.mxu0 0.0
  %1114 = vmatprep.subr.mxu0 0.0
  %1115 = vmatpush1.msra.mxu0 0.0
  %1116 = vmatprep.subr.mxu0 0.0
  %1117 = vmatpush1.msra.mxu0 0.0
  %1118 = vmatprep.subr.mxu0 0.0
  %1119 = vmatpush1.msra.mxu0 0.0
  %1120 = vmatprep.subr.mxu0 0.0
  %1121 = vmatpush1.msra.mxu0 0.0
  %1122 = vmatprep.subr.mxu0 0.0
  %1123 = vmatpush1.msra.mxu0 0.0
  %1124 = vmatprep.subr.mxu0 0.0
  %1125 = vmatpush1.msra.mxu0 0.0
  %1126 = vmatprep.subr.mxu0 0.0
  %1127 = vmatpush1.msra.mxu0 0.0
  %1128 = vmatprep.subr.mxu0 0.0
  %1129 = vmatpush1.msra.mxu0 0.0
  %1130 = vmatprep.subr.mxu0 0.0
  %1131 = vmatpush1.msra.mxu0 0.0
  %1132 = vmatprep.subr.mxu0 0.0
  %1133 = vmatpush1.msra.mxu0 0.0
  %1134 = vmatprep.subr.mxu0 0.0
  %1135 = vmatpush1.msra.mxu0 0.0
  %1136 = vmatprep.mubr.f32.mxu0 0.0
  %1137 = vmatmul.mubr.f32.gmra.mrb[0].mxu0 %v1049
  %v1138 = vpop.f32.mrb[0].mxu0
  %v1139 = vadd.f32 %v1046, %v1138
  %v1140 = vpop.f32.mrb[0].mxu0
  %1141 = vmatprep.mubr.f32.mxu0 0.0
  %1142 = vmatmul.mubr.f32.gmra.mrb[0].mxu0 %v1052
  %v1143 = vpop.f32.mrb[0].mxu0
  %v1144 = vadd.f32 %v1046, %v1143
  %v1145 = vpop.f32.mrb[0].mxu0
  %1146 = vmatprep.mubr.f32.mxu0 0.0
  %1147 = vmatmul.mubr.f32.gmra.mrb[0].mxu0 %v1055
  %v1148 = vpop.f32.mrb[0].mxu0
  %v1149 = vadd.f32 %v1046, %v1148
  %v1150 = vpop.f32.mrb[0].mxu0
  %1151 = vmatprep.mubr.f32.mxu0 0.0
  %1152 = vmatmul.mubr.f32.gmra.mrb[0].mxu0 %v1058
  %v1153 = vpop.f32.mrb[0].mxu0
  %v1154 = vadd.f32 %v1046, %v1153
  %v1155 = vpop.f32.mrb[0].mxu0
  %1156 = vmatprep.mubr.f32.mxu0 0.0
  %1157 = vmatmul.mubr.f32.gmra.mrb[0].mxu0 %v1061
  %v1158 = vpop.f32.mrb[0].mxu0
  %v1159 = vadd.f32 %v1046, %v1158
  %v1160 = vpop.f32.mrb[0].mxu0
  %1161 = vmatprep.mubr.f32.mxu0 0.0
  %1162 = vmatmul.mubr.f32.gmra.mrb[0].mxu0 %v1064
  %v1163 = vpop.f32.mrb[0].mxu0
  %v1164 = vadd.f32 %v1046, %v1163
  %v1165 = vpop.f32.mrb[0].mxu0
  %1166 = vmatprep.mubr.f32.mxu0 0.0
  %1167 = vmatmul.mubr.f32.gmra.mrb[0].mxu0 %v1067
  %v1168 = vpop.f32.mrb[0].mxu0
  %v1169 = vadd.f32 %v1046, %v1168
  %v1170 = vpop.f32.mrb[0].mxu0
  %1171 = vmatprep.mubr.f32.mxu0 0.0
  %1172 = vmatmul.mubr.f32.gmra.mrb[0].mxu0 %v1070
  %v1173 = vpop.f32.mrb[0].mxu0
  %v1174 = vadd.f32 %v1046, %v1173
  %v1175 = vpop.f32.mrb[0].mxu0
  %1176 = vdwg.mxu0
  %1177 = vst.msk [vmem:[#allocation3] sm:$0xff] %vm195, %v1139
  %1178 = vst.msk [vmem:[#allocation3 + $0x8] sm:$0xff] %vm195, %v1144
  %1179 = vst.msk [vmem:[#allocation3 + $0x10] sm:$0xff] %vm195, %v1149
  %1180 = vst.msk [vmem:[#allocation3 + $0x18] sm:$0xff] %vm195, %v1154
  %1181 = vst.msk [vmem:[#allocation3 + $0x20] sm:$0xff] %vm195, %v1159
  %1182 = vst.msk [vmem:[#allocation3 + $0x28] sm:$0xff] %vm195, %v1164
  %1183 = vst.msk [vmem:[#allocation3 + $0x30] sm:$0xff] %vm195, %v1169
  %1184 = vst.msk [vmem:[#allocation3 + $0x38] sm:$0xff] %vm195, %v1174
  %v1185 = vld [vmem:[%s7] sm:$0xff]
  %v1186 = vld [vmem:[%s7 + $0x8] sm:$0xff]
  %v1187 = vld [vmem:[%s7 + $0x10] sm:$0xff]
  %v1188 = vld [vmem:[%s7 + $0x18] sm:$0xff]
  %1190 = vrot.lane.b32.xlu0 %v1028, 96
  %v1191 = vpop.permute.xlu0 %1190
  %v1192 = vsel %vm65, %v1191, 0
  %1194 = vmatprep.subr.mxu0 0.0
  %1195 = vmatpush1.msra.mxu0 %v1185
  %1196 = vmatprep.subr.mxu0 0.0
  %1197 = vmatpush1.msra.mxu0 %v1186
  %1198 = vmatprep.subr.mxu0 0.0
  %1199 = vmatpush1.msra.mxu0 %v1187
  %1200 = vmatprep.subr.mxu0 0.0
  %1201 = vmatpush1.msra.mxu0 %v1188
  %1202 = vmatprep.subr.mxu0 0.0
  %1203 = vmatpush1.msra.mxu0 0.0
  %1204 = vmatprep.subr.mxu0 0.0
  %1205 = vmatpush1.msra.mxu0 0.0
  %1206 = vmatprep.subr.mxu0 0.0
  %1207 = vmatpush1.msra.mxu0 0.0
  %1208 = vmatprep.subr.mxu0 0.0
  %1209 = vmatpush1.msra.mxu0 0.0
  %1210 = vmatprep.subr.mxu0 0.0
  %1211 = vmatpush1.msra.mxu0 0.0
  %1212 = vmatprep.subr.mxu0 0.0
  %1213 = vmatpush1.msra.mxu0 0.0
  %1214 = vmatprep.subr.mxu0 0.0
  %1215 = vmatpush1.msra.mxu0 0.0
  %1216 = vmatprep.subr.mxu0 0.0
  %1217 = vmatpush1.msra.mxu0 0.0
  %1218 = vmatprep.subr.mxu0 0.0
  %1219 = vmatpush1.msra.mxu0 0.0
  %1220 = vmatprep.subr.mxu0 0.0
  %1221 = vmatpush1.msra.mxu0 0.0
  %1222 = vmatprep.subr.mxu0 0.0
  %1223 = vmatpush1.msra.mxu0 0.0
  %1224 = vmatprep.subr.mxu0 0.0
  %1225 = vmatpush1.msra.mxu0 0.0
  %1226 = vmatprep.subr.mxu0 0.0
  %1227 = vmatpush1.msra.mxu0 0.0
  %1228 = vmatprep.subr.mxu0 0.0
  %1229 = vmatpush1.msra.mxu0 0.0
  %1230 = vmatprep.subr.mxu0 0.0
  %1231 = vmatpush1.msra.mxu0 0.0
  %1232 = vmatprep.subr.mxu0 0.0
  %1233 = vmatpush1.msra.mxu0 0.0
  %1234 = vmatprep.subr.mxu0 0.0
  %1235 = vmatpush1.msra.mxu0 0.0
  %1236 = vmatprep.subr.mxu0 0.0
  %1237 = vmatpush1.msra.mxu0 0.0
  %1238 = vmatprep.subr.mxu0 0.0
  %1239 = vmatpush1.msra.mxu0 0.0
  %1240 = vmatprep.subr.mxu0 0.0
  %1241 = vmatpush1.msra.mxu0 0.0
  %1242 = vmatprep.subr.mxu0 0.0
  %1243 = vmatpush1.msra.mxu0 0.0
  %1244 = vmatprep.subr.mxu0 0.0
  %1245 = vmatpush1.msra.mxu0 0.0
  %1246 = vmatprep.subr.mxu0 0.0
  %1247 = vmatpush1.msra.mxu0 0.0
  %1248 = vmatprep.subr.mxu0 0.0
  %1249 = vmatpush1.msra.mxu0 0.0
  %1250 = vmatprep.subr.mxu0 0.0
  %1251 = vmatpush1.msra.mxu0 0.0
  %1252 = vmatprep.subr.mxu0 0.0
  %1253 = vmatpush1.msra.mxu0 0.0
  %1254 = vmatprep.subr.mxu0 0.0
  %1255 = vmatpush1.msra.mxu0 0.0
  %1256 = vmatprep.subr.mxu0 0.0
  %1257 = vmatpush1.msra.mxu0 0.0
  %1258 = vmatprep.mubr.f32.mxu0 0.0
  %1259 = vmatmul.mubr.f32.gmra.mrb[0].mxu0 %v1192
  %v1260 = vpop.f32.mrb[0].mxu0
  %v1261 = vadd.f32 0.0, %v1260
  %v1262 = vpop.f32.mrb[0].mxu0
  %1263 = vdwg.mxu0
  %v1264 = vld [vmem:[%s8] sm:$0xff]
  %v1265 = vld [vmem:[%s8 + $0x8] sm:$0xff]
  %v1266 = vld [vmem:[%s8 + $0x10] sm:$0xff]
  %v1267 = vld [vmem:[%s8 + $0x18] sm:$0xff]
  %v1268 = vld [vmem:[%s10] sm:$0x1]
  %v1270 = vlaneseq
  %v1271 = vshrl.u32 %v1270, 7
  %v1272 = vsub.s32 0, %v1271
  %v1273 = vrot.slane %v1268, %v1272
  %1275 = vmatprep.subr.mxu0 0.0
  %1276 = vmatpush1.msra.mxu0 %v1264
  %1277 = vmatprep.subr.mxu0 0.0
  %1278 = vmatpush1.msra.mxu0 %v1265
  %1279 = vmatprep.subr.mxu0 0.0
  %1280 = vmatpush1.msra.mxu0 %v1266
  %1281 = vmatprep.subr.mxu0 0.0
  %1282 = vmatpush1.msra.mxu0 %v1267
  %1283 = vmatprep.subr.mxu0 0.0
  %1284 = vmatpush1.msra.mxu0 0.0
  %1285 = vmatprep.subr.mxu0 0.0
  %1286 = vmatpush1.msra.mxu0 0.0
  %1287 = vmatprep.subr.mxu0 0.0
  %1288 = vmatpush1.msra.mxu0 0.0
  %1289 = vmatprep.subr.mxu0 0.0
  %1290 = vmatpush1.msra.mxu0 0.0
  %1291 = vmatprep.subr.mxu0 0.0
  %1292 = vmatpush1.msra.mxu0 0.0
  %1293 = vmatprep.subr.mxu0 0.0
  %1294 = vmatpush1.msra.mxu0 0.0
  %1295 = vmatprep.subr.mxu0 0.0
  %1296 = vmatpush1.msra.mxu0 0.0
  %1297 = vmatprep.subr.mxu0 0.0
  %1298 = vmatpush1.msra.mxu0 0.0
  %1299 = vmatprep.subr.mxu0 0.0
  %1300 = vmatpush1.msra.mxu0 0.0
  %1301 = vmatprep.subr.mxu0 0.0
  %1302 = vmatpush1.msra.mxu0 0.0
  %1303 = vmatprep.subr.mxu0 0.0
  %1304 = vmatpush1.msra.mxu0 0.0
  %1305 = vmatprep.subr.mxu0 0.0
  %1306 = vmatpush1.msra.mxu0 0.0
  %1307 = vmatprep.subr.mxu0 0.0
  %1308 = vmatpush1.msra.mxu0 0.0
  %1309 = vmatprep.subr.mxu0 0.0
  %1310 = vmatpush1.msra.mxu0 0.0
  %1311 = vmatprep.subr.mxu0 0.0
  %1312 = vmatpush1.msra.mxu0 0.0
  %1313 = vmatprep.subr.mxu0 0.0
  %1314 = vmatpush1.msra.mxu0 0.0
  %1315 = vmatprep.subr.mxu0 0.0
  %1316 = vmatpush1.msra.mxu0 0.0
  %1317 = vmatprep.subr.mxu0 0.0
  %1318 = vmatpush1.msra.mxu0 0.0
  %1319 = vmatprep.subr.mxu0 0.0
  %1320 = vmatpush1.msra.mxu0 0.0
  %1321 = vmatprep.subr.mxu0 0.0
  %1322 = vmatpush1.msra.mxu0 0.0
  %1323 = vmatprep.subr.mxu0 0.0
  %1324 = vmatpush1.msra.mxu0 0.0
  %1325 = vmatprep.subr.mxu0 0.0
  %1326 = vmatpush1.msra.mxu0 0.0
  %1327 = vmatprep.subr.mxu0 0.0
  %1328 = vmatpush1.msra.mxu0 0.0
  %1329 = vmatprep.subr.mxu0 0.0
  %1330 = vmatpush1.msra.mxu0 0.0
  %1331 = vmatprep.subr.mxu0 0.0
  %1332 = vmatpush1.msra.mxu0 0.0
  %1333 = vmatprep.subr.mxu0 0.0
  %1334 = vmatpush1.msra.mxu0 0.0
  %1335 = vmatprep.subr.mxu0 0.0
  %1336 = vmatpush1.msra.mxu0 0.0
  %1337 = vmatprep.subr.mxu0 0.0
  %1338 = vmatpush1.msra.mxu0 0.0
  %1339 = vmatprep.mubr.f32.mxu0 0.0
  %1340 = vmatmul.mubr.f32.gmra.mrb[0].mxu0 %v1192
  %v1341 = vpop.f32.mrb[0].mxu0
  %v1342 = vadd.f32 %v1273, %v1341
  %v1343 = vpop.f32.mrb[0].mxu0
  %1344 = vdwg.mxu0
  %v1345 = vld [vmem:[#allocation3] sm:$0xff]
  %v1346 = vadd.f32 %v1345, %v1261
  %v1347 = vadd.f32 %v1346, %v1342
  %v1348 = vxor.u32 %v1347, 2147483648
  %v1349 = vmul.f32 %v1348, 1.442695
  %v1350 = vpow.pop %v1349
  %v1351 = vadd.f32 %v1350, 1.0
  %v1352 = vrcp.pop %v1351
  %v1353 = vmul.f32 1.0, %v1352
  %1355 = vrot.lane.b32.xlu0 %v1342, 64
  %v1356 = vpop.permute.xlu0 %1355
  %v1358 = vmul.f32 %v1353, %v1356
  %1360 = vrot.lane.b32.xlu0 %v1358, 64
  %v1361 = vpop.permute.xlu0 %1360
  %v1363 = vadd.f32 %v1346, %v1361
  %v1364 = vtanh.pop %v1363
  %v1365 = vsub.f32 1.0, %v1353
  %1367 = vrot.lane.b32.xlu0 %v1364, 96
  %v1368 = vpop.permute.xlu0 %1367
  %v1370 = vmul.f32 %v1365, %v1368
  %v1371 = vmul.f32 %v1353, %v1028
  %v1372 = vadd.f32 %v1370, %v1371
  %1374 = vrot.lane.b32.xlu0 %v1372, 96
  %v1375 = vpop.permute.xlu0 %1374
  %1377 = vst.msk [vmem:[#allocation4] sm:$0xff] %vm65, %v1375
  %v1378 = vsel %vm65, %v1375, 0
  %1380 = vmatprep.subr.mxu0 0.0
  %1381 = vmatpush1.msra.mxu0 %v1264
  %1382 = vmatprep.subr.mxu0 0.0
  %1383 = vmatpush1.msra.mxu0 %v1265
  %1384 = vmatprep.subr.mxu0 0.0
  %1385 = vmatpush1.msra.mxu0 %v1266
  %1386 = vmatprep.subr.mxu0 0.0
  %1387 = vmatpush1.msra.mxu0 %v1267
  %1388 = vmatprep.subr.mxu0 0.0
  %1389 = vmatpush1.msra.mxu0 0.0
  %1390 = vmatprep.subr.mxu0 0.0
  %1391 = vmatpush1.msra.mxu0 0.0
  %1392 = vmatprep.subr.mxu0 0.0
  %1393 = vmatpush1.msra.mxu0 0.0
  %1394 = vmatprep.subr.mxu0 0.0
  %1395 = vmatpush1.msra.mxu0 0.0
  %1396 = vmatprep.subr.mxu0 0.0
  %1397 = vmatpush1.msra.mxu0 0.0
  %1398 = vmatprep.subr.mxu0 0.0
  %1399 = vmatpush1.msra.mxu0 0.0
  %1400 = vmatprep.subr.mxu0 0.0
  %1401 = vmatpush1.msra.mxu0 0.0
  %1402 = vmatprep.subr.mxu0 0.0
  %1403 = vmatpush1.msra.mxu0 0.0
  %1404 = vmatprep.subr.mxu0 0.0
  %1405 = vmatpush1.msra.mxu0 0.0
  %1406 = vmatprep.subr.mxu0 0.0
  %1407 = vmatpush1.msra.mxu0 0.0
  %1408 = vmatprep.subr.mxu0 0.0
  %1409 = vmatpush1.msra.mxu0 0.0
  %1410 = vmatprep.subr.mxu0 0.0
  %1411 = vmatpush1.msra.mxu0 0.0
  %1412 = vmatprep.subr.mxu0 0.0
  %1413 = vmatpush1.msra.mxu0 0.0
  %1414 = vmatprep.subr.mxu0 0.0
  %1415 = vmatpush1.msra.mxu0 0.0
  %1416 = vmatprep.subr.mxu0 0.0
  %1417 = vmatpush1.msra.mxu0 0.0
  %1418 = vmatprep.subr.mxu0 0.0
  %1419 = vmatpush1.msra.mxu0 0.0
  %1420 = vmatprep.subr.mxu0 0.0
  %1421 = vmatpush1.msra.mxu0 0.0
  %1422 = vmatprep.subr.mxu0 0.0
  %1423 = vmatpush1.msra.mxu0 0.0
  %1424 = vmatprep.subr.mxu0 0.0
  %1425 = vmatpush1.msra.mxu0 0.0
  %1426 = vmatprep.subr.mxu0 0.0
  %1427 = vmatpush1.msra.mxu0 0.0
  %1428 = vmatprep.subr.mxu0 0.0
  %1429 = vmatpush1.msra.mxu0 0.0
  %1430 = vmatprep.subr.mxu0 0.0
  %1431 = vmatpush1.msra.mxu0 0.0
  %1432 = vmatprep.subr.mxu0 0.0
  %1433 = vmatpush1.msra.mxu0 0.0
  %1434 = vmatprep.subr.mxu0 0.0
  %1435 = vmatpush1.msra.mxu0 0.0
  %1436 = vmatprep.subr.mxu0 0.0
  %1437 = vmatpush1.msra.mxu0 0.0
  %1438 = vmatprep.subr.mxu0 0.0
  %1439 = vmatpush1.msra.mxu0 0.0
  %1440 = vmatprep.subr.mxu0 0.0
  %1441 = vmatpush1.msra.mxu0 0.0
  %1442 = vmatprep.subr.mxu0 0.0
  %1443 = vmatpush1.msra.mxu0 0.0
  %1444 = vmatprep.mubr.f32.mxu0 0.0
  %1445 = vmatmul.mubr.f32.gmra.mrb[0].mxu0 %v1378
  %v1446 = vpop.f32.mrb[0].mxu0
  %v1447 = vadd.f32 %v1273, %v1446
  %v1448 = vpop.f32.mrb[0].mxu0
  %1449 = vdwg.mxu0
  %v1450 = vld [vmem:[#allocation3 + $0x8] sm:$0xff]
  %v1451 = vadd.f32 %v1450, %v1261
  %v1452 = vadd.f32 %v1451, %v1447
  %v1453 = vxor.u32 %v1452, 2147483648
  %v1454 = vmul.f32 %v1453, 1.442695
  %v1455 = vpow.pop %v1454
  %v1456 = vadd.f32 %v1455, 1.0
  %v1457 = vrcp.pop %v1456
  %v1458 = vmul.f32 1.0, %v1457
  %1460 = vrot.lane.b32.xlu0 %v1447, 64
  %v1461 = vpop.permute.xlu0 %1460
  %v1463 = vmul.f32 %v1458, %v1461
  %1465 = vrot.lane.b32.xlu0 %v1463, 64
  %v1466 = vpop.permute.xlu0 %1465
  %v1468 = vadd.f32 %v1451, %v1466
  %v1469 = vtanh.pop %v1468
  %v1470 = vsub.f32 1.0, %v1458
  %1472 = vrot.lane.b32.xlu0 %v1469, 96
  %v1473 = vpop.permute.xlu0 %1472
  %v1475 = vmul.f32 %v1470, %v1473
  %v1476 = vmul.f32 %v1458, %v1372
  %v1477 = vadd.f32 %v1475, %v1476
  %1479 = vrot.lane.b32.xlu0 %v1477, 96
  %v1480 = vpop.permute.xlu0 %1479
  %1482 = vst.msk [vmem:[#allocation4 + $0x8] sm:$0xff] %vm65, %v1480
  %v1483 = vsel %vm65, %v1480, 0
  %1485 = vmatprep.subr.mxu0 0.0
  %1486 = vmatpush1.msra.mxu0 %v1264
  %1487 = vmatprep.subr.mxu0 0.0
  %1488 = vmatpush1.msra.mxu0 %v1265
  %1489 = vmatprep.subr.mxu0 0.0
  %1490 = vmatpush1.msra.mxu0 %v1266
  %1491 = vmatprep.subr.mxu0 0.0
  %1492 = vmatpush1.msra.mxu0 %v1267
  %1493 = vmatprep.subr.mxu0 0.0
  %1494 = vmatpush1.msra.mxu0 0.0
  %1495 = vmatprep.subr.mxu0 0.0
  %1496 = vmatpush1.msra.mxu0 0.0
  %1497 = vmatprep.subr.mxu0 0.0
  %1498 = vmatpush1.msra.mxu0 0.0
  %1499 = vmatprep.subr.mxu0 0.0
  %1500 = vmatpush1.msra.mxu0 0.0
  %1501 = vmatprep.subr.mxu0 0.0
  %1502 = vmatpush1.msra.mxu0 0.0
  %1503 = vmatprep.subr.mxu0 0.0
  %1504 = vmatpush1.msra.mxu0 0.0
  %1505 = vmatprep.subr.mxu0 0.0
  %1506 = vmatpush1.msra.mxu0 0.0
  %1507 = vmatprep.subr.mxu0 0.0
  %1508 = vmatpush1.msra.mxu0 0.0
  %1509 = vmatprep.subr.mxu0 0.0
  %1510 = vmatpush1.msra.mxu0 0.0
  %1511 = vmatprep.subr.mxu0 0.0
  %1512 = vmatpush1.msra.mxu0 0.0
  %1513 = vmatprep.subr.mxu0 0.0
  %1514 = vmatpush1.msra.mxu0 0.0
  %1515 = vmatprep.subr.mxu0 0.0
  %1516 = vmatpush1.msra.mxu0 0.0
  %1517 = vmatprep.subr.mxu0 0.0
  %1518 = vmatpush1.msra.mxu0 0.0
  %1519 = vmatprep.subr.mxu0 0.0
  %1520 = vmatpush1.msra.mxu0 0.0
  %1521 = vmatprep.subr.mxu0 0.0
  %1522 = vmatpush1.msra.mxu0 0.0
  %1523 = vmatprep.subr.mxu0 0.0
  %1524 = vmatpush1.msra.mxu0 0.0
  %1525 = vmatprep.subr.mxu0 0.0
  %1526 = vmatpush1.msra.mxu0 0.0
  %1527 = vmatprep.subr.mxu0 0.0
  %1528 = vmatpush1.msra.mxu0 0.0
  %1529 = vmatprep.subr.mxu0 0.0
  %1530 = vmatpush1.msra.mxu0 0.0
  %1531 = vmatprep.subr.mxu0 0.0
  %1532 = vmatpush1.msra.mxu0 0.0
  %1533 = vmatprep.subr.mxu0 0.0
  %1534 = vmatpush1.msra.mxu0 0.0
  %1535 = vmatprep.subr.mxu0 0.0
  %1536 = vmatpush1.msra.mxu0 0.0
  %1537 = vmatprep.subr.mxu0 0.0
  %1538 = vmatpush1.msra.mxu0 0.0
  %1539 = vmatprep.subr.mxu0 0.0
  %1540 = vmatpush1.msra.mxu0 0.0
  %1541 = vmatprep.subr.mxu0 0.0
  %1542 = vmatpush1.msra.mxu0 0.0
  %1543 = vmatprep.subr.mxu0 0.0
  %1544 = vmatpush1.msra.mxu0 0.0
  %1545 = vmatprep.subr.mxu0 0.0
  %1546 = vmatpush1.msra.mxu0 0.0
  %1547 = vmatprep.subr.mxu0 0.0
  %1548 = vmatpush1.msra.mxu0 0.0
  %1549 = vmatprep.mubr.f32.mxu0 0.0
  %1550 = vmatmul.mubr.f32.gmra.mrb[0].mxu0 %v1483
  %v1551 = vpop.f32.mrb[0].mxu0
  %v1552 = vadd.f32 %v1273, %v1551
  %v1553 = vpop.f32.mrb[0].mxu0
  %1554 = vdwg.mxu0
  %v1555 = vld [vmem:[#allocation3 + $0x10] sm:$0xff]
  %v1556 = vadd.f32 %v1555, %v1261
  %v1557 = vadd.f32 %v1556, %v1552
  %v1558 = vxor.u32 %v1557, 2147483648
  %v1559 = vmul.f32 %v1558, 1.442695
  %v1560 = vpow.pop %v1559
  %v1561 = vadd.f32 %v1560, 1.0
  %v1562 = vrcp.pop %v1561
  %v1563 = vmul.f32 1.0, %v1562
  %1565 = vrot.lane.b32.xlu0 %v1552, 64
  %v1566 = vpop.permute.xlu0 %1565
  %v1568 = vmul.f32 %v1563, %v1566
  %1570 = vrot.lane.b32.xlu0 %v1568, 64
  %v1571 = vpop.permute.xlu0 %1570
  %v1573 = vadd.f32 %v1556, %v1571
  %v1574 = vtanh.pop %v1573
  %v1575 = vsub.f32 1.0, %v1563
  %1577 = vrot.lane.b32.xlu0 %v1574, 96
  %v1578 = vpop.permute.xlu0 %1577
  %v1580 = vmul.f32 %v1575, %v1578
  %v1581 = vmul.f32 %v1563, %v1477
  %v1582 = vadd.f32 %v1580, %v1581
  %1584 = vrot.lane.b32.xlu0 %v1582, 96
  %v1585 = vpop.permute.xlu0 %1584
  %1587 = vst.msk [vmem:[#allocation4 + $0x10] sm:$0xff] %vm65, %v1585
  %v1588 = vsel %vm65, %v1585, 0
  %1590 = vmatprep.subr.mxu0 0.0
  %1591 = vmatpush1.msra.mxu0 %v1264
  %1592 = vmatprep.subr.mxu0 0.0
  %1593 = vmatpush1.msra.mxu0 %v1265
  %1594 = vmatprep.subr.mxu0 0.0
  %1595 = vmatpush1.msra.mxu0 %v1266
  %1596 = vmatprep.subr.mxu0 0.0
  %1597 = vmatpush1.msra.mxu0 %v1267
  %1598 = vmatprep.subr.mxu0 0.0
  %1599 = vmatpush1.msra.mxu0 0.0
  %1600 = vmatprep.subr.mxu0 0.0
  %1601 = vmatpush1.msra.mxu0 0.0
  %1602 = vmatprep.subr.mxu0 0.0
  %1603 = vmatpush1.msra.mxu0 0.0
  %1604 = vmatprep.subr.mxu0 0.0
  %1605 = vmatpush1.msra.mxu0 0.0
  %1606 = vmatprep.subr.mxu0 0.0
  %1607 = vmatpush1.msra.mxu0 0.0
  %1608 = vmatprep.subr.mxu0 0.0
  %1609 = vmatpush1.msra.mxu0 0.0
  %1610 = vmatprep.subr.mxu0 0.0
  %1611 = vmatpush1.msra.mxu0 0.0
  %1612 = vmatprep.subr.mxu0 0.0
  %1613 = vmatpush1.msra.mxu0 0.0
  %1614 = vmatprep.subr.mxu0 0.0
  %1615 = vmatpush1.msra.mxu0 0.0
  %1616 = vmatprep.subr.mxu0 0.0
  %1617 = vmatpush1.msra.mxu0 0.0
  %1618 = vmatprep.subr.mxu0 0.0
  %1619 = vmatpush1.msra.mxu0 0.0
  %1620 = vmatprep.subr.mxu0 0.0
  %1621 = vmatpush1.msra.mxu0 0.0
  %1622 = vmatprep.subr.mxu0 0.0
  %1623 = vmatpush1.msra.mxu0 0.0
  %1624 = vmatprep.subr.mxu0 0.0
  %1625 = vmatpush1.msra.mxu0 0.0
  %1626 = vmatprep.subr.mxu0 0.0
  %1627 = vmatpush1.msra.mxu0 0.0
  %1628 = vmatprep.subr.mxu0 0.0
  %1629 = vmatpush1.msra.mxu0 0.0
  %1630 = vmatprep.subr.mxu0 0.0
  %1631 = vmatpush1.msra.mxu0 0.0
  %1632 = vmatprep.subr.mxu0 0.0
  %1633 = vmatpush1.msra.mxu0 0.0
  %1634 = vmatprep.subr.mxu0 0.0
  %1635 = vmatpush1.msra.mxu0 0.0
  %1636 = vmatprep.subr.mxu0 0.0
  %1637 = vmatpush1.msra.mxu0 0.0
  %1638 = vmatprep.subr.mxu0 0.0
  %1639 = vmatpush1.msra.mxu0 0.0
  %1640 = vmatprep.subr.mxu0 0.0
  %1641 = vmatpush1.msra.mxu0 0.0
  %1642 = vmatprep.subr.mxu0 0.0
  %1643 = vmatpush1.msra.mxu0 0.0
  %1644 = vmatprep.subr.mxu0 0.0
  %1645 = vmatpush1.msra.mxu0 0.0
  %1646 = vmatprep.subr.mxu0 0.0
  %1647 = vmatpush1.msra.mxu0 0.0
  %1648 = vmatprep.subr.mxu0 0.0
  %1649 = vmatpush1.msra.mxu0 0.0
  %1650 = vmatprep.subr.mxu0 0.0
  %1651 = vmatpush1.msra.mxu0 0.0
  %1652 = vmatprep.subr.mxu0 0.0
  %1653 = vmatpush1.msra.mxu0 0.0
  %1654 = vmatprep.mubr.f32.mxu0 0.0
  %1655 = vmatmul.mubr.f32.gmra.mrb[0].mxu0 %v1588
  %v1656 = vpop.f32.mrb[0].mxu0
  %v1657 = vadd.f32 %v1273, %v1656
  %v1658 = vpop.f32.mrb[0].mxu0
  %1659 = vdwg.mxu0
  %v1660 = vld [vmem:[#allocation3 + $0x18] sm:$0xff]
  %v1661 = vadd.f32 %v1660, %v1261
  %v1662 = vadd.f32 %v1661, %v1657
  %v1663 = vxor.u32 %v1662, 2147483648
  %v1664 = vmul.f32 %v1663, 1.442695
  %v1665 = vpow.pop %v1664
  %v1666 = vadd.f32 %v1665, 1.0
  %v1667 = vrcp.pop %v1666
  %v1668 = vmul.f32 1.0, %v1667
  %1670 = vrot.lane.b32.xlu0 %v1657, 64
  %v1671 = vpop.permute.xlu0 %1670
  %v1673 = vmul.f32 %v1668, %v1671
  %1675 = vrot.lane.b32.xlu0 %v1673, 64
  %v1676 = vpop.permute.xlu0 %1675
  %v1678 = vadd.f32 %v1661, %v1676
  %v1679 = vtanh.pop %v1678
  %v1680 = vsub.f32 1.0, %v1668
  %1682 = vrot.lane.b32.xlu0 %v1679, 96
  %v1683 = vpop.permute.xlu0 %1682
  %v1685 = vmul.f32 %v1680, %v1683
  %v1686 = vmul.f32 %v1668, %v1582
  %v1687 = vadd.f32 %v1685, %v1686
  %1689 = vrot.lane.b32.xlu0 %v1687, 96
  %v1690 = vpop.permute.xlu0 %1689
  %1692 = vst.msk [vmem:[#allocation4 + $0x18] sm:$0xff] %vm65, %v1690
  %v1693 = vsel %vm65, %v1690, 0
  %1695 = vmatprep.subr.mxu0 0.0
  %1696 = vmatpush1.msra.mxu0 %v1264
  %1697 = vmatprep.subr.mxu0 0.0
  %1698 = vmatpush1.msra.mxu0 %v1265
  %1699 = vmatprep.subr.mxu0 0.0
  %1700 = vmatpush1.msra.mxu0 %v1266
  %1701 = vmatprep.subr.mxu0 0.0
  %1702 = vmatpush1.msra.mxu0 %v1267
  %1703 = vmatprep.subr.mxu0 0.0
  %1704 = vmatpush1.msra.mxu0 0.0
  %1705 = vmatprep.subr.mxu0 0.0
  %1706 = vmatpush1.msra.mxu0 0.0
  %1707 = vmatprep.subr.mxu0 0.0
  %1708 = vmatpush1.msra.mxu0 0.0
  %1709 = vmatprep.subr.mxu0 0.0
  %1710 = vmatpush1.msra.mxu0 0.0
  %1711 = vmatprep.subr.mxu0 0.0
  %1712 = vmatpush1.msra.mxu0 0.0
  %1713 = vmatprep.subr.mxu0 0.0
  %1714 = vmatpush1.msra.mxu0 0.0
  %1715 = vmatprep.subr.mxu0 0.0
  %1716 = vmatpush1.msra.mxu0 0.0
  %1717 = vmatprep.subr.mxu0 0.0
  %1718 = vmatpush1.msra.mxu0 0.0
  %1719 = vmatprep.subr.mxu0 0.0
  %1720 = vmatpush1.msra.mxu0 0.0
  %1721 = vmatprep.subr.mxu0 0.0
  %1722 = vmatpush1.msra.mxu0 0.0
  %1723 = vmatprep.subr.mxu0 0.0
  %1724 = vmatpush1.msra.mxu0 0.0
  %1725 = vmatprep.subr.mxu0 0.0
  %1726 = vmatpush1.msra.mxu0 0.0
  %1727 = vmatprep.subr.mxu0 0.0
  %1728 = vmatpush1.msra.mxu0 0.0
  %1729 = vmatprep.subr.mxu0 0.0
  %1730 = vmatpush1.msra.mxu0 0.0
  %1731 = vmatprep.subr.mxu0 0.0
  %1732 = vmatpush1.msra.mxu0 0.0
  %1733 = vmatprep.subr.mxu0 0.0
  %1734 = vmatpush1.msra.mxu0 0.0
  %1735 = vmatprep.subr.mxu0 0.0
  %1736 = vmatpush1.msra.mxu0 0.0
  %1737 = vmatprep.subr.mxu0 0.0
  %1738 = vmatpush1.msra.mxu0 0.0
  %1739 = vmatprep.subr.mxu0 0.0
  %1740 = vmatpush1.msra.mxu0 0.0
  %1741 = vmatprep.subr.mxu0 0.0
  %1742 = vmatpush1.msra.mxu0 0.0
  %1743 = vmatprep.subr.mxu0 0.0
  %1744 = vmatpush1.msra.mxu0 0.0
  %1745 = vmatprep.subr.mxu0 0.0
  %1746 = vmatpush1.msra.mxu0 0.0
  %1747 = vmatprep.subr.mxu0 0.0
  %1748 = vmatpush1.msra.mxu0 0.0
  %1749 = vmatprep.subr.mxu0 0.0
  %1750 = vmatpush1.msra.mxu0 0.0
  %1751 = vmatprep.subr.mxu0 0.0
  %1752 = vmatpush1.msra.mxu0 0.0
  %1753 = vmatprep.subr.mxu0 0.0
  %1754 = vmatpush1.msra.mxu0 0.0
  %1755 = vmatprep.subr.mxu0 0.0
  %1756 = vmatpush1.msra.mxu0 0.0
  %1757 = vmatprep.subr.mxu0 0.0
  %1758 = vmatpush1.msra.mxu0 0.0
  %1759 = vmatprep.mubr.f32.mxu0 0.0
  %1760 = vmatmul.mubr.f32.gmra.mrb[0].mxu0 %v1693
  %v1761 = vpop.f32.mrb[0].mxu0
  %v1762 = vadd.f32 %v1273, %v1761
  %v1763 = vpop.f32.mrb[0].mxu0
  %1764 = vdwg.mxu0
  %v1765 = vld [vmem:[#allocation3 + $0x20] sm:$0xff]
  %v1766 = vadd.f32 %v1765, %v1261
  %v1767 = vadd.f32 %v1766, %v1762
  %v1768 = vxor.u32 %v1767, 2147483648
  %v1769 = vmul.f32 %v1768, 1.442695
  %v1770 = vpow.pop %v1769
  %v1771 = vadd.f32 %v1770, 1.0
  %v1772 = vrcp.pop %v1771
  %v1773 = vmul.f32 1.0, %v1772
  %1775 = vrot.lane.b32.xlu0 %v1762, 64
  %v1776 = vpop.permute.xlu0 %1775
  %v1778 = vmul.f32 %v1773, %v1776
  %1780 = vrot.lane.b32.xlu0 %v1778, 64
  %v1781 = vpop.permute.xlu0 %1780
  %v1783 = vadd.f32 %v1766, %v1781
  %v1784 = vtanh.pop %v1783
  %v1785 = vsub.f32 1.0, %v1773
  %1787 = vrot.lane.b32.xlu0 %v1784, 96
  %v1788 = vpop.permute.xlu0 %1787
  %v1790 = vmul.f32 %v1785, %v1788
  %v1791 = vmul.f32 %v1773, %v1687
  %v1792 = vadd.f32 %v1790, %v1791
  %1794 = vrot.lane.b32.xlu0 %v1792, 96
  %v1795 = vpop.permute.xlu0 %1794
  %1797 = vst.msk [vmem:[#allocation4 + $0x20] sm:$0xff] %vm65, %v1795
  %v1798 = vsel %vm65, %v1795, 0
  %1800 = vmatprep.subr.mxu0 0.0
  %1801 = vmatpush1.msra.mxu0 %v1264
  %1802 = vmatprep.subr.mxu0 0.0
  %1803 = vmatpush1.msra.mxu0 %v1265
  %1804 = vmatprep.subr.mxu0 0.0
  %1805 = vmatpush1.msra.mxu0 %v1266
  %1806 = vmatprep.subr.mxu0 0.0
  %1807 = vmatpush1.msra.mxu0 %v1267
  %1808 = vmatprep.subr.mxu0 0.0
  %1809 = vmatpush1.msra.mxu0 0.0
  %1810 = vmatprep.subr.mxu0 0.0
  %1811 = vmatpush1.msra.mxu0 0.0
  %1812 = vmatprep.subr.mxu0 0.0
  %1813 = vmatpush1.msra.mxu0 0.0
  %1814 = vmatprep.subr.mxu0 0.0
  %1815 = vmatpush1.msra.mxu0 0.0
  %1816 = vmatprep.subr.mxu0 0.0
  %1817 = vmatpush1.msra.mxu0 0.0
  %1818 = vmatprep.subr.mxu0 0.0
  %1819 = vmatpush1.msra.mxu0 0.0
  %1820 = vmatprep.subr.mxu0 0.0
  %1821 = vmatpush1.msra.mxu0 0.0
  %1822 = vmatprep.subr.mxu0 0.0
  %1823 = vmatpush1.msra.mxu0 0.0
  %1824 = vmatprep.subr.mxu0 0.0
  %1825 = vmatpush1.msra.mxu0 0.0
  %1826 = vmatprep.subr.mxu0 0.0
  %1827 = vmatpush1.msra.mxu0 0.0
  %1828 = vmatprep.subr.mxu0 0.0
  %1829 = vmatpush1.msra.mxu0 0.0
  %1830 = vmatprep.subr.mxu0 0.0
  %1831 = vmatpush1.msra.mxu0 0.0
  %1832 = vmatprep.subr.mxu0 0.0
  %1833 = vmatpush1.msra.mxu0 0.0
  %1834 = vmatprep.subr.mxu0 0.0
  %1835 = vmatpush1.msra.mxu0 0.0
  %1836 = vmatprep.subr.mxu0 0.0
  %1837 = vmatpush1.msra.mxu0 0.0
  %1838 = vmatprep.subr.mxu0 0.0
  %1839 = vmatpush1.msra.mxu0 0.0
  %1840 = vmatprep.subr.mxu0 0.0
  %1841 = vmatpush1.msra.mxu0 0.0
  %1842 = vmatprep.subr.mxu0 0.0
  %1843 = vmatpush1.msra.mxu0 0.0
  %1844 = vmatprep.subr.mxu0 0.0
  %1845 = vmatpush1.msra.mxu0 0.0
  %1846 = vmatprep.subr.mxu0 0.0
  %1847 = vmatpush1.msra.mxu0 0.0
  %1848 = vmatprep.subr.mxu0 0.0
  %1849 = vmatpush1.msra.mxu0 0.0
  %1850 = vmatprep.subr.mxu0 0.0
  %1851 = vmatpush1.msra.mxu0 0.0
  %1852 = vmatprep.subr.mxu0 0.0
  %1853 = vmatpush1.msra.mxu0 0.0
  %1854 = vmatprep.subr.mxu0 0.0
  %1855 = vmatpush1.msra.mxu0 0.0
  %1856 = vmatprep.subr.mxu0 0.0
  %1857 = vmatpush1.msra.mxu0 0.0
  %1858 = vmatprep.subr.mxu0 0.0
  %1859 = vmatpush1.msra.mxu0 0.0
  %1860 = vmatprep.subr.mxu0 0.0
  %1861 = vmatpush1.msra.mxu0 0.0
  %1862 = vmatprep.subr.mxu0 0.0
  %1863 = vmatpush1.msra.mxu0 0.0
  %1864 = vmatprep.mubr.f32.mxu0 0.0
  %1865 = vmatmul.mubr.f32.gmra.mrb[0].mxu0 %v1798
  %v1866 = vpop.f32.mrb[0].mxu0
  %v1867 = vadd.f32 %v1273, %v1866
  %v1868 = vpop.f32.mrb[0].mxu0
  %1869 = vdwg.mxu0
  %v1870 = vld [vmem:[#allocation3 + $0x28] sm:$0xff]
  %v1871 = vadd.f32 %v1870, %v1261
  %v1872 = vadd.f32 %v1871, %v1867
  %v1873 = vxor.u32 %v1872, 2147483648
  %v1874 = vmul.f32 %v1873, 1.442695
  %v1875 = vpow.pop %v1874
  %v1876 = vadd.f32 %v1875, 1.0
  %v1877 = vrcp.pop %v1876
  %v1878 = vmul.f32 1.0, %v1877
  %1880 = vrot.lane.b32.xlu0 %v1867, 64
  %v1881 = vpop.permute.xlu0 %1880
  %v1883 = vmul.f32 %v1878, %v1881
  %1885 = vrot.lane.b32.xlu0 %v1883, 64
  %v1886 = vpop.permute.xlu0 %1885
  %v1888 = vadd.f32 %v1871, %v1886
  %v1889 = vtanh.pop %v1888
  %v1890 = vsub.f32 1.0, %v1878
  %1892 = vrot.lane.b32.xlu0 %v1889, 96
  %v1893 = vpop.permute.xlu0 %1892
  %v1895 = vmul.f32 %v1890, %v1893
  %v1896 = vmul.f32 %v1878, %v1792
  %v1897 = vadd.f32 %v1895, %v1896
  %1899 = vrot.lane.b32.xlu0 %v1897, 96
  %v1900 = vpop.permute.xlu0 %1899
  %1902 = vst.msk [vmem:[#allocation4 + $0x28] sm:$0xff] %vm65, %v1900
  %v1903 = vsel %vm65, %v1900, 0
  %1905 = vmatprep.subr.mxu0 0.0
  %1906 = vmatpush1.msra.mxu0 %v1264
  %1907 = vmatprep.subr.mxu0 0.0
  %1908 = vmatpush1.msra.mxu0 %v1265
  %1909 = vmatprep.subr.mxu0 0.0
  %1910 = vmatpush1.msra.mxu0 %v1266
  %1911 = vmatprep.subr.mxu0 0.0
  %1912 = vmatpush1.msra.mxu0 %v1267
  %1913 = vmatprep.subr.mxu0 0.0
  %1914 = vmatpush1.msra.mxu0 0.0
  %1915 = vmatprep.subr.mxu0 0.0
  %1916 = vmatpush1.msra.mxu0 0.0
  %1917 = vmatprep.subr.mxu0 0.0
  %1918 = vmatpush1.msra.mxu0 0.0
  %1919 = vmatprep.subr.mxu0 0.0
  %1920 = vmatpush1.msra.mxu0 0.0
  %1921 = vmatprep.subr.mxu0 0.0
  %1922 = vmatpush1.msra.mxu0 0.0
  %1923 = vmatprep.subr.mxu0 0.0
  %1924 = vmatpush1.msra.mxu0 0.0
  %1925 = vmatprep.subr.mxu0 0.0
  %1926 = vmatpush1.msra.mxu0 0.0
  %1927 = vmatprep.subr.mxu0 0.0
  %1928 = vmatpush1.msra.mxu0 0.0
  %1929 = vmatprep.subr.mxu0 0.0
  %1930 = vmatpush1.msra.mxu0 0.0
  %1931 = vmatprep.subr.mxu0 0.0
  %1932 = vmatpush1.msra.mxu0 0.0
  %1933 = vmatprep.subr.mxu0 0.0
  %1934 = vmatpush1.msra.mxu0 0.0
  %1935 = vmatprep.subr.mxu0 0.0
  %1936 = vmatpush1.msra.mxu0 0.0
  %1937 = vmatprep.subr.mxu0 0.0
  %1938 = vmatpush1.msra.mxu0 0.0
  %1939 = vmatprep.subr.mxu0 0.0
  %1940 = vmatpush1.msra.mxu0 0.0
  %1941 = vmatprep.subr.mxu0 0.0
  %1942 = vmatpush1.msra.mxu0 0.0
  %1943 = vmatprep.subr.mxu0 0.0
  %1944 = vmatpush1.msra.mxu0 0.0
  %1945 = vmatprep.subr.mxu0 0.0
  %1946 = vmatpush1.msra.mxu0 0.0
  %1947 = vmatprep.subr.mxu0 0.0
  %1948 = vmatpush1.msra.mxu0 0.0
  %1949 = vmatprep.subr.mxu0 0.0
  %1950 = vmatpush1.msra.mxu0 0.0
  %1951 = vmatprep.subr.mxu0 0.0
  %1952 = vmatpush1.msra.mxu0 0.0
  %1953 = vmatprep.subr.mxu0 0.0
  %1954 = vmatpush1.msra.mxu0 0.0
  %1955 = vmatprep.subr.mxu0 0.0
  %1956 = vmatpush1.msra.mxu0 0.0
  %1957 = vmatprep.subr.mxu0 0.0
  %1958 = vmatpush1.msra.mxu0 0.0
  %1959 = vmatprep.subr.mxu0 0.0
  %1960 = vmatpush1.msra.mxu0 0.0
  %1961 = vmatprep.subr.mxu0 0.0
  %1962 = vmatpush1.msra.mxu0 0.0
  %1963 = vmatprep.subr.mxu0 0.0
  %1964 = vmatpush1.msra.mxu0 0.0
  %1965 = vmatprep.subr.mxu0 0.0
  %1966 = vmatpush1.msra.mxu0 0.0
  %1967 = vmatprep.subr.mxu0 0.0
  %1968 = vmatpush1.msra.mxu0 0.0
  %1969 = vmatprep.mubr.f32.mxu0 0.0
  %1970 = vmatmul.mubr.f32.gmra.mrb[0].mxu0 %v1903
  %v1971 = vpop.f32.mrb[0].mxu0
  %v1972 = vadd.f32 %v1273, %v1971
  %v1973 = vpop.f32.mrb[0].mxu0
  %1974 = vdwg.mxu0
  %v1975 = vld [vmem:[#allocation3 + $0x30] sm:$0xff]
  %v1976 = vadd.f32 %v1975, %v1261
  %v1977 = vadd.f32 %v1976, %v1972
  %v1978 = vxor.u32 %v1977, 2147483648
  %v1979 = vmul.f32 %v1978, 1.442695
  %v1980 = vpow.pop %v1979
  %v1981 = vadd.f32 %v1980, 1.0
  %v1982 = vrcp.pop %v1981
  %v1983 = vmul.f32 1.0, %v1982
  %1985 = vrot.lane.b32.xlu0 %v1972, 64
  %v1986 = vpop.permute.xlu0 %1985
  %v1988 = vmul.f32 %v1983, %v1986
  %1990 = vrot.lane.b32.xlu0 %v1988, 64
  %v1991 = vpop.permute.xlu0 %1990
  %v1993 = vadd.f32 %v1976, %v1991
  %v1994 = vtanh.pop %v1993
  %v1995 = vsub.f32 1.0, %v1983
  %1997 = vrot.lane.b32.xlu0 %v1994, 96
  %v1998 = vpop.permute.xlu0 %1997
  %v2000 = vmul.f32 %v1995, %v1998
  %v2001 = vmul.f32 %v1983, %v1897
  %v2002 = vadd.f32 %v2000, %v2001
  %2004 = vrot.lane.b32.xlu0 %v2002, 96
  %v2005 = vpop.permute.xlu0 %2004
  %2007 = vst.msk [vmem:[#allocation4 + $0x30] sm:$0xff] %vm65, %v2005
  %v2008 = vsel %vm65, %v2005, 0
  %2010 = vmatprep.subr.mxu0 0.0
  %2011 = vmatpush1.msra.mxu0 %v1264
  %2012 = vmatprep.subr.mxu0 0.0
  %2013 = vmatpush1.msra.mxu0 %v1265
  %2014 = vmatprep.subr.mxu0 0.0
  %2015 = vmatpush1.msra.mxu0 %v1266
  %2016 = vmatprep.subr.mxu0 0.0
  %2017 = vmatpush1.msra.mxu0 %v1267
  %2018 = vmatprep.subr.mxu0 0.0
  %2019 = vmatpush1.msra.mxu0 0.0
  %2020 = vmatprep.subr.mxu0 0.0
  %2021 = vmatpush1.msra.mxu0 0.0
  %2022 = vmatprep.subr.mxu0 0.0
  %2023 = vmatpush1.msra.mxu0 0.0
  %2024 = vmatprep.subr.mxu0 0.0
  %2025 = vmatpush1.msra.mxu0 0.0
  %2026 = vmatprep.subr.mxu0 0.0
  %2027 = vmatpush1.msra.mxu0 0.0
  %2028 = vmatprep.subr.mxu0 0.0
  %2029 = vmatpush1.msra.mxu0 0.0
  %2030 = vmatprep.subr.mxu0 0.0
  %2031 = vmatpush1.msra.mxu0 0.0
  %2032 = vmatprep.subr.mxu0 0.0
  %2033 = vmatpush1.msra.mxu0 0.0
  %2034 = vmatprep.subr.mxu0 0.0
  %2035 = vmatpush1.msra.mxu0 0.0
  %2036 = vmatprep.subr.mxu0 0.0
  %2037 = vmatpush1.msra.mxu0 0.0
  %2038 = vmatprep.subr.mxu0 0.0
  %2039 = vmatpush1.msra.mxu0 0.0
  %2040 = vmatprep.subr.mxu0 0.0
  %2041 = vmatpush1.msra.mxu0 0.0
  %2042 = vmatprep.subr.mxu0 0.0
  %2043 = vmatpush1.msra.mxu0 0.0
  %2044 = vmatprep.subr.mxu0 0.0
  %2045 = vmatpush1.msra.mxu0 0.0
  %2046 = vmatprep.subr.mxu0 0.0
  %2047 = vmatpush1.msra.mxu0 0.0
  %2048 = vmatprep.subr.mxu0 0.0
  %2049 = vmatpush1.msra.mxu0 0.0
  %2050 = vmatprep.subr.mxu0 0.0
  %2051 = vmatpush1.msra.mxu0 0.0
  %2052 = vmatprep.subr.mxu0 0.0
  %2053 = vmatpush1.msra.mxu0 0.0
  %2054 = vmatprep.subr.mxu0 0.0
  %2055 = vmatpush1.msra.mxu0 0.0
  %2056 = vmatprep.subr.mxu0 0.0
  %2057 = vmatpush1.msra.mxu0 0.0
  %2058 = vmatprep.subr.mxu0 0.0
  %2059 = vmatpush1.msra.mxu0 0.0
  %2060 = vmatprep.subr.mxu0 0.0
  %2061 = vmatpush1.msra.mxu0 0.0
  %2062 = vmatprep.subr.mxu0 0.0
  %2063 = vmatpush1.msra.mxu0 0.0
  %2064 = vmatprep.subr.mxu0 0.0
  %2065 = vmatpush1.msra.mxu0 0.0
  %2066 = vmatprep.subr.mxu0 0.0
  %2067 = vmatpush1.msra.mxu0 0.0
  %2068 = vmatprep.subr.mxu0 0.0
  %2069 = vmatpush1.msra.mxu0 0.0
  %2070 = vmatprep.subr.mxu0 0.0
  %2071 = vmatpush1.msra.mxu0 0.0
  %2072 = vmatprep.subr.mxu0 0.0
  %2073 = vmatpush1.msra.mxu0 0.0
  %2074 = vmatprep.mubr.f32.mxu0 0.0
  %2075 = vmatmul.mubr.f32.gmra.mrb[0].mxu0 %v2008
  %v2076 = vpop.f32.mrb[0].mxu0
  %v2077 = vadd.f32 %v1273, %v2076
  %v2078 = vpop.f32.mrb[0].mxu0
  %2079 = vdwg.mxu0
  %v2080 = vld [vmem:[#allocation3 + $0x38] sm:$0xff]
  %v2081 = vadd.f32 %v2080, %v1261
  %v2082 = vadd.f32 %v2081, %v2077
  %v2083 = vxor.u32 %v2082, 2147483648
  %v2084 = vmul.f32 %v2083, 1.442695
  %v2085 = vpow.pop %v2084
  %v2086 = vadd.f32 %v2085, 1.0
  %v2087 = vrcp.pop %v2086
  %v2088 = vmul.f32 1.0, %v2087
  %2090 = vrot.lane.b32.xlu0 %v2077, 64
  %v2091 = vpop.permute.xlu0 %2090
  %v2093 = vmul.f32 %v2088, %v2091
  %2095 = vrot.lane.b32.xlu0 %v2093, 64
  %v2096 = vpop.permute.xlu0 %2095
  %v2098 = vadd.f32 %v2081, %v2096
  %v2099 = vtanh.pop %v2098
  %v2100 = vsub.f32 1.0, %v2088
  %2102 = vrot.lane.b32.xlu0 %v2099, 96
  %v2103 = vpop.permute.xlu0 %2102
  %v2105 = vmul.f32 %v2100, %v2103
  %v2106 = vmul.f32 %v2088, %v2002
  %v2107 = vadd.f32 %v2105, %v2106
  %2109 = vrot.lane.b32.xlu0 %v2107, 96
  %v2110 = vpop.permute.xlu0 %2109
  %2112 = vst.msk [vmem:[#allocation4 + $0x38] sm:$0xff] %vm65, %v2110
  %2113 = vst.msk [vmem:[%s14] sm:$0xff] %vm65, %v2110
  %v2114 = vld [vmem:[#allocation4] sm:$0xff]
  %v2115 = vld [vmem:[#allocation4 + $0x8] sm:$0xff]
  %v2116 = vld [vmem:[#allocation4 + $0x10] sm:$0xff]
  %v2117 = vld [vmem:[#allocation4 + $0x18] sm:$0xff]
  %v2118 = vld [vmem:[#allocation4 + $0x20] sm:$0xff]
  %v2119 = vld [vmem:[#allocation4 + $0x28] sm:$0xff]
  %v2120 = vld [vmem:[#allocation4 + $0x30] sm:$0xff]
  %v2121 = vld [vmem:[#allocation4 + $0x38] sm:$0xff]
  %v2122 = vld [vmem:[%s11] sm:$0xff]
  %v2123 = vld [vmem:[%s11 + $0x8] sm:$0xff]
  %v2124 = vld [vmem:[%s11 + $0x10] sm:$0xff]
  %v2125 = vld [vmem:[%s11 + $0x18] sm:$0xff]
  %v2126 = vld [vmem:[%s12] sm:$0x1]
  %v2128 = vlaneseq
  %v2129 = vshrl.u32 %v2128, 7
  %v2130 = vsub.s32 0, %v2129
  %v2131 = vrot.slane %v2126, %v2130
  %v2134 = vsel %vm65, %v2114, 0
  %v2137 = vsel %vm65, %v2115, 0
  %v2140 = vsel %vm65, %v2116, 0
  %v2143 = vsel %vm65, %v2117, 0
  %v2146 = vsel %vm65, %v2118, 0
  %v2149 = vsel %vm65, %v2119, 0
  %v2152 = vsel %vm65, %v2120, 0
  %v2155 = vsel %vm65, %v2121, 0
  %2157 = vmatprep.subr.mxu0 0.0
  %2158 = vmatpush1.msra.mxu0 %v2122
  %2159 = vmatprep.subr.mxu0 0.0
  %2160 = vmatpush1.msra.mxu0 %v2123
  %2161 = vmatprep.subr.mxu0 0.0
  %2162 = vmatpush1.msra.mxu0 %v2124
  %2163 = vmatprep.subr.mxu0 0.0
  %2164 = vmatpush1.msra.mxu0 %v2125
  %2165 = vmatprep.subr.mxu0 0.0
  %2166 = vmatpush1.msra.mxu0 0.0
  %2167 = vmatprep.subr.mxu0 0.0
  %2168 = vmatpush1.msra.mxu0 0.0
  %2169 = vmatprep.subr.mxu0 0.0
  %2170 = vmatpush1.msra.mxu0 0.0
  %2171 = vmatprep.subr.mxu0 0.0
  %2172 = vmatpush1.msra.mxu0 0.0
  %2173 = vmatprep.subr.mxu0 0.0
  %2174 = vmatpush1.msra.mxu0 0.0
  %2175 = vmatprep.subr.mxu0 0.0
  %2176 = vmatpush1.msra.mxu0 0.0
  %2177 = vmatprep.subr.mxu0 0.0
  %2178 = vmatpush1.msra.mxu0 0.0
  %2179 = vmatprep.subr.mxu0 0.0
  %2180 = vmatpush1.msra.mxu0 0.0
  %2181 = vmatprep.subr.mxu0 0.0
  %2182 = vmatpush1.msra.mxu0 0.0
  %2183 = vmatprep.subr.mxu0 0.0
  %2184 = vmatpush1.msra.mxu0 0.0
  %2185 = vmatprep.subr.mxu0 0.0
  %2186 = vmatpush1.msra.mxu0 0.0
  %2187 = vmatprep.subr.mxu0 0.0
  %2188 = vmatpush1.msra.mxu0 0.0
  %2189 = vmatprep.subr.mxu0 0.0
  %2190 = vmatpush1.msra.mxu0 0.0
  %2191 = vmatprep.subr.mxu0 0.0
  %2192 = vmatpush1.msra.mxu0 0.0
  %2193 = vmatprep.subr.mxu0 0.0
  %2194 = vmatpush1.msra.mxu0 0.0
  %2195 = vmatprep.subr.mxu0 0.0
  %2196 = vmatpush1.msra.mxu0 0.0
  %2197 = vmatprep.subr.mxu0 0.0
  %2198 = vmatpush1.msra.mxu0 0.0
  %2199 = vmatprep.subr.mxu0 0.0
  %2200 = vmatpush1.msra.mxu0 0.0
  %2201 = vmatprep.subr.mxu0 0.0
  %2202 = vmatpush1.msra.mxu0 0.0
  %2203 = vmatprep.subr.mxu0 0.0
  %2204 = vmatpush1.msra.mxu0 0.0
  %2205 = vmatprep.subr.mxu0 0.0
  %2206 = vmatpush1.msra.mxu0 0.0
  %2207 = vmatprep.subr.mxu0 0.0
  %2208 = vmatpush1.msra.mxu0 0.0
  %2209 = vmatprep.subr.mxu0 0.0
  %2210 = vmatpush1.msra.mxu0 0.0
  %2211 = vmatprep.subr.mxu0 0.0
  %2212 = vmatpush1.msra.mxu0 0.0
  %2213 = vmatprep.subr.mxu0 0.0
  %2214 = vmatpush1.msra.mxu0 0.0
  %2215 = vmatprep.subr.mxu0 0.0
  %2216 = vmatpush1.msra.mxu0 0.0
  %2217 = vmatprep.subr.mxu0 0.0
  %2218 = vmatpush1.msra.mxu0 0.0
  %2219 = vmatprep.subr.mxu0 0.0
  %2220 = vmatpush1.msra.mxu0 0.0
  %2221 = vmatprep.mubr.f32.mxu0 0.0
  %2222 = vmatmul.mubr.f32.gmra.mrb[0].mxu0 %v2134
  %v2223 = vpop.f32.mrb[0].mxu0
  %v2224 = vadd.f32 %v2131, %v2223
  %v2225 = vpop.f32.mrb[0].mxu0
  %2226 = vmatprep.mubr.f32.mxu0 0.0
  %2227 = vmatmul.mubr.f32.gmra.mrb[0].mxu0 %v2137
  %v2228 = vpop.f32.mrb[0].mxu0
  %v2229 = vadd.f32 %v2131, %v2228
  %v2230 = vpop.f32.mrb[0].mxu0
  %2231 = vmatprep.mubr.f32.mxu0 0.0
  %2232 = vmatmul.mubr.f32.gmra.mrb[0].mxu0 %v2140
  %v2233 = vpop.f32.mrb[0].mxu0
  %v2234 = vadd.f32 %v2131, %v2233
  %v2235 = vpop.f32.mrb[0].mxu0
  %2236 = vmatprep.mubr.f32.mxu0 0.0
  %2237 = vmatmul.mubr.f32.gmra.mrb[0].mxu0 %v2143
  %v2238 = vpop.f32.mrb[0].mxu0
  %v2239 = vadd.f32 %v2131, %v2238
  %v2240 = vpop.f32.mrb[0].mxu0
  %2241 = vmatprep.mubr.f32.mxu0 0.0
  %2242 = vmatmul.mubr.f32.gmra.mrb[0].mxu0 %v2146
  %v2243 = vpop.f32.mrb[0].mxu0
  %v2244 = vadd.f32 %v2131, %v2243
  %v2245 = vpop.f32.mrb[0].mxu0
  %2246 = vmatprep.mubr.f32.mxu0 0.0
  %2247 = vmatmul.mubr.f32.gmra.mrb[0].mxu0 %v2149
  %v2248 = vpop.f32.mrb[0].mxu0
  %v2249 = vadd.f32 %v2131, %v2248
  %v2250 = vpop.f32.mrb[0].mxu0
  %2251 = vmatprep.mubr.f32.mxu0 0.0
  %2252 = vmatmul.mubr.f32.gmra.mrb[0].mxu0 %v2152
  %v2253 = vpop.f32.mrb[0].mxu0
  %v2254 = vadd.f32 %v2131, %v2253
  %v2255 = vpop.f32.mrb[0].mxu0
  %2256 = vmatprep.mubr.f32.mxu0 0.0
  %2257 = vmatmul.mubr.f32.gmra.mrb[0].mxu0 %v2155
  %v2258 = vpop.f32.mrb[0].mxu0
  %v2259 = vadd.f32 %v2131, %v2258
  %v2260 = vpop.f32.mrb[0].mxu0
  %2261 = vdwg.mxu0
  %2262 = vst.msk [vmem:[%s13] sm:$0xff] %vm65, %v2224
  %2263 = vst.msk [vmem:[%s13 + $0x8] sm:$0xff] %vm65, %v2229
  %2264 = vst.msk [vmem:[%s13 + $0x10] sm:$0xff] %vm65, %v2234
  %2265 = vst.msk [vmem:[%s13 + $0x18] sm:$0xff] %vm65, %v2239
  %2266 = vst.msk [vmem:[%s13 + $0x20] sm:$0xff] %vm65, %v2244
  %2267 = vst.msk [vmem:[%s13 + $0x28] sm:$0xff] %vm65, %v2249
  %2268 = vst.msk [vmem:[%s13 + $0x30] sm:$0xff] %vm65, %v2254
  %2269 = vst.msk [vmem:[%s13 + $0x38] sm:$0xff] %vm65, %v2259
  // Predicated region
  $region54: #{encoder_decoder_forward.1} parent=0 // pred_check
    _
  $region55: #{encoder_decoder_forward.1} parent=0 // pred_check_branch
    %2271 = sbr.rel (0) target = $region57
  $region56: #{encoder_decoder_forward.1} parent=0 // pred_region
    _
  $region57: #{encoder_decoder_forward.1} parent=0 // pred_fallthru
    _
  // Predicated region
  $region58: #{encoder_decoder_forward.1} parent=0 // pred_check
    _
  $region59: #{encoder_decoder_forward.1} parent=0 // pred_check_branch
    %2273 = sbr.rel (0) target = $region61
  $region60: #{encoder_decoder_forward.1} parent=0 // pred_region
    _
  $region61: #{encoder_decoder_forward.1} parent=0 // pred_fallthru
    _
  // Predicated region
  $region62: #{encoder_decoder_forward.1} parent=0 // pred_check
    _
  $region63: #{encoder_decoder_forward.1} parent=0 // pred_check_branch
    %2275 = sbr.rel (0) target = $region65
  $region64: #{encoder_decoder_forward.1} parent=0 // pred_region
    _
  $region65: #{encoder_decoder_forward.1} parent=0 // pred_fallthru
    _
  // Predicated region
  $region66: #{encoder_decoder_forward.1} parent=0 // pred_check
    _
  $region67: #{encoder_decoder_forward.1} parent=0 // pred_check_branch
    %2277 = sbr.rel (0) target = $region69
  $region68: #{encoder_decoder_forward.1} parent=0 // pred_region
    _
  $region69: #{encoder_decoder_forward.1} parent=0 // pred_fallthru
    _

</llo_original>
